<compile_context>
chip_gen: v7x
topology: tpu7x:2x2x1
jax: 0.10.0
libtpu: 0.0.40
codegen_flags: <defaults>
</compile_context>

<pallas_src>
import jax
import jax.numpy as jnp
from jax.experimental import pallas as pl
from jax.experimental.pallas import tpu as pltpu

# ---- config (mirrors the PyTorch module constants, shrunk where needed) ----
VOCAB_SIZE = 16            # vocab_size is undefined in the reference script; chosen here
TEXT_EMBED_DIM = 128
HIDDEN_SIZE = 256
NUM_LAYERS = 2
IMAGE_CHANNELS = 3
NUM_FILTERS = 64
KERNEL_SIZE = 3
STRIDE = 2                 # used only by MaxPool2d in the reference (Conv2d stride defaults to 1)
FUSION_HIDDEN = 512
IMAGE_SIZE = 5
SEQ_LEN = 3
# TODO(synk): with the original image_size=24 the PyTorch forward is shape-inconsistent
# (flattened conv features = 64*10*10 but the fusion Linear expects hidden+filters).
# image_size=5 makes MaxPool2d(3, stride=2) reduce the 3x3 conv map to 1x1 so the
# flattened features are exactly num_filters; everything else follows the module.

# padded (vreg / MXU friendly) shapes
SEQ_PAD = 8                                             # sequence rows padded to a sublane multiple
CONV_POS = (IMAGE_SIZE - KERNEL_SIZE + 1) ** 2          # 9 stride-1 conv positions (3x3 map)
POS_PAD = 16
KDIM = IMAGE_CHANNELS * KERNEL_SIZE * KERNEL_SIZE       # 27
KDIM_PAD = 128
F_PAD = 128                                             # NUM_FILTERS padded to a lane multiple
OUT_DIM = IMAGE_SIZE * IMAGE_SIZE                       # 25
OUT_PAD = 128


# --------------------------- single fused kernel -----------------------------
def generator_kernel(
    tokens_ref,                                   # SMEM (SEQ_LEN,) int32
    emb_ref,                                      # VMEM (V, E) f32
    wih0_ref, whh0_ref, b0_ref, b1_ref,           # VMEM bf16 / f32 biases
    patches_ref, convw_ref, convb_ref,            # VMEM
    fc1b_ref, fc2b_ref,                           # VMEM
    wih1_hbm, whh1_hbm, fc1wt_hbm, fc1wi_hbm, fc2w_hbm,   # pl.ANY (HBM)
    out_ref,                                      # VMEM (1, OUT_PAD) f32
    x0_buf, h0_buf,                               # VMEM scratch f32
    wih1_buf, whh1_buf, fc1wt_buf, fc1wi_buf, fc2w_buf,   # VMEM scratch bf16
    dma_sems,                                     # DMA semaphores (5,)
):
    H = HIDDEN_SIZE

    # ---- P7: start DMA of later-stage weights; hide them behind layer-0 work ----
    cp_wih1 = pltpu.make_async_copy(wih1_hbm, wih1_buf, dma_sems.at[0]); cp_wih1.start()
    cp_whh1 = pltpu.make_async_copy(whh1_hbm, whh1_buf, dma_sems.at[1]); cp_whh1.start()
    cp_fc1t = pltpu.make_async_copy(fc1wt_hbm, fc1wt_buf, dma_sems.at[2]); cp_fc1t.start()
    cp_fc1i = pltpu.make_async_copy(fc1wi_hbm, fc1wi_buf, dma_sems.at[3]); cp_fc1i.start()
    cp_fc2 = pltpu.make_async_copy(fc2w_hbm, fc2w_buf, dma_sems.at[4]); cp_fc2.start()

    # ---- embedding gather (tokens live in SMEM; rows gathered from VMEM table) ----
    x0_buf[...] = jnp.zeros_like(x0_buf)
    h0_buf[...] = jnp.zeros_like(h0_buf)
    for t in range(SEQ_LEN):
        tok = tokens_ref[t]
        x0_buf[pl.ds(t, 1), :] = emb_ref[pl.ds(tok, 1), :]

    # gate-activation constants, hoisted out of both recurrences
    col = jax.lax.broadcasted_iota(jnp.int32, (1, 4 * H), 1)
    is_g = jnp.logical_and(col >= 2 * H, col < 3 * H)
    gate_scale = jnp.where(is_g, 1.0, 0.5)

    def gate_act(gates):
        # sigmoid(x) = 0.5*tanh(0.5*x) + 0.5  ->  one EUP tanh pass over all 4 gates
        t_all = jnp.tanh(gates * gate_scale)
        return jnp.where(is_g, t_all, 0.5 * t_all + 0.5)

    def run_layer(pre_gates, whh_bf16, out_buf):
        # pre_gates: (SEQ_PAD, 4H) f32 already holds x_t @ Wih + b (hoisted projection)
        h = jnp.zeros((1, H), jnp.float32)
        c = jnp.zeros((1, H), jnp.float32)
        # TODO(synk): if SEQ_LEN ever grows, switch this unroll to lax.fori_loop.
        for t in range(SEQ_LEN):
            gates = pre_gates[t:t + 1, :] + jnp.dot(
                h.astype(jnp.bfloat16), whh_bf16, preferred_element_type=jnp.float32)
            act = gate_act(gates)
            i = act[:, 0 * H:1 * H]
            f = act[:, 1 * H:2 * H]
            g = act[:, 2 * H:3 * H]
            o = act[:, 3 * H:4 * H]
            c = f * c + i * g
            h = o * jnp.tanh(c)
            if out_buf is not None:
                out_buf[pl.ds(t, 1), :] = h
        return h

    # ---- LSTM layer 0 (weights already resident in VMEM) ----
    pre0 = jnp.dot(x0_buf[...].astype(jnp.bfloat16), wih0_ref[...],
                   preferred_element_type=jnp.float32) + b0_ref[...]
    run_layer(pre0, whh0_ref[...], h0_buf)

    # ---- LSTM layer 1 (weights arrive via overlapped DMA) ----
    cp_wih1.wait()
    cp_whh1.wait()
    pre1 = jnp.dot(h0_buf[...].astype(jnp.bfloat16), wih1_buf[...],
                   preferred_element_type=jnp.float32) + b1_ref[...]
    text_feat = run_layer(pre1, whh1_buf[...], None)              # (1, H) f32 == h_T of last layer

    # ---- Conv2d (im2col matmul) + ReLU + MaxPool2d(3, stride=2) over the 3x3 map ----
    y = jnp.dot(patches_ref[...].astype(jnp.bfloat16), convw_ref[...],
                preferred_element_type=jnp.float32) + convb_ref[...]
    y = jnp.maximum(y, 0.0)
    row = jax.lax.broadcasted_iota(jnp.int32, y.shape, 0)
    # padded rows are forced to 0; real max is >= 0 after ReLU so the global max is unchanged
    y = jnp.where(row < CONV_POS, y, 0.0)
    image_feat = jnp.max(y, axis=0, keepdims=True)                # (1, F_PAD)

    # ---- fusion head: Linear -> ReLU -> Linear -> Tanh (split fc1 avoids a concat) ----
    cp_fc1t.wait()
    cp_fc1i.wait()
    cp_fc2.wait()
    z = (jnp.dot(text_feat.astype(jnp.bfloat16), fc1wt_buf[...],
                 preferred_element_type=jnp.float32)
         + jnp.dot(image_feat.astype(jnp.bfloat16), fc1wi_buf[...],
                   preferred_element_type=jnp.float32)
         + fc1b_ref[...])
    z = jnp.maximum(z, 0.0)
    out = jnp.dot(z.astype(jnp.bfloat16), fc2w_buf[...],
                  preferred_element_type=jnp.float32) + fc2b_ref[...]
    out_ref[...] = jnp.tanh(out)                                  # (1, OUT_PAD) lane-dense store


def generator_pallas(tokens, emb, wih0, whh0, b0, wih1, whh1, b1,
                     patches, conv_w, conv_b, fc1_wt, fc1_wi, fc1_b, fc2_w, fc2_b):
    vmem = pl.BlockSpec(memory_space=pltpu.MemorySpace.VMEM)
    smem = pl.BlockSpec(memory_space=pltpu.MemorySpace.SMEM)
    hbm = pl.BlockSpec(memory_space=pl.ANY)
    return pl.pallas_call(
        generator_kernel,
        out_shape=jax.ShapeDtypeStruct((1, OUT_PAD), jnp.float32),
        in_specs=[smem] + [vmem] * 10 + [hbm] * 5,
        out_specs=vmem,
        scratch_shapes=[
            pltpu.VMEM((SEQ_PAD, TEXT_EMBED_DIM), jnp.float32),       # x0_buf
            pltpu.VMEM((SEQ_PAD, HIDDEN_SIZE), jnp.float32),          # h0_buf
            pltpu.VMEM((HIDDEN_SIZE, 4 * HIDDEN_SIZE), jnp.bfloat16),  # wih1_buf
            pltpu.VMEM((HIDDEN_SIZE, 4 * HIDDEN_SIZE), jnp.bfloat16),  # whh1_buf
            pltpu.VMEM((HIDDEN_SIZE, FUSION_HIDDEN), jnp.bfloat16),   # fc1wt_buf
            pltpu.VMEM((F_PAD, FUSION_HIDDEN), jnp.bfloat16),         # fc1wi_buf
            pltpu.VMEM((FUSION_HIDDEN, OUT_PAD), jnp.bfloat16),       # fc2w_buf
            pltpu.SemaphoreType.DMA((5,)),
        ],
    )(tokens, emb, wih0, whh0, b0, b1, patches, conv_w, conv_b,
      fc1_b, fc2_b, wih1, whh1, fc1_wt, fc1_wi, fc2_w)


# ------------------------------- glue helpers --------------------------------
def im2col_nchw(img_chw, kh, kw):
    # img_chw: (C, H, W) -> patches (OH*OW, C*kh*kw), flattened in (c, kh, kw)
    # order to match a PyTorch Conv2d weight of shape (F, C, kh, kw), stride 1.
    C, H, W = img_chw.shape
    oh, ow = H - kh + 1, W - kw + 1
    cols = []
    for i in range(kh):
        for j in range(kw):
            cols.append(img_chw[:, i:i + oh, j:j + ow])   # (C, oh, ow)
    patches = jnp.stack(cols, axis=1)                     # (C, kh*kw, oh, ow)
    patches = patches.reshape(C * kh * kw, oh * ow).T     # (oh*ow, C*kh*kw)
    return patches


def init_params(key):
    ks = jax.random.split(key, 12)
    s = 0.05
    p = {}
    p["embedding"] = (jax.random.normal(ks[0], (VOCAB_SIZE, TEXT_EMBED_DIM)) * s
                      ).astype(jnp.float32)
    in_dim = TEXT_EMBED_DIM
    for l in range(NUM_LAYERS):
        k1, k2, k3 = jax.random.split(ks[1 + l], 3)
        p[f"wih{l}"] = (jax.random.normal(k1, (in_dim, 4 * HIDDEN_SIZE)) * s).astype(jnp.bfloat16)
        p[f"whh{l}"] = (jax.random.normal(k2, (HIDDEN_SIZE, 4 * HIDDEN_SIZE)) * s).astype(jnp.bfloat16)
        # combined b_ih + b_hh (kept f32)
        p[f"b{l}"] = (jax.random.normal(k3, (1, 4 * HIDDEN_SIZE)) * s).astype(jnp.float32)
        in_dim = HIDDEN_SIZE
    # conv weights padded to MXU-friendly (KDIM_PAD, F_PAD); padded rows/cols are zero
    conv_w = (jax.random.normal(ks[4], (KDIM, NUM_FILTERS)) * s).astype(jnp.bfloat16)
    p["conv_w"] = jnp.zeros((KDIM_PAD, F_PAD), jnp.bfloat16).at[:KDIM, :NUM_FILTERS].set(conv_w)
    conv_b = (jax.random.normal(ks[5], (1, NUM_FILTERS)) * s).astype(jnp.float32)
    p["conv_b"] = jnp.zeros((1, F_PAD), jnp.float32).at[:, :NUM_FILTERS].set(conv_b)
    # fc1 split into text / image blocks (image block zero-padded to F_PAD rows)
    p["fc1_w_text"] = (jax.random.normal(ks[6], (HIDDEN_SIZE, FUSION_HIDDEN)) * s).astype(jnp.bfloat16)
    fc1_w_img = (jax.random.normal(ks[7], (NUM_FILTERS, FUSION_HIDDEN)) * s).astype(jnp.bfloat16)
    p["fc1_w_img"] = jnp.zeros((F_PAD, FUSION_HIDDEN), jnp.bfloat16).at[:NUM_FILTERS].set(fc1_w_img)
    p["fc1_b"] = (jax.random.normal(ks[8], (1, FUSION_HIDDEN)) * s).astype(jnp.float32)
    # fc2 padded on the output dim to OUT_PAD lanes (padded cols are zero)
    fc2_w = (jax.random.normal(ks[9], (FUSION_HIDDEN, OUT_DIM)) * s).astype(jnp.bfloat16)
    p["fc2_w"] = jnp.zeros((FUSION_HIDDEN, OUT_PAD), jnp.bfloat16).at[:, :OUT_DIM].set(fc2_w)
    fc2_b = (jax.random.normal(ks[10], (1, OUT_DIM)) * s).astype(jnp.float32)
    p["fc2_b"] = jnp.zeros((1, OUT_PAD), jnp.float32).at[:, :OUT_DIM].set(fc2_b)
    return p


def generator_forward(params, text_tokens, image_nchw):
    # im2col (tiny, stride-1 conv) + zero pad to (POS_PAD, KDIM_PAD) -- glue only.
    patches = im2col_nchw(image_nchw[0], KERNEL_SIZE, KERNEL_SIZE)       # (9, 27)
    patches = jnp.pad(patches, ((0, POS_PAD - CONV_POS), (0, KDIM_PAD - KDIM)))
    flat = generator_pallas(
        text_tokens.astype(jnp.int32),
        params["embedding"],
        params["wih0"], params["whh0"], params["b0"],
        params["wih1"], params["whh1"], params["b1"],
        patches, params["conv_w"], params["conv_b"],
        params["fc1_w_text"], params["fc1_w_img"], params["fc1_b"],
        params["fc2_w"], params["fc2_b"])                                # (1, OUT_PAD)
    return flat[:, :OUT_DIM].reshape(-1, 1, IMAGE_SIZE, IMAGE_SIZE)


if __name__ == "__main__":
    key = jax.random.PRNGKey(0)
    pkey, ikey = jax.random.split(key)
    params = init_params(pkey)

    text_input = jnp.array([1, 2, 3], dtype=jnp.int32)                   # like torch.tensor([1,2,3])
    image_input = jax.random.normal(
        ikey, (1, IMAGE_CHANNELS, IMAGE_SIZE, IMAGE_SIZE), jnp.float32)

    forward = jax.jit(generator_forward)
    out = forward(params, text_input, image_input)
    out = jax.block_until_ready(out)

    assert out.shape == (1, 1, IMAGE_SIZE, IMAGE_SIZE), out.shape
    assert bool(jnp.all(jnp.isfinite(out)))
    assert bool(jnp.all(jnp.abs(out) <= 1.0))                            # tanh range
    print("KERNEL_OK")
</pallas_src>

<mosaic_0001>
module attributes {stable_mosaic.version = 11 : i64} {
  func.func @generator_kernel(%arg0: memref<3xi32, #tpu.memory_space<smem>>, %arg1: memref<16x128xf32, #tpu.memory_space<vmem>>, %arg2: memref<128x1024xbf16, #tpu.memory_space<vmem>>, %arg3: memref<256x1024xbf16, #tpu.memory_space<vmem>>, %arg4: memref<1x1024xf32, #tpu.memory_space<vmem>>, %arg5: memref<1x1024xf32, #tpu.memory_space<vmem>>, %arg6: memref<16x128xf32, #tpu.memory_space<vmem>>, %arg7: memref<128x128xbf16, #tpu.memory_space<vmem>>, %arg8: memref<1x128xf32, #tpu.memory_space<vmem>>, %arg9: memref<1x512xf32, #tpu.memory_space<vmem>>, %arg10: memref<1x128xf32, #tpu.memory_space<vmem>>, %arg11: memref<256x1024xbf16, #tpu.memory_space<any>>, %arg12: memref<256x1024xbf16, #tpu.memory_space<any>>, %arg13: memref<256x512xbf16, #tpu.memory_space<any>>, %arg14: memref<128x512xbf16, #tpu.memory_space<any>>, %arg15: memref<512x128xbf16, #tpu.memory_space<any>>, %arg16: memref<1x128xf32, #tpu.memory_space<vmem>>, %arg17: memref<8x128xf32, #tpu.memory_space<vmem>>, %arg18: memref<8x256xf32, #tpu.memory_space<vmem>>, %arg19: memref<256x1024xbf16, #tpu.memory_space<vmem>>, %arg20: memref<256x1024xbf16, #tpu.memory_space<vmem>>, %arg21: memref<256x512xbf16, #tpu.memory_space<vmem>>, %arg22: memref<128x512xbf16, #tpu.memory_space<vmem>>, %arg23: memref<512x128xbf16, #tpu.memory_space<vmem>>, %arg24: memref<5x!tpu.dma_semaphore, #tpu.memory_space<semaphore_mem>>) attributes {dimension_semantics = [], scalar_prefetch = 0 : i64, scratch_operands = 8 : i64, tpu.core_type = #tpu.core_type<tc>} {
    %c0_i32 = arith.constant 0 : i32
    %0 = tpu.memref_slice %arg24[%c0_i32] : memref<5x!tpu.dma_semaphore, #tpu.memory_space<semaphore_mem>> -> memref<1x!tpu.dma_semaphore, #tpu.memory_space<semaphore_mem>>
    %1 = tpu.memref_squeeze %0 : memref<1x!tpu.dma_semaphore, #tpu.memory_space<semaphore_mem>> -> memref<!tpu.dma_semaphore, #tpu.memory_space<semaphore_mem>>
    tpu.enqueue_dma source(%arg11 : memref<256x1024xbf16, #tpu.memory_space<any>>) target(%arg19 : memref<256x1024xbf16, #tpu.memory_space<vmem>>) target_semaphore(%1 : memref<!tpu.dma_semaphore, #tpu.memory_space<semaphore_mem>>)
    %c1_i32 = arith.constant 1 : i32
    %2 = tpu.memref_slice %arg24[%c1_i32] : memref<5x!tpu.dma_semaphore, #tpu.memory_space<semaphore_mem>> -> memref<1x!tpu.dma_semaphore, #tpu.memory_space<semaphore_mem>>
    %3 = tpu.memref_squeeze %2 : memref<1x!tpu.dma_semaphore, #tpu.memory_space<semaphore_mem>> -> memref<!tpu.dma_semaphore, #tpu.memory_space<semaphore_mem>>
    tpu.enqueue_dma source(%arg12 : memref<256x1024xbf16, #tpu.memory_space<any>>) target(%arg20 : memref<256x1024xbf16, #tpu.memory_space<vmem>>) target_semaphore(%3 : memref<!tpu.dma_semaphore, #tpu.memory_space<semaphore_mem>>)
    %c2_i32 = arith.constant 2 : i32
    %4 = tpu.memref_slice %arg24[%c2_i32] : memref<5x!tpu.dma_semaphore, #tpu.memory_space<semaphore_mem>> -> memref<1x!tpu.dma_semaphore, #tpu.memory_space<semaphore_mem>>
    %5 = tpu.memref_squeeze %4 : memref<1x!tpu.dma_semaphore, #tpu.memory_space<semaphore_mem>> -> memref<!tpu.dma_semaphore, #tpu.memory_space<semaphore_mem>>
    tpu.enqueue_dma source(%arg13 : memref<256x512xbf16, #tpu.memory_space<any>>) target(%arg21 : memref<256x512xbf16, #tpu.memory_space<vmem>>) target_semaphore(%5 : memref<!tpu.dma_semaphore, #tpu.memory_space<semaphore_mem>>)
    %c3_i32 = arith.constant 3 : i32
    %6 = tpu.memref_slice %arg24[%c3_i32] : memref<5x!tpu.dma_semaphore, #tpu.memory_space<semaphore_mem>> -> memref<1x!tpu.dma_semaphore, #tpu.memory_space<semaphore_mem>>
    %7 = tpu.memref_squeeze %6 : memref<1x!tpu.dma_semaphore, #tpu.memory_space<semaphore_mem>> -> memref<!tpu.dma_semaphore, #tpu.memory_space<semaphore_mem>>
    tpu.enqueue_dma source(%arg14 : memref<128x512xbf16, #tpu.memory_space<any>>) target(%arg22 : memref<128x512xbf16, #tpu.memory_space<vmem>>) target_semaphore(%7 : memref<!tpu.dma_semaphore, #tpu.memory_space<semaphore_mem>>)
    %c4_i32 = arith.constant 4 : i32
    %8 = tpu.memref_slice %arg24[%c4_i32] : memref<5x!tpu.dma_semaphore, #tpu.memory_space<semaphore_mem>> -> memref<1x!tpu.dma_semaphore, #tpu.memory_space<semaphore_mem>>
    %9 = tpu.memref_squeeze %8 : memref<1x!tpu.dma_semaphore, #tpu.memory_space<semaphore_mem>> -> memref<!tpu.dma_semaphore, #tpu.memory_space<semaphore_mem>>
    tpu.enqueue_dma source(%arg15 : memref<512x128xbf16, #tpu.memory_space<any>>) target(%arg23 : memref<512x128xbf16, #tpu.memory_space<vmem>>) target_semaphore(%9 : memref<!tpu.dma_semaphore, #tpu.memory_space<semaphore_mem>>)
    %cst = arith.constant 0.000000e+00 : f32
    %10 = vector.broadcast %cst : f32 to vector<8x128xf32>
    %c0 = arith.constant 0 : index
    %c0_0 = arith.constant 0 : index
    %11 = vector.load %arg17[%c0, %c0_0] : memref<8x128xf32, #tpu.memory_space<vmem>>, vector<8x128xf32>
    tpu.vector_store %arg17[%c0, %c0_0], %10 {strides = array<i32>} : memref<8x128xf32, #tpu.memory_space<vmem>>, vector<8x128xf32>,
    %cst_1 = arith.constant 0.000000e+00 : f32
    %12 = vector.broadcast %cst_1 : f32 to vector<8x256xf32>
    %c0_2 = arith.constant 0 : index
    %c0_3 = arith.constant 0 : index
    %13 = vector.load %arg18[%c0_2, %c0_3] : memref<8x256xf32, #tpu.memory_space<vmem>>, vector<8x256xf32>
    tpu.vector_store %arg18[%c0_2, %c0_3], %12 {strides = array<i32>} : memref<8x256xf32, #tpu.memory_space<vmem>>, vector<8x256xf32>,
    %c0_4 = arith.constant 0 : index
    %14 = memref.load %arg0[%c0_4] : memref<3xi32, #tpu.memory_space<smem>>
    %15 = arith.index_cast %14 : i32 to index
    %c0_5 = arith.constant 0 : index
    %16 = vector.load %arg1[%15, %c0_5] : memref<16x128xf32, #tpu.memory_space<vmem>>, vector<1x128xf32>
    %c0_6 = arith.constant 0 : index
    %c0_7 = arith.constant 0 : index
    %17 = vector.load %arg17[%c0_6, %c0_7] : memref<8x128xf32, #tpu.memory_space<vmem>>, vector<1x128xf32>
    tpu.vector_store %arg17[%c0_6, %c0_7], %16 {strides = array<i32>} : memref<8x128xf32, #tpu.memory_space<vmem>>, vector<1x128xf32>,
    %c1 = arith.constant 1 : index
    %18 = memref.load %arg0[%c1] : memref<3xi32, #tpu.memory_space<smem>>
    %19 = arith.index_cast %18 : i32 to index
    %c0_8 = arith.constant 0 : index
    %20 = vector.load %arg1[%19, %c0_8] : memref<16x128xf32, #tpu.memory_space<vmem>>, vector<1x128xf32>
    %c1_9 = arith.constant 1 : index
    %c0_10 = arith.constant 0 : index
    %21 = vector.load %arg17[%c1_9, %c0_10] : memref<8x128xf32, #tpu.memory_space<vmem>>, vector<1x128xf32>
    tpu.vector_store %arg17[%c1_9, %c0_10], %20 {strides = array<i32>} : memref<8x128xf32, #tpu.memory_space<vmem>>, vector<1x128xf32>,
    %c2 = arith.constant 2 : index
    %22 = memref.load %arg0[%c2] : memref<3xi32, #tpu.memory_space<smem>>
    %23 = arith.index_cast %22 : i32 to index
    %c0_11 = arith.constant 0 : index
    %24 = vector.load %arg1[%23, %c0_11] : memref<16x128xf32, #tpu.memory_space<vmem>>, vector<1x128xf32>
    %c2_12 = arith.constant 2 : index
    %c0_13 = arith.constant 0 : index
    %25 = vector.load %arg17[%c2_12, %c0_13] : memref<8x128xf32, #tpu.memory_space<vmem>>, vector<1x128xf32>
    tpu.vector_store %arg17[%c2_12, %c0_13], %24 {strides = array<i32>} : memref<8x128xf32, #tpu.memory_space<vmem>>, vector<1x128xf32>,
    %26 = tpu.iota {dimensions = array<i32: 1>} : vector<1x1024xi32>
    %c512_i32 = arith.constant 512 : i32
    %27 = vector.broadcast %c512_i32 : i32 to vector<1x1024xi32>
    %28 = arith.cmpi sge, %26, %27 : vector<1x1024xi32>
    %c768_i32 = arith.constant 768 : i32
    %29 = vector.broadcast %c768_i32 : i32 to vector<1x1024xi32>
    %30 = arith.cmpi slt, %26, %29 : vector<1x1024xi32>
    %31 = arith.andi %28, %30 : vector<1x1024xi1>
    %cst_14 = arith.constant 1.000000e+00 : f32
    %cst_15 = arith.constant 5.000000e-01 : f32
    %32 = vector.broadcast %cst_14 : f32 to vector<1x1024xf32>
    %33 = vector.broadcast %cst_15 : f32 to vector<1x1024xf32>
    %34 = arith.select %31, %32, %33 : vector<1x1024xi1>, vector<1x1024xf32>
    %c0_16 = arith.constant 0 : index
    %c0_17 = arith.constant 0 : index
    %35 = vector.load %arg17[%c0_16, %c0_17] : memref<8x128xf32, #tpu.memory_space<vmem>>, vector<8x128xf32>
    %36 = arith.truncf %35 : vector<8x128xf32> to vector<8x128xbf16>
    %c0_18 = arith.constant 0 : index
    %c0_19 = arith.constant 0 : index
    %37 = vector.load %arg2[%c0_18, %c0_19] : memref<128x1024xbf16, #tpu.memory_space<vmem>>, vector<128x1024xbf16>
    %cst_20 = arith.constant dense<0.000000e+00> : vector<8x1024xf32>
    %38 = tpu.matmul %36, %37, %cst_20 {dimension_numbers = #tpu.dot_dimension_numbers<[1], [0], [0], [1], [0, 0, 1, 1], [], []>} : vector<8x128xbf16>, vector<128x1024xbf16>, vector<8x1024xf32> -> vector<8x1024xf32>
    %c0_21 = arith.constant 0 : index
    %c0_22 = arith.constant 0 : index
    %39 = vector.load %arg4[%c0_21, %c0_22] : memref<1x1024xf32, #tpu.memory_space<vmem>>, vector<1x1024xf32>
    %40 = vector.broadcast %39 : vector<1x1024xf32> to vector<8x1024xf32>
    %41 = arith.addf %38, %40 : vector<8x1024xf32>
    %c0_23 = arith.constant 0 : index
    %c0_24 = arith.constant 0 : index
    %42 = vector.load %arg3[%c0_23, %c0_24] : memref<256x1024xbf16, #tpu.memory_space<vmem>>, vector<256x1024xbf16>
    %cst_25 = arith.constant 0.000000e+00 : f32
    %43 = vector.broadcast %cst_25 : f32 to vector<1x256xf32>
    %cst_26 = arith.constant 0.000000e+00 : f32
    %44 = vector.broadcast %cst_26 : f32 to vector<1x256xf32>
    %45 = vector.extract_strided_slice %41 {offsets = [0, 0], sizes = [1, 1024], strides = [1, 1]} : vector<8x1024xf32> to vector<1x1024xf32>
    %46 = arith.truncf %43 : vector<1x256xf32> to vector<1x256xbf16>
    %cst_27 = arith.constant dense<0.000000e+00> : vector<1x1024xf32>
    %47 = tpu.matmul %46, %42, %cst_27 {dimension_numbers = #tpu.dot_dimension_numbers<[1], [0], [0], [1], [0, 0, 1, 1], [], []>} : vector<1x256xbf16>, vector<256x1024xbf16>, vector<1x1024xf32> -> vector<1x1024xf32>
    %48 = arith.addf %45, %47 : vector<1x1024xf32>
    %49 = arith.mulf %48, %34 : vector<1x1024xf32>
    %50 = math.tanh %49 : vector<1x1024xf32>
    %cst_28 = arith.constant 5.000000e-01 : f32
    %51 = vector.broadcast %cst_28 : f32 to vector<1x1024xf32>
    %52 = arith.mulf %51, %50 : vector<1x1024xf32>
    %cst_29 = arith.constant 5.000000e-01 : f32
    %53 = vector.broadcast %cst_29 : f32 to vector<1x1024xf32>
    %54 = arith.addf %52, %53 : vector<1x1024xf32>
    %55 = arith.select %31, %50, %54 : vector<1x1024xi1>, vector<1x1024xf32>
    %56 = vector.extract_strided_slice %55 {offsets = [0, 0], sizes = [1, 256], strides = [1, 1]} : vector<1x1024xf32> to vector<1x256xf32>
    %57 = vector.extract_strided_slice %55 {offsets = [0, 256], sizes = [1, 256], strides = [1, 1]} : vector<1x1024xf32> to vector<1x256xf32>
    %58 = vector.extract_strided_slice %55 {offsets = [0, 512], sizes = [1, 256], strides = [1, 1]} : vector<1x1024xf32> to vector<1x256xf32>
    %59 = vector.extract_strided_slice %55 {offsets = [0, 768], sizes = [1, 256], strides = [1, 1]} : vector<1x1024xf32> to vector<1x256xf32>
    %60 = arith.mulf %57, %44 : vector<1x256xf32>
    %61 = arith.mulf %56, %58 : vector<1x256xf32>
    %62 = arith.addf %60, %61 : vector<1x256xf32>
    %63 = math.tanh %62 : vector<1x256xf32>
    %64 = arith.mulf %59, %63 : vector<1x256xf32>
    %c0_30 = arith.constant 0 : index
    %c0_31 = arith.constant 0 : index
    %65 = vector.load %arg18[%c0_30, %c0_31] : memref<8x256xf32, #tpu.memory_space<vmem>>, vector<1x256xf32>
    tpu.vector_store %arg18[%c0_30, %c0_31], %64 {strides = array<i32>} : memref<8x256xf32, #tpu.memory_space<vmem>>, vector<1x256xf32>,
    %66 = vector.extract_strided_slice %41 {offsets = [1, 0], sizes = [1, 1024], strides = [1, 1]} : vector<8x1024xf32> to vector<1x1024xf32>
    %67 = arith.truncf %64 : vector<1x256xf32> to vector<1x256xbf16>
    %cst_32 = arith.constant dense<0.000000e+00> : vector<1x1024xf32>
    %68 = tpu.matmul %67, %42, %cst_32 {dimension_numbers = #tpu.dot_dimension_numbers<[1], [0], [0], [1], [0, 0, 1, 1], [], []>} : vector<1x256xbf16>, vector<256x1024xbf16>, vector<1x1024xf32> -> vector<1x1024xf32>
    %69 = arith.addf %66, %68 : vector<1x1024xf32>
    %70 = arith.mulf %69, %34 : vector<1x1024xf32>
    %71 = math.tanh %70 : vector<1x1024xf32>
    %cst_33 = arith.constant 5.000000e-01 : f32
    %72 = vector.broadcast %cst_33 : f32 to vector<1x1024xf32>
    %73 = arith.mulf %72, %71 : vector<1x1024xf32>
    %cst_34 = arith.constant 5.000000e-01 : f32
    %74 = vector.broadcast %cst_34 : f32 to vector<1x1024xf32>
    %75 = arith.addf %73, %74 : vector<1x1024xf32>
    %76 = arith.select %31, %71, %75 : vector<1x1024xi1>, vector<1x1024xf32>
    %77 = vector.extract_strided_slice %76 {offsets = [0, 0], sizes = [1, 256], strides = [1, 1]} : vector<1x1024xf32> to vector<1x256xf32>
    %78 = vector.extract_strided_slice %76 {offsets = [0, 256], sizes = [1, 256], strides = [1, 1]} : vector<1x1024xf32> to vector<1x256xf32>
    %79 = vector.extract_strided_slice %76 {offsets = [0, 512], sizes = [1, 256], strides = [1, 1]} : vector<1x1024xf32> to vector<1x256xf32>
    %80 = vector.extract_strided_slice %76 {offsets = [0, 768], sizes = [1, 256], strides = [1, 1]} : vector<1x1024xf32> to vector<1x256xf32>
    %81 = arith.mulf %78, %62 : vector<1x256xf32>
    %82 = arith.mulf %77, %79 : vector<1x256xf32>
    %83 = arith.addf %81, %82 : vector<1x256xf32>
    %84 = math.tanh %83 : vector<1x256xf32>
    %85 = arith.mulf %80, %84 : vector<1x256xf32>
    %c1_35 = arith.constant 1 : index
    %c0_36 = arith.constant 0 : index
    %86 = vector.load %arg18[%c1_35, %c0_36] : memref<8x256xf32, #tpu.memory_space<vmem>>, vector<1x256xf32>
    tpu.vector_store %arg18[%c1_35, %c0_36], %85 {strides = array<i32>} : memref<8x256xf32, #tpu.memory_space<vmem>>, vector<1x256xf32>,
    %87 = vector.extract_strided_slice %41 {offsets = [2, 0], sizes = [1, 1024], strides = [1, 1]} : vector<8x1024xf32> to vector<1x1024xf32>
    %88 = arith.truncf %85 : vector<1x256xf32> to vector<1x256xbf16>
    %cst_37 = arith.constant dense<0.000000e+00> : vector<1x1024xf32>
    %89 = tpu.matmul %88, %42, %cst_37 {dimension_numbers = #tpu.dot_dimension_numbers<[1], [0], [0], [1], [0, 0, 1, 1], [], []>} : vector<1x256xbf16>, vector<256x1024xbf16>, vector<1x1024xf32> -> vector<1x1024xf32>
    %90 = arith.addf %87, %89 : vector<1x1024xf32>
    %91 = arith.mulf %90, %34 : vector<1x1024xf32>
    %92 = math.tanh %91 : vector<1x1024xf32>
    %cst_38 = arith.constant 5.000000e-01 : f32
    %93 = vector.broadcast %cst_38 : f32 to vector<1x1024xf32>
    %94 = arith.mulf %93, %92 : vector<1x1024xf32>
    %cst_39 = arith.constant 5.000000e-01 : f32
    %95 = vector.broadcast %cst_39 : f32 to vector<1x1024xf32>
    %96 = arith.addf %94, %95 : vector<1x1024xf32>
    %97 = arith.select %31, %92, %96 : vector<1x1024xi1>, vector<1x1024xf32>
    %98 = vector.extract_strided_slice %97 {offsets = [0, 0], sizes = [1, 256], strides = [1, 1]} : vector<1x1024xf32> to vector<1x256xf32>
    %99 = vector.extract_strided_slice %97 {offsets = [0, 256], sizes = [1, 256], strides = [1, 1]} : vector<1x1024xf32> to vector<1x256xf32>
    %100 = vector.extract_strided_slice %97 {offsets = [0, 512], sizes = [1, 256], strides = [1, 1]} : vector<1x1024xf32> to vector<1x256xf32>
    %101 = vector.extract_strided_slice %97 {offsets = [0, 768], sizes = [1, 256], strides = [1, 1]} : vector<1x1024xf32> to vector<1x256xf32>
    %102 = arith.mulf %99, %83 : vector<1x256xf32>
    %103 = arith.mulf %98, %100 : vector<1x256xf32>
    %104 = arith.addf %102, %103 : vector<1x256xf32>
    %105 = math.tanh %104 : vector<1x256xf32>
    %106 = arith.mulf %101, %105 : vector<1x256xf32>
    %c2_40 = arith.constant 2 : index
    %c0_41 = arith.constant 0 : index
    %107 = vector.load %arg18[%c2_40, %c0_41] : memref<8x256xf32, #tpu.memory_space<vmem>>, vector<1x256xf32>
    tpu.vector_store %arg18[%c2_40, %c0_41], %106 {strides = array<i32>} : memref<8x256xf32, #tpu.memory_space<vmem>>, vector<1x256xf32>,
    %c0_i32_42 = arith.constant 0 : i32
    %108 = tpu.memref_slice %arg24[%c0_i32_42] : memref<5x!tpu.dma_semaphore, #tpu.memory_space<semaphore_mem>> -> memref<1x!tpu.dma_semaphore, #tpu.memory_space<semaphore_mem>>
    %109 = tpu.memref_squeeze %108 : memref<1x!tpu.dma_semaphore, #tpu.memory_space<semaphore_mem>> -> memref<!tpu.dma_semaphore, #tpu.memory_space<semaphore_mem>>
    tpu.wait_dma2 semaphore(%109 : memref<!tpu.dma_semaphore, #tpu.memory_space<semaphore_mem>>) src(%arg11 : memref<256x1024xbf16, #tpu.memory_space<any>>) dst(%arg19 : memref<256x1024xbf16, #tpu.memory_space<vmem>>)
    %c1_i32_43 = arith.constant 1 : i32
    %110 = tpu.memref_slice %arg24[%c1_i32_43] : memref<5x!tpu.dma_semaphore, #tpu.memory_space<semaphore_mem>> -> memref<1x!tpu.dma_semaphore, #tpu.memory_space<semaphore_mem>>
    %111 = tpu.memref_squeeze %110 : memref<1x!tpu.dma_semaphore, #tpu.memory_space<semaphore_mem>> -> memref<!tpu.dma_semaphore, #tpu.memory_space<semaphore_mem>>
    tpu.wait_dma2 semaphore(%111 : memref<!tpu.dma_semaphore, #tpu.memory_space<semaphore_mem>>) src(%arg12 : memref<256x1024xbf16, #tpu.memory_space<any>>) dst(%arg20 : memref<256x1024xbf16, #tpu.memory_space<vmem>>)
    %c0_44 = arith.constant 0 : index
    %c0_45 = arith.constant 0 : index
    %112 = vector.load %arg18[%c0_44, %c0_45] : memref<8x256xf32, #tpu.memory_space<vmem>>, vector<8x256xf32>
    %113 = arith.truncf %112 : vector<8x256xf32> to vector<8x256xbf16>
    %c0_46 = arith.constant 0 : index
    %c0_47 = arith.constant 0 : index
    %114 = vector.load %arg19[%c0_46, %c0_47] : memref<256x1024xbf16, #tpu.memory_space<vmem>>, vector<256x1024xbf16>
    %cst_48 = arith.constant dense<0.000000e+00> : vector<8x1024xf32>
    %115 = tpu.matmul %113, %114, %cst_48 {dimension_numbers = #tpu.dot_dimension_numbers<[1], [0], [0], [1], [0, 0, 1, 1], [], []>} : vector<8x256xbf16>, vector<256x1024xbf16>, vector<8x1024xf32> -> vector<8x1024xf32>
    %c0_49 = arith.constant 0 : index
    %c0_50 = arith.constant 0 : index
    %116 = vector.load %arg5[%c0_49, %c0_50] : memref<1x1024xf32, #tpu.memory_space<vmem>>, vector<1x1024xf32>
    %117 = vector.broadcast %116 : vector<1x1024xf32> to vector<8x1024xf32>
    %118 = arith.addf %115, %117 : vector<8x1024xf32>
    %c0_51 = arith.constant 0 : index
    %c0_52 = arith.constant 0 : index
    %119 = vector.load %arg20[%c0_51, %c0_52] : memref<256x1024xbf16, #tpu.memory_space<vmem>>, vector<256x1024xbf16>
    %cst_53 = arith.constant 0.000000e+00 : f32
    %120 = vector.broadcast %cst_53 : f32 to vector<1x256xf32>
    %cst_54 = arith.constant 0.000000e+00 : f32
    %121 = vector.broadcast %cst_54 : f32 to vector<1x256xf32>
    %122 = vector.extract_strided_slice %118 {offsets = [0, 0], sizes = [1, 1024], strides = [1, 1]} : vector<8x1024xf32> to vector<1x1024xf32>
    %123 = arith.truncf %120 : vector<1x256xf32> to vector<1x256xbf16>
    %cst_55 = arith.constant dense<0.000000e+00> : vector<1x1024xf32>
    %124 = tpu.matmul %123, %119, %cst_55 {dimension_numbers = #tpu.dot_dimension_numbers<[1], [0], [0], [1], [0, 0, 1, 1], [], []>} : vector<1x256xbf16>, vector<256x1024xbf16>, vector<1x1024xf32> -> vector<1x1024xf32>
    %125 = arith.addf %122, %124 : vector<1x1024xf32>
    %126 = arith.mulf %125, %34 : vector<1x1024xf32>
    %127 = math.tanh %126 : vector<1x1024xf32>
    %cst_56 = arith.constant 5.000000e-01 : f32
    %128 = vector.broadcast %cst_56 : f32 to vector<1x1024xf32>
    %129 = arith.mulf %128, %127 : vector<1x1024xf32>
    %cst_57 = arith.constant 5.000000e-01 : f32
    %130 = vector.broadcast %cst_57 : f32 to vector<1x1024xf32>
    %131 = arith.addf %129, %130 : vector<1x1024xf32>
    %132 = arith.select %31, %127, %131 : vector<1x1024xi1>, vector<1x1024xf32>
    %133 = vector.extract_strided_slice %132 {offsets = [0, 0], sizes = [1, 256], strides = [1, 1]} : vector<1x1024xf32> to vector<1x256xf32>
    %134 = vector.extract_strided_slice %132 {offsets = [0, 256], sizes = [1, 256], strides = [1, 1]} : vector<1x1024xf32> to vector<1x256xf32>
    %135 = vector.extract_strided_slice %132 {offsets = [0, 512], sizes = [1, 256], strides = [1, 1]} : vector<1x1024xf32> to vector<1x256xf32>
    %136 = vector.extract_strided_slice %132 {offsets = [0, 768], sizes = [1, 256], strides = [1, 1]} : vector<1x1024xf32> to vector<1x256xf32>
    %137 = arith.mulf %134, %121 : vector<1x256xf32>
    %138 = arith.mulf %133, %135 : vector<1x256xf32>
    %139 = arith.addf %137, %138 : vector<1x256xf32>
    %140 = math.tanh %139 : vector<1x256xf32>
    %141 = arith.mulf %136, %140 : vector<1x256xf32>
    %142 = vector.extract_strided_slice %118 {offsets = [1, 0], sizes = [1, 1024], strides = [1, 1]} : vector<8x1024xf32> to vector<1x1024xf32>
    %143 = arith.truncf %141 : vector<1x256xf32> to vector<1x256xbf16>
    %cst_58 = arith.constant dense<0.000000e+00> : vector<1x1024xf32>
    %144 = tpu.matmul %143, %119, %cst_58 {dimension_numbers = #tpu.dot_dimension_numbers<[1], [0], [0], [1], [0, 0, 1, 1], [], []>} : vector<1x256xbf16>, vector<256x1024xbf16>, vector<1x1024xf32> -> vector<1x1024xf32>
    %145 = arith.addf %142, %144 : vector<1x1024xf32>
    %146 = arith.mulf %145, %34 : vector<1x1024xf32>
    %147 = math.tanh %146 : vector<1x1024xf32>
    %cst_59 = arith.constant 5.000000e-01 : f32
    %148 = vector.broadcast %cst_59 : f32 to vector<1x1024xf32>
    %149 = arith.mulf %148, %147 : vector<1x1024xf32>
    %cst_60 = arith.constant 5.000000e-01 : f32
    %150 = vector.broadcast %cst_60 : f32 to vector<1x1024xf32>
    %151 = arith.addf %149, %150 : vector<1x1024xf32>
    %152 = arith.select %31, %147, %151 : vector<1x1024xi1>, vector<1x1024xf32>
    %153 = vector.extract_strided_slice %152 {offsets = [0, 0], sizes = [1, 256], strides = [1, 1]} : vector<1x1024xf32> to vector<1x256xf32>
    %154 = vector.extract_strided_slice %152 {offsets = [0, 256], sizes = [1, 256], strides = [1, 1]} : vector<1x1024xf32> to vector<1x256xf32>
    %155 = vector.extract_strided_slice %152 {offsets = [0, 512], sizes = [1, 256], strides = [1, 1]} : vector<1x1024xf32> to vector<1x256xf32>
    %156 = vector.extract_strided_slice %152 {offsets = [0, 768], sizes = [1, 256], strides = [1, 1]} : vector<1x1024xf32> to vector<1x256xf32>
    %157 = arith.mulf %154, %139 : vector<1x256xf32>
    %158 = arith.mulf %153, %155 : vector<1x256xf32>
    %159 = arith.addf %157, %158 : vector<1x256xf32>
    %160 = math.tanh %159 : vector<1x256xf32>
    %161 = arith.mulf %156, %160 : vector<1x256xf32>
    %162 = vector.extract_strided_slice %118 {offsets = [2, 0], sizes = [1, 1024], strides = [1, 1]} : vector<8x1024xf32> to vector<1x1024xf32>
    %163 = arith.truncf %161 : vector<1x256xf32> to vector<1x256xbf16>
    %cst_61 = arith.constant dense<0.000000e+00> : vector<1x1024xf32>
    %164 = tpu.matmul %163, %119, %cst_61 {dimension_numbers = #tpu.dot_dimension_numbers<[1], [0], [0], [1], [0, 0, 1, 1], [], []>} : vector<1x256xbf16>, vector<256x1024xbf16>, vector<1x1024xf32> -> vector<1x1024xf32>
    %165 = arith.addf %162, %164 : vector<1x1024xf32>
    %166 = arith.mulf %165, %34 : vector<1x1024xf32>
    %167 = math.tanh %166 : vector<1x1024xf32>
    %cst_62 = arith.constant 5.000000e-01 : f32
    %168 = vector.broadcast %cst_62 : f32 to vector<1x1024xf32>
    %169 = arith.mulf %168, %167 : vector<1x1024xf32>
    %cst_63 = arith.constant 5.000000e-01 : f32
    %170 = vector.broadcast %cst_63 : f32 to vector<1x1024xf32>
    %171 = arith.addf %169, %170 : vector<1x1024xf32>
    %172 = arith.select %31, %167, %171 : vector<1x1024xi1>, vector<1x1024xf32>
    %173 = vector.extract_strided_slice %172 {offsets = [0, 0], sizes = [1, 256], strides = [1, 1]} : vector<1x1024xf32> to vector<1x256xf32>
    %174 = vector.extract_strided_slice %172 {offsets = [0, 256], sizes = [1, 256], strides = [1, 1]} : vector<1x1024xf32> to vector<1x256xf32>
    %175 = vector.extract_strided_slice %172 {offsets = [0, 512], sizes = [1, 256], strides = [1, 1]} : vector<1x1024xf32> to vector<1x256xf32>
    %176 = vector.extract_strided_slice %172 {offsets = [0, 768], sizes = [1, 256], strides = [1, 1]} : vector<1x1024xf32> to vector<1x256xf32>
    %177 = arith.mulf %174, %159 : vector<1x256xf32>
    %178 = arith.mulf %173, %175 : vector<1x256xf32>
    %179 = arith.addf %177, %178 : vector<1x256xf32>
    %180 = math.tanh %179 : vector<1x256xf32>
    %181 = arith.mulf %176, %180 : vector<1x256xf32>
    %c0_64 = arith.constant 0 : index
    %c0_65 = arith.constant 0 : index
    %182 = vector.load %arg6[%c0_64, %c0_65] : memref<16x128xf32, #tpu.memory_space<vmem>>, vector<16x128xf32>
    %183 = arith.truncf %182 : vector<16x128xf32> to vector<16x128xbf16>
    %c0_66 = arith.constant 0 : index
    %c0_67 = arith.constant 0 : index
    %184 = vector.load %arg7[%c0_66, %c0_67] : memref<128x128xbf16, #tpu.memory_space<vmem>>, vector<128x128xbf16>
    %cst_68 = arith.constant dense<0.000000e+00> : vector<16x128xf32>
    %185 = tpu.matmul %183, %184, %cst_68 {dimension_numbers = #tpu.dot_dimension_numbers<[1], [0], [0], [1], [0, 0, 1, 1], [], []>} : vector<16x128xbf16>, vector<128x128xbf16>, vector<16x128xf32> -> vector<16x128xf32>
    %c0_69 = arith.constant 0 : index
    %c0_70 = arith.constant 0 : index
    %186 = vector.load %arg8[%c0_69, %c0_70] : memref<1x128xf32, #tpu.memory_space<vmem>>, vector<1x128xf32>
    %187 = vector.broadcast %186 : vector<1x128xf32> to vector<16x128xf32>
    %188 = arith.addf %185, %187 : vector<16x128xf32>
    %cst_71 = arith.constant 0.000000e+00 : f32
    %189 = vector.broadcast %cst_71 : f32 to vector<16x128xf32>
    %190 = arith.maximumf %188, %189 : vector<16x128xf32>
    %191 = tpu.iota {dimensions = array<i32: 0>} : vector<16x128xi32>
    %c9_i32 = arith.constant 9 : i32
    %192 = vector.broadcast %c9_i32 : i32 to vector<16x128xi32>
    %193 = arith.cmpi slt, %191, %192 : vector<16x128xi32>
    %cst_72 = arith.constant 0.000000e+00 : f32
    %194 = vector.broadcast %cst_72 : f32 to vector<16x128xf32>
    %195 = arith.select %193, %190, %194 : vector<16x128xi1>, vector<16x128xf32>
    %cst_73 = arith.constant dense<0xFF800000> : vector<128xf32>
    %196 = vector.multi_reduction <maximumf>, %195, %cst_73 [0] : vector<16x128xf32> to vector<128xf32>
    %197 = vector.shape_cast %196 : vector<128xf32> to vector<1x128xf32>
    %c2_i32_74 = arith.constant 2 : i32
    %198 = tpu.memref_slice %arg24[%c2_i32_74] : memref<5x!tpu.dma_semaphore, #tpu.memory_space<semaphore_mem>> -> memref<1x!tpu.dma_semaphore, #tpu.memory_space<semaphore_mem>>
    %199 = tpu.memref_squeeze %198 : memref<1x!tpu.dma_semaphore, #tpu.memory_space<semaphore_mem>> -> memref<!tpu.dma_semaphore, #tpu.memory_space<semaphore_mem>>
    tpu.wait_dma2 semaphore(%199 : memref<!tpu.dma_semaphore, #tpu.memory_space<semaphore_mem>>) src(%arg13 : memref<256x512xbf16, #tpu.memory_space<any>>) dst(%arg21 : memref<256x512xbf16, #tpu.memory_space<vmem>>)
    %c3_i32_75 = arith.constant 3 : i32
    %200 = tpu.memref_slice %arg24[%c3_i32_75] : memref<5x!tpu.dma_semaphore, #tpu.memory_space<semaphore_mem>> -> memref<1x!tpu.dma_semaphore, #tpu.memory_space<semaphore_mem>>
    %201 = tpu.memref_squeeze %200 : memref<1x!tpu.dma_semaphore, #tpu.memory_space<semaphore_mem>> -> memref<!tpu.dma_semaphore, #tpu.memory_space<semaphore_mem>>
    tpu.wait_dma2 semaphore(%201 : memref<!tpu.dma_semaphore, #tpu.memory_space<semaphore_mem>>) src(%arg14 : memref<128x512xbf16, #tpu.memory_space<any>>) dst(%arg22 : memref<128x512xbf16, #tpu.memory_space<vmem>>)
    %c4_i32_76 = arith.constant 4 : i32
    %202 = tpu.memref_slice %arg24[%c4_i32_76] : memref<5x!tpu.dma_semaphore, #tpu.memory_space<semaphore_mem>> -> memref<1x!tpu.dma_semaphore, #tpu.memory_space<semaphore_mem>>
    %203 = tpu.memref_squeeze %202 : memref<1x!tpu.dma_semaphore, #tpu.memory_space<semaphore_mem>> -> memref<!tpu.dma_semaphore, #tpu.memory_space<semaphore_mem>>
    tpu.wait_dma2 semaphore(%203 : memref<!tpu.dma_semaphore, #tpu.memory_space<semaphore_mem>>) src(%arg15 : memref<512x128xbf16, #tpu.memory_space<any>>) dst(%arg23 : memref<512x128xbf16, #tpu.memory_space<vmem>>)
    %204 = arith.truncf %181 : vector<1x256xf32> to vector<1x256xbf16>
    %c0_77 = arith.constant 0 : index
    %c0_78 = arith.constant 0 : index
    %205 = vector.load %arg21[%c0_77, %c0_78] : memref<256x512xbf16, #tpu.memory_space<vmem>>, vector<256x512xbf16>
    %cst_79 = arith.constant dense<0.000000e+00> : vector<1x512xf32>
    %206 = tpu.matmul %204, %205, %cst_79 {dimension_numbers = #tpu.dot_dimension_numbers<[1], [0], [0], [1], [0, 0, 1, 1], [], []>} : vector<1x256xbf16>, vector<256x512xbf16>, vector<1x512xf32> -> vector<1x512xf32>
    %207 = arith.truncf %197 : vector<1x128xf32> to vector<1x128xbf16>
    %c0_80 = arith.constant 0 : index
    %c0_81 = arith.constant 0 : index
    %208 = vector.load %arg22[%c0_80, %c0_81] : memref<128x512xbf16, #tpu.memory_space<vmem>>, vector<128x512xbf16>
    %cst_82 = arith.constant dense<0.000000e+00> : vector<1x512xf32>
    %209 = tpu.matmul %207, %208, %cst_82 {dimension_numbers = #tpu.dot_dimension_numbers<[1], [0], [0], [1], [0, 0, 1, 1], [], []>} : vector<1x128xbf16>, vector<128x512xbf16>, vector<1x512xf32> -> vector<1x512xf32>
    %210 = arith.addf %206, %209 : vector<1x512xf32>
    %c0_83 = arith.constant 0 : index
    %c0_84 = arith.constant 0 : index
    %211 = vector.load %arg9[%c0_83, %c0_84] : memref<1x512xf32, #tpu.memory_space<vmem>>, vector<1x512xf32>
    %212 = arith.addf %210, %211 : vector<1x512xf32>
    %cst_85 = arith.constant 0.000000e+00 : f32
    %213 = vector.broadcast %cst_85 : f32 to vector<1x512xf32>
    %214 = arith.maximumf %212, %213 : vector<1x512xf32>
    %215 = arith.truncf %214 : vector<1x512xf32> to vector<1x512xbf16>
    %c0_86 = arith.constant 0 : index
    %c0_87 = arith.constant 0 : index
    %216 = vector.load %arg23[%c0_86, %c0_87] : memref<512x128xbf16, #tpu.memory_space<vmem>>, vector<512x128xbf16>
    %cst_88 = arith.constant dense<0.000000e+00> : vector<1x128xf32>
    %217 = tpu.matmul %215, %216, %cst_88 {dimension_numbers = #tpu.dot_dimension_numbers<[1], [0], [0], [1], [0, 0, 1, 1], [], []>} : vector<1x512xbf16>, vector<512x128xbf16>, vector<1x128xf32> -> vector<1x128xf32>
    %c0_89 = arith.constant 0 : index
    %c0_90 = arith.constant 0 : index
    %218 = vector.load %arg10[%c0_89, %c0_90] : memref<1x128xf32, #tpu.memory_space<vmem>>, vector<1x128xf32>
    %219 = arith.addf %217, %218 : vector<1x128xf32>
    %220 = math.tanh %219 : vector<1x128xf32>
    %c0_91 = arith.constant 0 : index
    %c0_92 = arith.constant 0 : index
    %221 = vector.load %arg16[%c0_91, %c0_92] : memref<1x128xf32, #tpu.memory_space<vmem>>, vector<1x128xf32>
    tpu.vector_store %arg16[%c0_91, %c0_92], %220 {strides = array<i32>} : memref<1x128xf32, #tpu.memory_space<vmem>>, vector<1x128xf32>,
    return
  }
}

</mosaic_0001>

<llo_original>
// kernel: generator_forward.1
$region0: #{generator_forward.1}
  #allocation0 [shape = 'u32[]', space=smem, size = 0x4, offset = 0x4, fixed_abs, tag = 'smem constant byte address 0x4 - core index']
  #allocation1 [shape = 'u32[144,128]{1,0:T(1,128)}', space=vmem, size = 0x12000, scoped, tag = 'internal scratch']
  #allocation2 [shape = 'f32[8,128]{1,0:T(8,128)}', space=vmem, size = 0x1000, scoped, tag = 'scratch operand']
  #allocation3 [shape = 'f32[8,256]{1,0:T(8,128)}', space=vmem, size = 0x2000, scoped, tag = 'scratch operand']
  #allocation4 [shape = 'bf16[256,1024]{1,0:T(16,128)(2,1)}', space=vmem, size = 0x80000, scoped, tag = 'scratch operand']
  #allocation5 [shape = 'bf16[256,1024]{1,0:T(16,128)(2,1)}', space=vmem, size = 0x80000, scoped, tag = 'scratch operand']
  #allocation6 [shape = 'bf16[256,512]{1,0:T(16,128)(2,1)}', space=vmem, size = 0x40000, scoped, tag = 'scratch operand']
  #allocation7 [shape = 'bf16[128,512]{1,0:T(16,128)(2,1)}', space=vmem, size = 0x20000, scoped, tag = 'scratch operand']
  #allocation8 [shape = 'bf16[512,128]{1,0:T(16,128)(2,1)}', space=vmem, size = 0x20000, scoped, tag = 'scratch operand']
  #allocation9 [shape = 's32[5]{0}', space=sflag, size = 0x14, scoped, tag = 'scratch operand']
  #allocation25 [shape = 's32[]', space=sflag, size = 0x4, offset = 0, fixed_abs, tag = 'sflag constant byte address 0x0 - dummy sync flag']
  #allocation27 [shape = 's32[]', space=sflag, size = 0x4, offset = 0, fixed_abs, tag = 'sflag constant byte address 0x0 - dummy sync flag']
  #allocation29 [shape = 's32[]', space=sflag, size = 0x4, offset = 0, fixed_abs, tag = 'sflag constant byte address 0x0 - dummy sync flag']
  #allocation31 [shape = 's32[]', space=sflag, size = 0x4, offset = 0, fixed_abs, tag = 'sflag constant byte address 0x0 - dummy sync flag']
  #allocation32 [shape = 's32[]', space=sflag, size = 0x4, offset = 0, fixed_abs, tag = 'sflag constant byte address 0x0 - dummy sync flag']
  #allocation33 [shape = 's32[]', space=sflag, size = 0x4, offset = 0, fixed_abs, tag = 'sflag constant byte address 0x0 - dummy sync flag']
  #allocation34 [shape = 'u32[]', space=smem, size = 0x4, offset = 0x44, fixed_abs, tag = 'smem constant byte address 0x44 - assertion arg 0']
  #allocation35 [shape = 'u32[]', space=smem, size = 0x4, offset = 0x48, fixed_abs, tag = 'smem constant byte address 0x48 - assertion arg 1']
  %s0 = inlined_call_operand.hbm [shape: s32[3], index: 0, kind: input, shape index: {}]
  %s1 = inlined_call_operand.hbm [shape: f32[16,128], index: 1, kind: input, shape index: {}]
  %s2 = inlined_call_operand.vmem [shape: bf16[128,1024], index: 2, kind: input, shape index: {}]
  %s3 = inlined_call_operand.hbm [shape: bf16[256,1024], index: 3, kind: input, shape index: {}]
  %s4 = inlined_call_operand.hbm [shape: f32[1,1024], index: 4, kind: input, shape index: {}]
  %s5 = inlined_call_operand.hbm [shape: f32[1,1024], index: 5, kind: input, shape index: {}]
  %s6 = inlined_call_operand.vmem [shape: f32[16,128], index: 6, kind: input, shape index: {}]
  %s7 = inlined_call_operand.hbm [shape: bf16[128,128], index: 7, kind: input, shape index: {}]
  %s8 = inlined_call_operand.hbm [shape: f32[1,128], index: 8, kind: input, shape index: {}]
  %s9 = inlined_call_operand.hbm [shape: f32[1,512], index: 9, kind: input, shape index: {}]
  %s10 = inlined_call_operand.hbm [shape: f32[1,128], index: 10, kind: input, shape index: {}]
  %s11 = inlined_call_operand.hbm [shape: bf16[256,1024], index: 11, kind: input, shape index: {}]
  %s12 = inlined_call_operand.hbm [shape: bf16[256,1024], index: 12, kind: input, shape index: {}]
  %s13 = inlined_call_operand.hbm [shape: bf16[256,512], index: 13, kind: input, shape index: {}]
  %s14 = inlined_call_operand.vmem [shape: bf16[128,512], index: 14, kind: input, shape index: {}]
  %s15 = inlined_call_operand.hbm [shape: bf16[512,128], index: 15, kind: input, shape index: {}]
  %s16 = inlined_call_operand.vmem [shape: f32[1,128], index: 16, kind: output, shape index: {}]
  %s17 = sld [smem:[#allocation0]]
  $region131: #{generator_forward.1} parent=0
    _
  %s19 = ssub.s32 1, %s17
  %s20 = scalar_select 0, %s19, %s17
  $region1: #{generator_forward.1} parent=0
    #allocation10 [shape = 'u8[512]{0}', space=smem, size = 0x200, scoped, tag = 'input window, operand 0, single buffered']
    #allocation11 [shape = 's32[1]{0}', space=sflag, size = 0x4, scoped, tag = 'scoped memory for generator_forward.1']
    #allocation12 [shape = 's32[1]{0}', space=sflag, size = 0x4, scoped, tag = 'scoped memory for generator_forward.1']
    #allocation13 [shape = 'u8[8192]{0}', space=vmem, size = 0x2000, scoped, tag = 'input window, operand 1, single buffered']
    #allocation14 [shape = 'u8[524288]{0}', space=vmem, size = 0x80000, scoped, tag = 'input window, operand 3, single buffered']
    #allocation15 [shape = 's32[1]{0}', space=sflag, size = 0x4, scoped, tag = 'scoped memory for generator_forward.1']
    #allocation16 [shape = 'u8[4096]{0}', space=vmem, size = 0x1000, scoped, tag = 'input window, operand 4, single buffered']
    #allocation17 [shape = 'u8[4096]{0}', space=vmem, size = 0x1000, scoped, tag = 'input window, operand 5, single buffered']
    #allocation18 [shape = 's32[1]{0}', space=sflag, size = 0x4, scoped, tag = 'scoped memory for generator_forward.1']
    #allocation19 [shape = 'u8[32768]{0}', space=vmem, size = 0x8000, scoped, tag = 'input window, operand 7, single buffered']
    #allocation20 [shape = 'u8[512]{0}', space=vmem, size = 0x400, scoped, tag = 'input window, operand 8, single buffered']
    #allocation21 [shape = 's32[1]{0}', space=sflag, size = 0x4, scoped, tag = 'scoped memory for generator_forward.1']
    #allocation22 [shape = 'u8[2048]{0}', space=vmem, size = 0x800, scoped, tag = 'input window, operand 9, single buffered']
    #allocation23 [shape = 'u8[512]{0}', space=vmem, size = 0x400, scoped, tag = 'input window, operand 10, single buffered']
    #allocation24 [shape = 's32[1]{0}', space=sflag, size = 0x4, scoped, tag = 'scoped memory for generator_forward.1']
    #allocation26 [shape = 'u32[9]{0}', space=smem, size = 0x24, scoped, tag = 'DMA stride descriptor']
    #allocation28 [shape = 'u32[9]{0}', space=smem, size = 0x24, scoped, tag = 'DMA stride descriptor']
    #allocation30 [shape = 'u32[9]{0}', space=smem, size = 0x24, scoped, tag = 'DMA stride descriptor']
    %21 = vsyncpa [#allocation12], 0
    %22 = vsyncpa [#allocation11], 0
    %23 = vsyncpa [#allocation15], 0
    %24 = vsyncpa [#allocation18], 0
    %25 = vsyncpa [#allocation21], 0
    %26 = vsyncpa [#allocation24], 0
    // Predicated region
    $region2: #{generator_forward.1} parent=1 // pred_check
      _
    $region3: #{generator_forward.1} parent=1 // pred_check_branch
      %28 = sbr.rel (0) target = $region5
    $region4: #{generator_forward.1} parent=1 // pred_region
      %s30 = ssub.s32 16, 16
      %31 = vsyncadd [#allocation12], %s30
      %34 = dma.hbm_to_smem %s0, 16, [#allocation10], [#allocation12]
    $region5: #{generator_forward.1} parent=1 // pred_fallthru
      _
    // Predicated region
    $region6: #{generator_forward.1} parent=1 // pred_check
      _
    $region7: #{generator_forward.1} parent=1 // pred_check_branch
      %36 = sbr.rel (0) target = $region9
    $region8: #{generator_forward.1} parent=1 // pred_region
      %s38 = ssub.s32 256, 256
      %39 = vsyncadd [#allocation11], %s38
      %s40 = sshll.u32 [#allocation13], 4
      %s41 = int_to_ptr.vmem [resolvable:$true] %s40
      %46 = dma.hbm_to_vmem [thread:$0]  %s1, 256, %s41, [#allocation11], 128, 128, 8
    $region9: #{generator_forward.1} parent=1 // pred_fallthru
      _
    // Predicated region
    $region10: #{generator_forward.1} parent=1 // pred_check
      _
    $region11: #{generator_forward.1} parent=1 // pred_check_branch
      %48 = sbr.rel (0) target = $region13
    $region12: #{generator_forward.1} parent=1 // pred_region
      _
    $region13: #{generator_forward.1} parent=1 // pred_fallthru
      _
    // Predicated region
    $region14: #{generator_forward.1} parent=1 // pred_check
      _
    $region15: #{generator_forward.1} parent=1 // pred_check_branch
      %50 = sbr.rel (0) target = $region17
    $region16: #{generator_forward.1} parent=1 // pred_region
      %s52 = ssub.s32 16384, 16384
      %53 = vsyncadd [#allocation15], %s52
      %s54 = sshll.u32 [#allocation14], 4
      %s55 = int_to_ptr.vmem [resolvable:$true] %s54
      %60 = dma.hbm_to_vmem [thread:$0]  %s3, 16384, %s55, [#allocation15], 512, 512, 32
    $region17: #{generator_forward.1} parent=1 // pred_fallthru
      _
    // Predicated region
    $region18: #{generator_forward.1} parent=1 // pred_check
      _
    $region19: #{generator_forward.1} parent=1 // pred_check_branch
      %62 = sbr.rel (0) target = $region21
    $region20: #{generator_forward.1} parent=1 // pred_region
      %s64 = ssub.s32 128, 128
      %65 = vsyncadd [#allocation15], %s64
      %s67 = sshll.u32 [#allocation16], 4
      %s68 = int_to_ptr.vmem [resolvable:$true] %s67
      %70 = dma.hbm_to_vmem [thread:$0]  %s4, 128, %s68, [#allocation15]
    $region21: #{generator_forward.1} parent=1 // pred_fallthru
      _
    // Predicated region
    $region22: #{generator_forward.1} parent=1 // pred_check
      _
    $region23: #{generator_forward.1} parent=1 // pred_check_branch
      %72 = sbr.rel (0) target = $region25
    $region24: #{generator_forward.1} parent=1 // pred_region
      %s74 = ssub.s32 128, 128
      %75 = vsyncadd [#allocation18], %s74
      %s77 = sshll.u32 [#allocation17], 4
      %s78 = int_to_ptr.vmem [resolvable:$true] %s77
      %80 = dma.hbm_to_vmem [thread:$0]  %s5, 128, %s78, [#allocation18]
    $region25: #{generator_forward.1} parent=1 // pred_fallthru
      _
    // Predicated region
    $region26: #{generator_forward.1} parent=1 // pred_check
      _
    $region27: #{generator_forward.1} parent=1 // pred_check_branch
      %82 = sbr.rel (0) target = $region29
    $region28: #{generator_forward.1} parent=1 // pred_region
      _
    $region29: #{generator_forward.1} parent=1 // pred_fallthru
      _
    // Predicated region
    $region30: #{generator_forward.1} parent=1 // pred_check
      _
    $region31: #{generator_forward.1} parent=1 // pred_check_branch
      %84 = sbr.rel (0) target = $region33
    $region32: #{generator_forward.1} parent=1 // pred_region
      %s86 = ssub.s32 1024, 1024
      %87 = vsyncadd [#allocation18], %s86
      %s88 = sshll.u32 [#allocation19], 4
      %s89 = int_to_ptr.vmem [resolvable:$true] %s88
      %94 = dma.hbm_to_vmem [thread:$0]  %s7, 1024, %s89, [#allocation18], 64, 64, 4
    $region33: #{generator_forward.1} parent=1 // pred_fallthru
      _
    // Predicated region
    $region34: #{generator_forward.1} parent=1 // pred_check
      _
    $region35: #{generator_forward.1} parent=1 // pred_check_branch
      %96 = sbr.rel (0) target = $region37
    $region36: #{generator_forward.1} parent=1 // pred_region
      %s98 = ssub.s32 16, 16
      %99 = vsyncadd [#allocation21], %s98
      %s101 = sshll.u32 [#allocation20], 4
      %s102 = int_to_ptr.vmem [resolvable:$true] %s101
      %104 = dma.hbm_to_vmem [thread:$0]  %s8, 16, %s102, [#allocation21]
    $region37: #{generator_forward.1} parent=1 // pred_fallthru
      _
    // Predicated region
    $region38: #{generator_forward.1} parent=1 // pred_check
      _
    $region39: #{generator_forward.1} parent=1 // pred_check_branch
      %106 = sbr.rel (0) target = $region41
    $region40: #{generator_forward.1} parent=1 // pred_region
      %s108 = ssub.s32 64, 64
      %109 = vsyncadd [#allocation21], %s108
      %s111 = sshll.u32 [#allocation22], 4
      %s112 = int_to_ptr.vmem [resolvable:$true] %s111
      %114 = dma.hbm_to_vmem [thread:$0]  %s9, 64, %s112, [#allocation21]
    $region41: #{generator_forward.1} parent=1 // pred_fallthru
      _
    // Predicated region
    $region42: #{generator_forward.1} parent=1 // pred_check
      _
    $region43: #{generator_forward.1} parent=1 // pred_check_branch
      %116 = sbr.rel (0) target = $region45
    $region44: #{generator_forward.1} parent=1 // pred_region
      %s118 = ssub.s32 16, 16
      %119 = vsyncadd [#allocation24], %s118
      %s121 = sshll.u32 [#allocation23], 4
      %s122 = int_to_ptr.vmem [resolvable:$true] %s121
      %124 = dma.hbm_to_vmem [thread:$0]  %s10, 16, %s122, [#allocation24]
    $region45: #{generator_forward.1} parent=1 // pred_fallthru
      _
    // Predicated region
    $region46: #{generator_forward.1} parent=1 // pred_check
      _
    $region47: #{generator_forward.1} parent=1 // pred_check_branch
      %126 = sbr.rel (0) target = $region49
    $region48: #{generator_forward.1} parent=1 // pred_region
      %127 = dma.done [#allocation12], 16
    $region49: #{generator_forward.1} parent=1 // pred_fallthru
      _
    // Predicated region
    $region50: #{generator_forward.1} parent=1 // pred_check
      _
    $region51: #{generator_forward.1} parent=1 // pred_check_branch
      %129 = sbr.rel (0) target = $region53
    $region52: #{generator_forward.1} parent=1 // pred_region
      %130 = dma.done [#allocation11], 256
    $region53: #{generator_forward.1} parent=1 // pred_fallthru
      _
    // Predicated region
    $region54: #{generator_forward.1} parent=1 // pred_check
      _
    $region55: #{generator_forward.1} parent=1 // pred_check_branch
      %132 = sbr.rel (0) target = $region57
    $region56: #{generator_forward.1} parent=1 // pred_region
      %133 = dma.done [#allocation15], 16384
    $region57: #{generator_forward.1} parent=1 // pred_fallthru
      _
    // Predicated region
    $region58: #{generator_forward.1} parent=1 // pred_check
      _
    $region59: #{generator_forward.1} parent=1 // pred_check_branch
      %135 = sbr.rel (0) target = $region61
    $region60: #{generator_forward.1} parent=1 // pred_region
      %136 = dma.done [#allocation15], 128
    $region61: #{generator_forward.1} parent=1 // pred_fallthru
      _
    // Predicated region
    $region62: #{generator_forward.1} parent=1 // pred_check
      _
    $region63: #{generator_forward.1} parent=1 // pred_check_branch
      %138 = sbr.rel (0) target = $region65
    $region64: #{generator_forward.1} parent=1 // pred_region
      %139 = dma.done [#allocation18], 128
    $region65: #{generator_forward.1} parent=1 // pred_fallthru
      _
    // Predicated region
    $region66: #{generator_forward.1} parent=1 // pred_check
      _
    $region67: #{generator_forward.1} parent=1 // pred_check_branch
      %141 = sbr.rel (0) target = $region69
    $region68: #{generator_forward.1} parent=1 // pred_region
      %142 = dma.done [#allocation18], 1024
    $region69: #{generator_forward.1} parent=1 // pred_fallthru
      _
    // Predicated region
    $region70: #{generator_forward.1} parent=1 // pred_check
      _
    $region71: #{generator_forward.1} parent=1 // pred_check_branch
      %144 = sbr.rel (0) target = $region73
    $region72: #{generator_forward.1} parent=1 // pred_region
      %145 = dma.done [#allocation21], 16
    $region73: #{generator_forward.1} parent=1 // pred_fallthru
      _
    // Predicated region
    $region74: #{generator_forward.1} parent=1 // pred_check
      _
    $region75: #{generator_forward.1} parent=1 // pred_check_branch
      %147 = sbr.rel (0) target = $region77
    $region76: #{generator_forward.1} parent=1 // pred_region
      %148 = dma.done [#allocation21], 64
    $region77: #{generator_forward.1} parent=1 // pred_fallthru
      _
    // Predicated region
    $region78: #{generator_forward.1} parent=1 // pred_check
      _
    $region79: #{generator_forward.1} parent=1 // pred_check_branch
      %150 = sbr.rel (0) target = $region81
    $region80: #{generator_forward.1} parent=1 // pred_region
      %151 = dma.done [#allocation24], 16
    $region81: #{generator_forward.1} parent=1 // pred_fallthru
      _
    %152 = sfence
    %s155 = sshll.u32 1, 14
    %s156 = sxor.u32 4294967295, %s155
    %s158 = sld [smem:[#allocation0]]
    %s159 = sadd.s32 2, %s158
    %s161 = sshll.u32 7, 26
    %s162 = sxor.u32 4294967295, %s161
    %s163 = sand.u32 0, %s162
    %s164 = sshll.u32 %s159, 26
    %s165 = sor.u32 %s163, %s164
    %s166 = sshll.u32 [#allocation4], 4
    %s167 = int_to_ptr.vmem [resolvable:$true] %s166
    %170 = sst [smem:[#allocation26]] 1024
    %s171 = scalar_lea.smem [#allocation26], 1
    %172 = sst [smem:[%s171]] 1024
    %s173 = scalar_lea.smem [#allocation26], 2
    %174 = sst [smem:[%s173]] 8
    %s175 = scalar_lea.smem [#allocation26], 3
    %176 = sst [smem:[%s175]] 64
    %s177 = scalar_lea.smem [#allocation26], 4
    %178 = sst [smem:[%s177]] 128
    %s179 = scalar_lea.smem [#allocation26], 5
    %180 = sst [smem:[%s179]] 2
    %s181 = scalar_lea.smem [#allocation26], 6
    %182 = sst [smem:[%s181]] 512
    %s183 = scalar_lea.smem [#allocation26], 7
    %184 = sst [smem:[%s183]] 64
    %s185 = scalar_lea.smem [#allocation26], 8
    %186 = sst [smem:[%s185]] 4
    %188 = dma.general %s11, 16384, %s167, [#allocation9], [#allocation25], [#allocation26], %s165, 0
    %s189 = scalar_lea.sflag [#allocation9], 1
    %s191 = sshll.u32 1, 14
    %s192 = sxor.u32 4294967295, %s191
    %s194 = sadd.s32 2, %s158
    %s196 = sshll.u32 7, 26
    %s197 = sxor.u32 4294967295, %s196
    %s198 = sand.u32 0, %s197
    %s199 = sshll.u32 %s194, 26
    %s200 = sor.u32 %s198, %s199
    %s201 = sshll.u32 [#allocation5], 4
    %s202 = int_to_ptr.vmem [resolvable:$true] %s201
    %205 = sst [smem:[#allocation28]] 1024
    %s206 = scalar_lea.smem [#allocation28], 1
    %207 = sst [smem:[%s206]] 1024
    %s208 = scalar_lea.smem [#allocation28], 2
    %209 = sst [smem:[%s208]] 8
    %s210 = scalar_lea.smem [#allocation28], 3
    %211 = sst [smem:[%s210]] 64
    %s212 = scalar_lea.smem [#allocation28], 4
    %213 = sst [smem:[%s212]] 128
    %s214 = scalar_lea.smem [#allocation28], 5
    %215 = sst [smem:[%s214]] 2
    %s216 = scalar_lea.smem [#allocation28], 6
    %217 = sst [smem:[%s216]] 512
    %s218 = scalar_lea.smem [#allocation28], 7
    %219 = sst [smem:[%s218]] 64
    %s220 = scalar_lea.smem [#allocation28], 8
    %221 = sst [smem:[%s220]] 4
    %223 = dma.general %s12, 16384, %s202, %s189, [#allocation27], [#allocation28], %s200, 0
    %s224 = scalar_lea.sflag [#allocation9], 2
    %s226 = sshll.u32 1, 14
    %s227 = sxor.u32 4294967295, %s226
    %s229 = sadd.s32 2, %s158
    %s231 = sshll.u32 7, 26
    %s232 = sxor.u32 4294967295, %s231
    %s233 = sand.u32 0, %s232
    %s234 = sshll.u32 %s229, 26
    %s235 = sor.u32 %s233, %s234
    %s236 = sshll.u32 [#allocation6], 4
    %s237 = int_to_ptr.vmem [resolvable:$true] %s236
    %240 = sst [smem:[#allocation30]] 512
    %s241 = scalar_lea.smem [#allocation30], 1
    %242 = sst [smem:[%s241]] 512
    %s243 = scalar_lea.smem [#allocation30], 2
    %244 = sst [smem:[%s243]] 4
    %s245 = scalar_lea.smem [#allocation30], 3
    %246 = sst [smem:[%s245]] 64
    %s247 = scalar_lea.smem [#allocation30], 4
    %248 = sst [smem:[%s247]] 128
    %s249 = scalar_lea.smem [#allocation30], 5
    %250 = sst [smem:[%s249]] 2
    %s251 = scalar_lea.smem [#allocation30], 6
    %252 = sst [smem:[%s251]] 256
    %s253 = scalar_lea.smem [#allocation30], 7
    %254 = sst [smem:[%s253]] 64
    %s255 = scalar_lea.smem [#allocation30], 8
    %256 = sst [smem:[%s255]] 4
    %258 = dma.general %s13, 8192, %s237, %s224, [#allocation29], [#allocation30], %s235, 0
    %s259 = scalar_lea.sflag [#allocation9], 3
    %p261 = scmp.lt.u32.totalorder 4, 8
    %p262 = pneg %p261
    // Predicated region
    $region82: #{generator_forward.1} parent=1 // pred_check
      _
    $region83: #{generator_forward.1} parent=1 // pred_check_branch
      %264 = sbr.rel (%p261) target = $region85
    $region84: #{generator_forward.1} parent=1 // pred_region
      %s405 = sand.u32 4, 7
      %p406 = scmp.eq.s32.totalorder %s405, 0
      %p407 = pneg %p406
      // Predicated region
      $region97: #{generator_forward.1} parent=84 // pred_check
        _
      $region98: #{generator_forward.1} parent=84 // pred_check_branch
        %409 = sbr.rel (%p406) target = $region100
      $region99: #{generator_forward.1} parent=84 // pred_region
        %s410 = sand.u32 4, 7
        %s411 = ssub.s32 4, %s410
        %s412 = scalar_lea.vmem %s14, %s411
        %s413 = ssub.s32 4, %s410
        %s414 = scalar_lea.vmem [#allocation7], %s413
        loop: start=0, step=1, limit=1
        $region101: #{generator_forward.1} parent=99 // loop_pre_header
          _
        $region102: #{generator_forward.1} parent=99 // loop_header
          %s416 = sphi 0, %s420
          %p417 = scmp.ge.s32.totalorder %s416, 1
          %s421 = sphi %s14, %s14
          %s422 = sphi [#allocation7], [#allocation7]
        $region103: #{generator_forward.1} parent=99 // loop_header_branch
          %419 = sbr.rel (%p417) target = $region107
        $region104: #{generator_forward.1} parent=99 // loop_body
          _
        $region105: #{generator_forward.1} parent=99 // loop_footer
          %s420 = sadd.s32 1, %s416
        $region106: #{generator_forward.1} parent=99 // loop_footer_branch
          %415 = sbr.rel target = $region102
        $region107: #{generator_forward.1} parent=99 // loop_exit
          _
        %s423 = sshllo.u32 0, %s410
        loop: start=0, step=1, limit=1
        $region108: #{generator_forward.1} parent=99 // loop_pre_header
          _
        $region109: #{generator_forward.1} parent=99 // loop_header
          %s425 = sphi 0, %s429
          %p426 = scmp.ge.s32.totalorder %s425, 1
          %s430 = sphi %s412, %s412
          %s431 = sphi %s414, %s414
        $region110: #{generator_forward.1} parent=99 // loop_header_branch
          %428 = sbr.rel (%p426) target = $region114
        $region111: #{generator_forward.1} parent=99 // loop_body
          %v432 = vld [vmem:[%s430] sm:%s423]
          %433 = vst [vmem:[%s431] sm:%s423] %v432
          %v434 = vld [vmem:[%s430 + $0x10] sm:%s423]
          %435 = vst [vmem:[%s431 + $0x4] sm:%s423] %v434
          %v436 = vld [vmem:[%s430 + $0x4] sm:%s423]
          %437 = vst [vmem:[%s431 + $0x8] sm:%s423] %v436
          %v438 = vld [vmem:[%s430 + $0x14] sm:%s423]
          %439 = vst [vmem:[%s431 + $0xc] sm:%s423] %v438
          %v440 = vld [vmem:[%s430 + $0x8] sm:%s423]
          %441 = vst [vmem:[%s431 + $0x10] sm:%s423] %v440
          %v442 = vld [vmem:[%s430 + $0x18] sm:%s423]
          %443 = vst [vmem:[%s431 + $0x14] sm:%s423] %v442
          %v444 = vld [vmem:[%s430 + $0xc] sm:%s423]
          %445 = vst [vmem:[%s431 + $0x18] sm:%s423] %v444
          %v446 = vld [vmem:[%s430 + $0x1c] sm:%s423]
          %447 = vst [vmem:[%s431 + $0x1c] sm:%s423] %v446
          %v448 = vld [vmem:[%s430 + $0x20] sm:%s423]
          %449 = vst [vmem:[%s431 + $0x20] sm:%s423] %v448
          %v450 = vld [vmem:[%s430 + $0x30] sm:%s423]
          %451 = vst [vmem:[%s431 + $0x24] sm:%s423] %v450
          %v452 = vld [vmem:[%s430 + $0x24] sm:%s423]
          %453 = vst [vmem:[%s431 + $0x28] sm:%s423] %v452
          %v454 = vld [vmem:[%s430 + $0x34] sm:%s423]
          %455 = vst [vmem:[%s431 + $0x2c] sm:%s423] %v454
          %v456 = vld [vmem:[%s430 + $0x28] sm:%s423]
          %457 = vst [vmem:[%s431 + $0x30] sm:%s423] %v456
          %v458 = vld [vmem:[%s430 + $0x38] sm:%s423]
          %459 = vst [vmem:[%s431 + $0x34] sm:%s423] %v458
          %v460 = vld [vmem:[%s430 + $0x2c] sm:%s423]
          %461 = vst [vmem:[%s431 + $0x38] sm:%s423] %v460
          %v462 = vld [vmem:[%s430 + $0x3c] sm:%s423]
          %463 = vst [vmem:[%s431 + $0x3c] sm:%s423] %v462
          %v464 = vld [vmem:[%s430 + $0x40] sm:%s423]
          %465 = vst [vmem:[%s431 + $0x40] sm:%s423] %v464
          %v466 = vld [vmem:[%s430 + $0x50] sm:%s423]
          %467 = vst [vmem:[%s431 + $0x44] sm:%s423] %v466
          %v468 = vld [vmem:[%s430 + $0x44] sm:%s423]
          %469 = vst [vmem:[%s431 + $0x48] sm:%s423] %v468
          %v470 = vld [vmem:[%s430 + $0x54] sm:%s423]
          %471 = vst [vmem:[%s431 + $0x4c] sm:%s423] %v470
          %v472 = vld [vmem:[%s430 + $0x48] sm:%s423]
          %473 = vst [vmem:[%s431 + $0x50] sm:%s423] %v472
          %v474 = vld [vmem:[%s430 + $0x58] sm:%s423]
          %475 = vst [vmem:[%s431 + $0x54] sm:%s423] %v474
          %v476 = vld [vmem:[%s430 + $0x4c] sm:%s423]
          %477 = vst [vmem:[%s431 + $0x58] sm:%s423] %v476
          %v478 = vld [vmem:[%s430 + $0x5c] sm:%s423]
          %479 = vst [vmem:[%s431 + $0x5c] sm:%s423] %v478
          %v480 = vld [vmem:[%s430 + $0x60] sm:%s423]
          %481 = vst [vmem:[%s431 + $0x60] sm:%s423] %v480
          %v482 = vld [vmem:[%s430 + $0x70] sm:%s423]
          %483 = vst [vmem:[%s431 + $0x64] sm:%s423] %v482
          %v484 = vld [vmem:[%s430 + $0x64] sm:%s423]
          %485 = vst [vmem:[%s431 + $0x68] sm:%s423] %v484
          %v486 = vld [vmem:[%s430 + $0x74] sm:%s423]
          %487 = vst [vmem:[%s431 + $0x6c] sm:%s423] %v486
          %v488 = vld [vmem:[%s430 + $0x68] sm:%s423]
          %489 = vst [vmem:[%s431 + $0x70] sm:%s423] %v488
          %v490 = vld [vmem:[%s430 + $0x78] sm:%s423]
          %491 = vst [vmem:[%s431 + $0x74] sm:%s423] %v490
          %v492 = vld [vmem:[%s430 + $0x6c] sm:%s423]
          %493 = vst [vmem:[%s431 + $0x78] sm:%s423] %v492
          %v494 = vld [vmem:[%s430 + $0x7c] sm:%s423]
          %495 = vst [vmem:[%s431 + $0x7c] sm:%s423] %v494
          %v496 = vld [vmem:[%s430 + $0x80] sm:%s423]
          %497 = vst [vmem:[%s431 + $0x80] sm:%s423] %v496
          %v498 = vld [vmem:[%s430 + $0x90] sm:%s423]
          %499 = vst [vmem:[%s431 + $0x84] sm:%s423] %v498
          %v500 = vld [vmem:[%s430 + $0x84] sm:%s423]
          %501 = vst [vmem:[%s431 + $0x88] sm:%s423] %v500
          %v502 = vld [vmem:[%s430 + $0x94] sm:%s423]
          %503 = vst [vmem:[%s431 + $0x8c] sm:%s423] %v502
          %v504 = vld [vmem:[%s430 + $0x88] sm:%s423]
          %505 = vst [vmem:[%s431 + $0x90] sm:%s423] %v504
          %v506 = vld [vmem:[%s430 + $0x98] sm:%s423]
          %507 = vst [vmem:[%s431 + $0x94] sm:%s423] %v506
          %v508 = vld [vmem:[%s430 + $0x8c] sm:%s423]
          %509 = vst [vmem:[%s431 + $0x98] sm:%s423] %v508
          %v510 = vld [vmem:[%s430 + $0x9c] sm:%s423]
          %511 = vst [vmem:[%s431 + $0x9c] sm:%s423] %v510
          %v512 = vld [vmem:[%s430 + $0xa0] sm:%s423]
          %513 = vst [vmem:[%s431 + $0xa0] sm:%s423] %v512
          %v514 = vld [vmem:[%s430 + $0xb0] sm:%s423]
          %515 = vst [vmem:[%s431 + $0xa4] sm:%s423] %v514
          %v516 = vld [vmem:[%s430 + $0xa4] sm:%s423]
          %517 = vst [vmem:[%s431 + $0xa8] sm:%s423] %v516
          %v518 = vld [vmem:[%s430 + $0xb4] sm:%s423]
          %519 = vst [vmem:[%s431 + $0xac] sm:%s423] %v518
          %v520 = vld [vmem:[%s430 + $0xa8] sm:%s423]
          %521 = vst [vmem:[%s431 + $0xb0] sm:%s423] %v520
          %v522 = vld [vmem:[%s430 + $0xb8] sm:%s423]
          %523 = vst [vmem:[%s431 + $0xb4] sm:%s423] %v522
          %v524 = vld [vmem:[%s430 + $0xac] sm:%s423]
          %525 = vst [vmem:[%s431 + $0xb8] sm:%s423] %v524
          %v526 = vld [vmem:[%s430 + $0xbc] sm:%s423]
          %527 = vst [vmem:[%s431 + $0xbc] sm:%s423] %v526
          %v528 = vld [vmem:[%s430 + $0xc0] sm:%s423]
          %529 = vst [vmem:[%s431 + $0xc0] sm:%s423] %v528
          %v530 = vld [vmem:[%s430 + $0xd0] sm:%s423]
          %531 = vst [vmem:[%s431 + $0xc4] sm:%s423] %v530
          %v532 = vld [vmem:[%s430 + $0xc4] sm:%s423]
          %533 = vst [vmem:[%s431 + $0xc8] sm:%s423] %v532
          %v534 = vld [vmem:[%s430 + $0xd4] sm:%s423]
          %535 = vst [vmem:[%s431 + $0xcc] sm:%s423] %v534
          %v536 = vld [vmem:[%s430 + $0xc8] sm:%s423]
          %537 = vst [vmem:[%s431 + $0xd0] sm:%s423] %v536
          %v538 = vld [vmem:[%s430 + $0xd8] sm:%s423]
          %539 = vst [vmem:[%s431 + $0xd4] sm:%s423] %v538
          %v540 = vld [vmem:[%s430 + $0xcc] sm:%s423]
          %541 = vst [vmem:[%s431 + $0xd8] sm:%s423] %v540
          %v542 = vld [vmem:[%s430 + $0xdc] sm:%s423]
          %543 = vst [vmem:[%s431 + $0xdc] sm:%s423] %v542
          %v544 = vld [vmem:[%s430 + $0xe0] sm:%s423]
          %545 = vst [vmem:[%s431 + $0xe0] sm:%s423] %v544
          %v546 = vld [vmem:[%s430 + $0xf0] sm:%s423]
          %547 = vst [vmem:[%s431 + $0xe4] sm:%s423] %v546
          %v548 = vld [vmem:[%s430 + $0xe4] sm:%s423]
          %549 = vst [vmem:[%s431 + $0xe8] sm:%s423] %v548
          %v550 = vld [vmem:[%s430 + $0xf4] sm:%s423]
          %551 = vst [vmem:[%s431 + $0xec] sm:%s423] %v550
          %v552 = vld [vmem:[%s430 + $0xe8] sm:%s423]
          %553 = vst [vmem:[%s431 + $0xf0] sm:%s423] %v552
          %v554 = vld [vmem:[%s430 + $0xf8] sm:%s423]
          %555 = vst [vmem:[%s431 + $0xf4] sm:%s423] %v554
          %v556 = vld [vmem:[%s430 + $0xec] sm:%s423]
          %557 = vst [vmem:[%s431 + $0xf8] sm:%s423] %v556
          %v558 = vld [vmem:[%s430 + $0xfc] sm:%s423]
          %559 = vst [vmem:[%s431 + $0xfc] sm:%s423] %v558
        $region112: #{generator_forward.1} parent=99 // loop_footer
          %s429 = sadd.s32 1, %s425
        $region113: #{generator_forward.1} parent=99 // loop_footer_branch
          %424 = sbr.rel target = $region109
        $region114: #{generator_forward.1} parent=99 // loop_exit
          _
      $region100: #{generator_forward.1} parent=84 // pred_fallthru
        _
    $region85: #{generator_forward.1} parent=1 // pred_fallthru
      _
    // Predicated region
    $region86: #{generator_forward.1} parent=1 // pred_check
      %p265 = pneg %p261
    $region87: #{generator_forward.1} parent=1 // pred_check_branch
      %267 = sbr.rel (%p265) target = $region89
    $region88: #{generator_forward.1} parent=1 // pred_region
      %s268 = sshllo.u32 0, 4
      loop: start=0, step=1, limit=1
      $region90: #{generator_forward.1} parent=88 // loop_pre_header
        _
      $region91: #{generator_forward.1} parent=88 // loop_header
        %s270 = sphi 0, %s274
        %p271 = scmp.ge.s32.totalorder %s270, 1
        %s275 = sphi %s14, %s14
        %s276 = sphi [#allocation7], [#allocation7]
      $region92: #{generator_forward.1} parent=88 // loop_header_branch
        %273 = sbr.rel (%p271) target = $region96
      $region93: #{generator_forward.1} parent=88 // loop_body
        %v277 = vld [vmem:[%s275] sm:%s268]
        %278 = vst [vmem:[%s276] sm:%s268] %v277
        %v279 = vld [vmem:[%s275 + $0x10] sm:%s268]
        %280 = vst [vmem:[%s276 + $0x4] sm:%s268] %v279
        %v281 = vld [vmem:[%s275 + $0x4] sm:%s268]
        %282 = vst [vmem:[%s276 + $0x8] sm:%s268] %v281
        %v283 = vld [vmem:[%s275 + $0x14] sm:%s268]
        %284 = vst [vmem:[%s276 + $0xc] sm:%s268] %v283
        %v285 = vld [vmem:[%s275 + $0x8] sm:%s268]
        %286 = vst [vmem:[%s276 + $0x10] sm:%s268] %v285
        %v287 = vld [vmem:[%s275 + $0x18] sm:%s268]
        %288 = vst [vmem:[%s276 + $0x14] sm:%s268] %v287
        %v289 = vld [vmem:[%s275 + $0xc] sm:%s268]
        %290 = vst [vmem:[%s276 + $0x18] sm:%s268] %v289
        %v291 = vld [vmem:[%s275 + $0x1c] sm:%s268]
        %292 = vst [vmem:[%s276 + $0x1c] sm:%s268] %v291
        %v293 = vld [vmem:[%s275 + $0x20] sm:%s268]
        %294 = vst [vmem:[%s276 + $0x20] sm:%s268] %v293
        %v295 = vld [vmem:[%s275 + $0x30] sm:%s268]
        %296 = vst [vmem:[%s276 + $0x24] sm:%s268] %v295
        %v297 = vld [vmem:[%s275 + $0x24] sm:%s268]
        %298 = vst [vmem:[%s276 + $0x28] sm:%s268] %v297
        %v299 = vld [vmem:[%s275 + $0x34] sm:%s268]
        %300 = vst [vmem:[%s276 + $0x2c] sm:%s268] %v299
        %v301 = vld [vmem:[%s275 + $0x28] sm:%s268]
        %302 = vst [vmem:[%s276 + $0x30] sm:%s268] %v301
        %v303 = vld [vmem:[%s275 + $0x38] sm:%s268]
        %304 = vst [vmem:[%s276 + $0x34] sm:%s268] %v303
        %v305 = vld [vmem:[%s275 + $0x2c] sm:%s268]
        %306 = vst [vmem:[%s276 + $0x38] sm:%s268] %v305
        %v307 = vld [vmem:[%s275 + $0x3c] sm:%s268]
        %308 = vst [vmem:[%s276 + $0x3c] sm:%s268] %v307
        %v309 = vld [vmem:[%s275 + $0x40] sm:%s268]
        %310 = vst [vmem:[%s276 + $0x40] sm:%s268] %v309
        %v311 = vld [vmem:[%s275 + $0x50] sm:%s268]
        %312 = vst [vmem:[%s276 + $0x44] sm:%s268] %v311
        %v313 = vld [vmem:[%s275 + $0x44] sm:%s268]
        %314 = vst [vmem:[%s276 + $0x48] sm:%s268] %v313
        %v315 = vld [vmem:[%s275 + $0x54] sm:%s268]
        %316 = vst [vmem:[%s276 + $0x4c] sm:%s268] %v315
        %v317 = vld [vmem:[%s275 + $0x48] sm:%s268]
        %318 = vst [vmem:[%s276 + $0x50] sm:%s268] %v317
        %v319 = vld [vmem:[%s275 + $0x58] sm:%s268]
        %320 = vst [vmem:[%s276 + $0x54] sm:%s268] %v319
        %v321 = vld [vmem:[%s275 + $0x4c] sm:%s268]
        %322 = vst [vmem:[%s276 + $0x58] sm:%s268] %v321
        %v323 = vld [vmem:[%s275 + $0x5c] sm:%s268]
        %324 = vst [vmem:[%s276 + $0x5c] sm:%s268] %v323
        %v325 = vld [vmem:[%s275 + $0x60] sm:%s268]
        %326 = vst [vmem:[%s276 + $0x60] sm:%s268] %v325
        %v327 = vld [vmem:[%s275 + $0x70] sm:%s268]
        %328 = vst [vmem:[%s276 + $0x64] sm:%s268] %v327
        %v329 = vld [vmem:[%s275 + $0x64] sm:%s268]
        %330 = vst [vmem:[%s276 + $0x68] sm:%s268] %v329
        %v331 = vld [vmem:[%s275 + $0x74] sm:%s268]
        %332 = vst [vmem:[%s276 + $0x6c] sm:%s268] %v331
        %v333 = vld [vmem:[%s275 + $0x68] sm:%s268]
        %334 = vst [vmem:[%s276 + $0x70] sm:%s268] %v333
        %v335 = vld [vmem:[%s275 + $0x78] sm:%s268]
        %336 = vst [vmem:[%s276 + $0x74] sm:%s268] %v335
        %v337 = vld [vmem:[%s275 + $0x6c] sm:%s268]
        %338 = vst [vmem:[%s276 + $0x78] sm:%s268] %v337
        %v339 = vld [vmem:[%s275 + $0x7c] sm:%s268]
        %340 = vst [vmem:[%s276 + $0x7c] sm:%s268] %v339
        %v341 = vld [vmem:[%s275 + $0x80] sm:%s268]
        %342 = vst [vmem:[%s276 + $0x80] sm:%s268] %v341
        %v343 = vld [vmem:[%s275 + $0x90] sm:%s268]
        %344 = vst [vmem:[%s276 + $0x84] sm:%s268] %v343
        %v345 = vld [vmem:[%s275 + $0x84] sm:%s268]
        %346 = vst [vmem:[%s276 + $0x88] sm:%s268] %v345
        %v347 = vld [vmem:[%s275 + $0x94] sm:%s268]
        %348 = vst [vmem:[%s276 + $0x8c] sm:%s268] %v347
        %v349 = vld [vmem:[%s275 + $0x88] sm:%s268]
        %350 = vst [vmem:[%s276 + $0x90] sm:%s268] %v349
        %v351 = vld [vmem:[%s275 + $0x98] sm:%s268]
        %352 = vst [vmem:[%s276 + $0x94] sm:%s268] %v351
        %v353 = vld [vmem:[%s275 + $0x8c] sm:%s268]
        %354 = vst [vmem:[%s276 + $0x98] sm:%s268] %v353
        %v355 = vld [vmem:[%s275 + $0x9c] sm:%s268]
        %356 = vst [vmem:[%s276 + $0x9c] sm:%s268] %v355
        %v357 = vld [vmem:[%s275 + $0xa0] sm:%s268]
        %358 = vst [vmem:[%s276 + $0xa0] sm:%s268] %v357
        %v359 = vld [vmem:[%s275 + $0xb0] sm:%s268]
        %360 = vst [vmem:[%s276 + $0xa4] sm:%s268] %v359
        %v361 = vld [vmem:[%s275 + $0xa4] sm:%s268]
        %362 = vst [vmem:[%s276 + $0xa8] sm:%s268] %v361
        %v363 = vld [vmem:[%s275 + $0xb4] sm:%s268]
        %364 = vst [vmem:[%s276 + $0xac] sm:%s268] %v363
        %v365 = vld [vmem:[%s275 + $0xa8] sm:%s268]
        %366 = vst [vmem:[%s276 + $0xb0] sm:%s268] %v365
        %v367 = vld [vmem:[%s275 + $0xb8] sm:%s268]
        %368 = vst [vmem:[%s276 + $0xb4] sm:%s268] %v367
        %v369 = vld [vmem:[%s275 + $0xac] sm:%s268]
        %370 = vst [vmem:[%s276 + $0xb8] sm:%s268] %v369
        %v371 = vld [vmem:[%s275 + $0xbc] sm:%s268]
        %372 = vst [vmem:[%s276 + $0xbc] sm:%s268] %v371
        %v373 = vld [vmem:[%s275 + $0xc0] sm:%s268]
        %374 = vst [vmem:[%s276 + $0xc0] sm:%s268] %v373
        %v375 = vld [vmem:[%s275 + $0xd0] sm:%s268]
        %376 = vst [vmem:[%s276 + $0xc4] sm:%s268] %v375
        %v377 = vld [vmem:[%s275 + $0xc4] sm:%s268]
        %378 = vst [vmem:[%s276 + $0xc8] sm:%s268] %v377
        %v379 = vld [vmem:[%s275 + $0xd4] sm:%s268]
        %380 = vst [vmem:[%s276 + $0xcc] sm:%s268] %v379
        %v381 = vld [vmem:[%s275 + $0xc8] sm:%s268]
        %382 = vst [vmem:[%s276 + $0xd0] sm:%s268] %v381
        %v383 = vld [vmem:[%s275 + $0xd8] sm:%s268]
        %384 = vst [vmem:[%s276 + $0xd4] sm:%s268] %v383
        %v385 = vld [vmem:[%s275 + $0xcc] sm:%s268]
        %386 = vst [vmem:[%s276 + $0xd8] sm:%s268] %v385
        %v387 = vld [vmem:[%s275 + $0xdc] sm:%s268]
        %388 = vst [vmem:[%s276 + $0xdc] sm:%s268] %v387
        %v389 = vld [vmem:[%s275 + $0xe0] sm:%s268]
        %390 = vst [vmem:[%s276 + $0xe0] sm:%s268] %v389
        %v391 = vld [vmem:[%s275 + $0xf0] sm:%s268]
        %392 = vst [vmem:[%s276 + $0xe4] sm:%s268] %v391
        %v393 = vld [vmem:[%s275 + $0xe4] sm:%s268]
        %394 = vst [vmem:[%s276 + $0xe8] sm:%s268] %v393
        %v395 = vld [vmem:[%s275 + $0xf4] sm:%s268]
        %396 = vst [vmem:[%s276 + $0xec] sm:%s268] %v395
        %v397 = vld [vmem:[%s275 + $0xe8] sm:%s268]
        %398 = vst [vmem:[%s276 + $0xf0] sm:%s268] %v397
        %v399 = vld [vmem:[%s275 + $0xf8] sm:%s268]
        %400 = vst [vmem:[%s276 + $0xf4] sm:%s268] %v399
        %v401 = vld [vmem:[%s275 + $0xec] sm:%s268]
        %402 = vst [vmem:[%s276 + $0xf8] sm:%s268] %v401
        %v403 = vld [vmem:[%s275 + $0xfc] sm:%s268]
        %404 = vst [vmem:[%s276 + $0xfc] sm:%s268] %v403
      $region94: #{generator_forward.1} parent=88 // loop_footer
        %s274 = sadd.s32 1, %s270
      $region95: #{generator_forward.1} parent=88 // loop_footer_branch
        %269 = sbr.rel target = $region91
      $region96: #{generator_forward.1} parent=88 // loop_exit
        _
    $region89: #{generator_forward.1} parent=1 // pred_fallthru
      _
    // Predicated region
    $region115: #{generator_forward.1} parent=1 // pred_check
      _
    $region116: #{generator_forward.1} parent=1 // pred_check_branch
      %562 = sbr.rel (0) target = $region118
    $region117: #{generator_forward.1} parent=1 // pred_region
      %563 = vsyncadd %s259, 4096
    $region118: #{generator_forward.1} parent=1 // pred_fallthru
      _
    %s564 = scalar_lea.sflag [#allocation9], 4
    // Predicated region
    $region119: #{generator_forward.1} parent=1 // pred_check
      _
    $region120: #{generator_forward.1} parent=1 // pred_check_branch
      %566 = sbr.rel target = $region122
    $region121: #{generator_forward.1} parent=1 // pred_region
      %567 = sst [smem:[#allocation34]] [#allocation33]
      %568 = sst [smem:[#allocation35]] [#allocation32]
    $region122: #{generator_forward.1} parent=1 // pred_fallthru
      _
    %570 = shalt.err (0)
    %s572 = sshll.u32 [#allocation8], 4
    %s573 = int_to_ptr.vmem [resolvable:$true] %s572
    %575 = dma.hbm_to_vmem [thread:$0]  %s15, 4096, %s573, %s564
    %576 = vst [vmem:[#allocation2] sm:$0xff] 0.0
    %577 = vst [vmem:[#allocation3] sm:$0xff] 0.0
    %578 = vst [vmem:[#allocation3 + $0x8] sm:$0xff] 0.0
    %s579 = sld [smem:[#allocation10]]
    %s580 = scalar_lea.vmem [#allocation13], %s579
    %v581 = vld [vmem:[%s580] sm:$0x1]
    %582 = vst [vmem:[#allocation2] sm:$0x1] %v581
    %s583 = sld [smem:[#allocation10 + $0x1]]
    %s584 = scalar_lea.vmem [#allocation13], %s583
    %v585 = vld [vmem:[%s584] sm:$0x1]
    %586 = vst [vmem:[#allocation2 + $0x1] sm:$0x1] %v585
    %s587 = sld [smem:[#allocation10 + $0x2]]
    %s588 = scalar_lea.vmem [#allocation13], %s587
    %v589 = vld [vmem:[%s588] sm:$0x1]
    %590 = vst [vmem:[#allocation2 + $0x2] sm:$0x1] %v589
    %v591 = vlaneseq
    %v592 = vand.u32 %v591, 127
    %v593 = vadd.s32 %v592, 128
    %v594 = vadd.s32 %v592, 256
    %v595 = vadd.s32 %v592, 384
    %v596 = vadd.s32 %v592, 512
    %v597 = vadd.s32 %v592, 640
    %v598 = vadd.s32 %v592, 768
    %v599 = vadd.s32 %v592, 896
    %vm600 = vcmp.ge.s32.totalorder %v592, 512
    %vm601 = vcmp.ge.s32.totalorder %v593, 512
    %vm602 = vcmp.ge.s32.totalorder %v594, 512
    %vm603 = vcmp.ge.s32.totalorder %v595, 512
    %vm604 = vcmp.ge.s32.totalorder %v596, 512
    %vm605 = vcmp.ge.s32.totalorder %v597, 512
    %vm606 = vcmp.ge.s32.totalorder %v598, 512
    %vm607 = vcmp.ge.s32.totalorder %v599, 512
    %vm608 = vcmp.lt.s32.totalorder %v592, 768
    %vm609 = vcmp.lt.s32.totalorder %v593, 768
    %vm610 = vcmp.lt.s32.totalorder %v594, 768
    %vm611 = vcmp.lt.s32.totalorder %v595, 768
    %vm612 = vcmp.lt.s32.totalorder %v596, 768
    %vm613 = vcmp.lt.s32.totalorder %v597, 768
    %vm614 = vcmp.lt.s32.totalorder %v598, 768
    %vm615 = vcmp.lt.s32.totalorder %v599, 768
    %vm616 = vmand %vm600, %vm608
    %vm617 = vmand %vm601, %vm609
    %vm618 = vmand %vm602, %vm610
    %vm619 = vmand %vm603, %vm611
    %vm620 = vmand %vm604, %vm612
    %vm621 = vmand %vm605, %vm613
    %vm622 = vmand %vm606, %vm614
    %vm623 = vmand %vm607, %vm615
    %v624 = vsel %vm616, 1.0, 0.5
    %v625 = vsel %vm617, 1.0, 0.5
    %v626 = vsel %vm618, 1.0, 0.5
    %v627 = vsel %vm619, 1.0, 0.5
    %v628 = vsel %vm620, 1.0, 0.5
    %v629 = vsel %vm621, 1.0, 0.5
    %v630 = vsel %vm622, 1.0, 0.5
    %v631 = vsel %vm623, 1.0, 0.5
    %v632 = vld [vmem:[#allocation2] sm:$0xff]
    %v633 = vpack.c.bf16 %v632, %v632
    %v634 = vld [vmem:[%s2] sm:$0xff]
    %v635 = vld [vmem:[%s2 + $0x8] sm:$0xff]
    %v636 = vld [vmem:[%s2 + $0x10] sm:$0xff]
    %v637 = vld [vmem:[%s2 + $0x18] sm:$0xff]
    %v638 = vld [vmem:[%s2 + $0x20] sm:$0xff]
    %v639 = vld [vmem:[%s2 + $0x28] sm:$0xff]
    %v640 = vld [vmem:[%s2 + $0x30] sm:$0xff]
    %v641 = vld [vmem:[%s2 + $0x38] sm:$0xff]
    %v642 = vld [vmem:[%s2 + $0x40] sm:$0xff]
    %v643 = vld [vmem:[%s2 + $0x48] sm:$0xff]
    %v644 = vld [vmem:[%s2 + $0x50] sm:$0xff]
    %v645 = vld [vmem:[%s2 + $0x58] sm:$0xff]
    %v646 = vld [vmem:[%s2 + $0x60] sm:$0xff]
    %v647 = vld [vmem:[%s2 + $0x68] sm:$0xff]
    %v648 = vld [vmem:[%s2 + $0x70] sm:$0xff]
    %v649 = vld [vmem:[%s2 + $0x78] sm:$0xff]
    %v650 = vld [vmem:[%s2 + $0x80] sm:$0xff]
    %v651 = vld [vmem:[%s2 + $0x88] sm:$0xff]
    %v652 = vld [vmem:[%s2 + $0x90] sm:$0xff]
    %v653 = vld [vmem:[%s2 + $0x98] sm:$0xff]
    %v654 = vld [vmem:[%s2 + $0xa0] sm:$0xff]
    %v655 = vld [vmem:[%s2 + $0xa8] sm:$0xff]
    %v656 = vld [vmem:[%s2 + $0xb0] sm:$0xff]
    %v657 = vld [vmem:[%s2 + $0xb8] sm:$0xff]
    %v658 = vld [vmem:[%s2 + $0xc0] sm:$0xff]
    %v659 = vld [vmem:[%s2 + $0xc8] sm:$0xff]
    %v660 = vld [vmem:[%s2 + $0xd0] sm:$0xff]
    %v661 = vld [vmem:[%s2 + $0xd8] sm:$0xff]
    %v662 = vld [vmem:[%s2 + $0xe0] sm:$0xff]
    %v663 = vld [vmem:[%s2 + $0xe8] sm:$0xff]
    %v664 = vld [vmem:[%s2 + $0xf0] sm:$0xff]
    %v665 = vld [vmem:[%s2 + $0xf8] sm:$0xff]
    %v666 = vld [vmem:[%s2 + $0x100] sm:$0xff]
    %v667 = vld [vmem:[%s2 + $0x108] sm:$0xff]
    %v668 = vld [vmem:[%s2 + $0x110] sm:$0xff]
    %v669 = vld [vmem:[%s2 + $0x118] sm:$0xff]
    %v670 = vld [vmem:[%s2 + $0x120] sm:$0xff]
    %v671 = vld [vmem:[%s2 + $0x128] sm:$0xff]
    %v672 = vld [vmem:[%s2 + $0x130] sm:$0xff]
    %v673 = vld [vmem:[%s2 + $0x138] sm:$0xff]
    %v674 = vld [vmem:[%s2 + $0x140] sm:$0xff]
    %v675 = vld [vmem:[%s2 + $0x148] sm:$0xff]
    %v676 = vld [vmem:[%s2 + $0x150] sm:$0xff]
    %v677 = vld [vmem:[%s2 + $0x158] sm:$0xff]
    %v678 = vld [vmem:[%s2 + $0x160] sm:$0xff]
    %v679 = vld [vmem:[%s2 + $0x168] sm:$0xff]
    %v680 = vld [vmem:[%s2 + $0x170] sm:$0xff]
    %v681 = vld [vmem:[%s2 + $0x178] sm:$0xff]
    %v682 = vld [vmem:[%s2 + $0x180] sm:$0xff]
    %v683 = vld [vmem:[%s2 + $0x188] sm:$0xff]
    %v684 = vld [vmem:[%s2 + $0x190] sm:$0xff]
    %v685 = vld [vmem:[%s2 + $0x198] sm:$0xff]
    %v686 = vld [vmem:[%s2 + $0x1a0] sm:$0xff]
    %v687 = vld [vmem:[%s2 + $0x1a8] sm:$0xff]
    %v688 = vld [vmem:[%s2 + $0x1b0] sm:$0xff]
    %v689 = vld [vmem:[%s2 + $0x1b8] sm:$0xff]
    %v690 = vld [vmem:[%s2 + $0x1c0] sm:$0xff]
    %v691 = vld [vmem:[%s2 + $0x1c8] sm:$0xff]
    %v692 = vld [vmem:[%s2 + $0x1d0] sm:$0xff]
    %v693 = vld [vmem:[%s2 + $0x1d8] sm:$0xff]
    %v694 = vld [vmem:[%s2 + $0x1e0] sm:$0xff]
    %v695 = vld [vmem:[%s2 + $0x1e8] sm:$0xff]
    %v696 = vld [vmem:[%s2 + $0x1f0] sm:$0xff]
    %v697 = vld [vmem:[%s2 + $0x1f8] sm:$0xff]
    %v698 = vld [vmem:[#allocation16] sm:$0xff]
    %v700 = vlaneseq
    %v701 = vshrl.u32 %v700, 7
    %v702 = vsub.s32 0, %v701
    %v703 = vrot.slane %v698, %v702
    %v704 = vlaneseq
    %v705 = vshrl.u32 %v704, 7
    %v706 = vsub.s32 1, %v705
    %v707 = vrot.slane %v698, %v706
    %v708 = vlaneseq
    %v709 = vshrl.u32 %v708, 7
    %v710 = vsub.s32 2, %v709
    %v711 = vrot.slane %v698, %v710
    %v712 = vlaneseq
    %v713 = vshrl.u32 %v712, 7
    %v714 = vsub.s32 3, %v713
    %v715 = vrot.slane %v698, %v714
    %v716 = vlaneseq
    %v717 = vshrl.u32 %v716, 7
    %v718 = vsub.s32 4, %v717
    %v719 = vrot.slane %v698, %v718
    %v720 = vlaneseq
    %v721 = vshrl.u32 %v720, 7
    %v722 = vsub.s32 5, %v721
    %v723 = vrot.slane %v698, %v722
    %v724 = vlaneseq
    %v725 = vshrl.u32 %v724, 7
    %v726 = vsub.s32 6, %v725
    %v727 = vrot.slane %v698, %v726
    %v728 = vlaneseq
    %v729 = vshrl.u32 %v728, 7
    %v730 = vsub.s32 7, %v729
    %v731 = vrot.slane %v698, %v730
    %v804 = vunpack.c.l.b16 %v634
    %v805 = vunpack.c.h.b16 %v634
    %v806 = vunpack.c.l.b16 %v635
    %v807 = vunpack.c.h.b16 %v635
    %v808 = vunpack.c.l.b16 %v636
    %v809 = vunpack.c.h.b16 %v636
    %v810 = vunpack.c.l.b16 %v637
    %v811 = vunpack.c.h.b16 %v637
    %v812 = vunpack.c.l.b16 %v638
    %v813 = vunpack.c.h.b16 %v638
    %v814 = vunpack.c.l.b16 %v639
    %v815 = vunpack.c.h.b16 %v639
    %v816 = vunpack.c.l.b16 %v640
    %v817 = vunpack.c.h.b16 %v640
    %v818 = vunpack.c.l.b16 %v641
    %v819 = vunpack.c.h.b16 %v641
    %v820 = vunpack.c.l.b16 %v642
    %v821 = vunpack.c.h.b16 %v642
    %v822 = vunpack.c.l.b16 %v643
    %v823 = vunpack.c.h.b16 %v643
    %v824 = vunpack.c.l.b16 %v644
    %v825 = vunpack.c.h.b16 %v644
    %v826 = vunpack.c.l.b16 %v645
    %v827 = vunpack.c.h.b16 %v645
    %v828 = vunpack.c.l.b16 %v646
    %v829 = vunpack.c.h.b16 %v646
    %v830 = vunpack.c.l.b16 %v647
    %v831 = vunpack.c.h.b16 %v647
    %v832 = vunpack.c.l.b16 %v648
    %v833 = vunpack.c.h.b16 %v648
    %v834 = vunpack.c.l.b16 %v649
    %v835 = vunpack.c.h.b16 %v649
    %v836 = vunpack.c.l.b16 %v650
    %v837 = vunpack.c.h.b16 %v650
    %v838 = vunpack.c.l.b16 %v651
    %v839 = vunpack.c.h.b16 %v651
    %v840 = vunpack.c.l.b16 %v652
    %v841 = vunpack.c.h.b16 %v652
    %v842 = vunpack.c.l.b16 %v653
    %v843 = vunpack.c.h.b16 %v653
    %v844 = vunpack.c.l.b16 %v654
    %v845 = vunpack.c.h.b16 %v654
    %v846 = vunpack.c.l.b16 %v655
    %v847 = vunpack.c.h.b16 %v655
    %v848 = vunpack.c.l.b16 %v656
    %v849 = vunpack.c.h.b16 %v656
    %v850 = vunpack.c.l.b16 %v657
    %v851 = vunpack.c.h.b16 %v657
    %v852 = vunpack.c.l.b16 %v658
    %v853 = vunpack.c.h.b16 %v658
    %v854 = vunpack.c.l.b16 %v659
    %v855 = vunpack.c.h.b16 %v659
    %v856 = vunpack.c.l.b16 %v660
    %v857 = vunpack.c.h.b16 %v660
    %v858 = vunpack.c.l.b16 %v661
    %v859 = vunpack.c.h.b16 %v661
    %v860 = vunpack.c.l.b16 %v662
    %v861 = vunpack.c.h.b16 %v662
    %v862 = vunpack.c.l.b16 %v663
    %v863 = vunpack.c.h.b16 %v663
    %v864 = vunpack.c.l.b16 %v664
    %v865 = vunpack.c.h.b16 %v664
    %v866 = vunpack.c.l.b16 %v665
    %v867 = vunpack.c.h.b16 %v665
    %v868 = vunpack.c.l.b16 %v666
    %v869 = vunpack.c.h.b16 %v666
    %v870 = vunpack.c.l.b16 %v667
    %v871 = vunpack.c.h.b16 %v667
    %v872 = vunpack.c.l.b16 %v668
    %v873 = vunpack.c.h.b16 %v668
    %v874 = vunpack.c.l.b16 %v669
    %v875 = vunpack.c.h.b16 %v669
    %v876 = vunpack.c.l.b16 %v670
    %v877 = vunpack.c.h.b16 %v670
    %v878 = vunpack.c.l.b16 %v671
    %v879 = vunpack.c.h.b16 %v671
    %v880 = vunpack.c.l.b16 %v672
    %v881 = vunpack.c.h.b16 %v672
    %v882 = vunpack.c.l.b16 %v673
    %v883 = vunpack.c.h.b16 %v673
    %v884 = vunpack.c.l.b16 %v674
    %v885 = vunpack.c.h.b16 %v674
    %v886 = vunpack.c.l.b16 %v675
    %v887 = vunpack.c.h.b16 %v675
    %v888 = vunpack.c.l.b16 %v676
    %v889 = vunpack.c.h.b16 %v676
    %v890 = vunpack.c.l.b16 %v677
    %v891 = vunpack.c.h.b16 %v677
    %v892 = vunpack.c.l.b16 %v678
    %v893 = vunpack.c.h.b16 %v678
    %v894 = vunpack.c.l.b16 %v679
    %v895 = vunpack.c.h.b16 %v679
    %v896 = vunpack.c.l.b16 %v680
    %v897 = vunpack.c.h.b16 %v680
    %v898 = vunpack.c.l.b16 %v681
    %v899 = vunpack.c.h.b16 %v681
    %v900 = vunpack.c.l.b16 %v682
    %v901 = vunpack.c.h.b16 %v682
    %v902 = vunpack.c.l.b16 %v683
    %v903 = vunpack.c.h.b16 %v683
    %v904 = vunpack.c.l.b16 %v684
    %v905 = vunpack.c.h.b16 %v684
    %v906 = vunpack.c.l.b16 %v685
    %v907 = vunpack.c.h.b16 %v685
    %v908 = vunpack.c.l.b16 %v686
    %v909 = vunpack.c.h.b16 %v686
    %v910 = vunpack.c.l.b16 %v687
    %v911 = vunpack.c.h.b16 %v687
    %v912 = vunpack.c.l.b16 %v688
    %v913 = vunpack.c.h.b16 %v688
    %v914 = vunpack.c.l.b16 %v689
    %v915 = vunpack.c.h.b16 %v689
    %v916 = vunpack.c.l.b16 %v690
    %v917 = vunpack.c.h.b16 %v690
    %v918 = vunpack.c.l.b16 %v691
    %v919 = vunpack.c.h.b16 %v691
    %v920 = vunpack.c.l.b16 %v692
    %v921 = vunpack.c.h.b16 %v692
    %v922 = vunpack.c.l.b16 %v693
    %v923 = vunpack.c.h.b16 %v693
    %v924 = vunpack.c.l.b16 %v694
    %v925 = vunpack.c.h.b16 %v694
    %v926 = vunpack.c.l.b16 %v695
    %v927 = vunpack.c.h.b16 %v695
    %v928 = vunpack.c.l.b16 %v696
    %v929 = vunpack.c.h.b16 %v696
    %v930 = vunpack.c.l.b16 %v697
    %v931 = vunpack.c.h.b16 %v697
    %v932 = vpack.c.b16 %v812, %v804
    %v933 = vpack.c.b16 %v813, %v805
    %v934 = vpack.c.b16 %v814, %v806
    %v935 = vpack.c.b16 %v815, %v807
    %v936 = vpack.c.b16 %v816, %v808
    %v937 = vpack.c.b16 %v817, %v809
    %v938 = vpack.c.b16 %v818, %v810
    %v939 = vpack.c.b16 %v819, %v811
    %v940 = vpack.c.b16 %v828, %v820
    %v941 = vpack.c.b16 %v829, %v821
    %v942 = vpack.c.b16 %v830, %v822
    %v943 = vpack.c.b16 %v831, %v823
    %v944 = vpack.c.b16 %v832, %v824
    %v945 = vpack.c.b16 %v833, %v825
    %v946 = vpack.c.b16 %v834, %v826
    %v947 = vpack.c.b16 %v835, %v827
    %v948 = vpack.c.b16 %v844, %v836
    %v949 = vpack.c.b16 %v845, %v837
    %v950 = vpack.c.b16 %v846, %v838
    %v951 = vpack.c.b16 %v847, %v839
    %v952 = vpack.c.b16 %v848, %v840
    %v953 = vpack.c.b16 %v849, %v841
    %v954 = vpack.c.b16 %v850, %v842
    %v955 = vpack.c.b16 %v851, %v843
    %v956 = vpack.c.b16 %v860, %v852
    %v957 = vpack.c.b16 %v861, %v853
    %v958 = vpack.c.b16 %v862, %v854
    %v959 = vpack.c.b16 %v863, %v855
    %v960 = vpack.c.b16 %v864, %v856
    %v961 = vpack.c.b16 %v865, %v857
    %v962 = vpack.c.b16 %v866, %v858
    %v963 = vpack.c.b16 %v867, %v859
    %v964 = vpack.c.b16 %v876, %v868
    %v965 = vpack.c.b16 %v877, %v869
    %v966 = vpack.c.b16 %v878, %v870
    %v967 = vpack.c.b16 %v879, %v871
    %v968 = vpack.c.b16 %v880, %v872
    %v969 = vpack.c.b16 %v881, %v873
    %v970 = vpack.c.b16 %v882, %v874
    %v971 = vpack.c.b16 %v883, %v875
    %v972 = vpack.c.b16 %v892, %v884
    %v973 = vpack.c.b16 %v893, %v885
    %v974 = vpack.c.b16 %v894, %v886
    %v975 = vpack.c.b16 %v895, %v887
    %v976 = vpack.c.b16 %v896, %v888
    %v977 = vpack.c.b16 %v897, %v889
    %v978 = vpack.c.b16 %v898, %v890
    %v979 = vpack.c.b16 %v899, %v891
    %v980 = vpack.c.b16 %v908, %v900
    %v981 = vpack.c.b16 %v909, %v901
    %v982 = vpack.c.b16 %v910, %v902
    %v983 = vpack.c.b16 %v911, %v903
    %v984 = vpack.c.b16 %v912, %v904
    %v985 = vpack.c.b16 %v913, %v905
    %v986 = vpack.c.b16 %v914, %v906
    %v987 = vpack.c.b16 %v915, %v907
    %v988 = vpack.c.b16 %v924, %v916
    %v989 = vpack.c.b16 %v925, %v917
    %v990 = vpack.c.b16 %v926, %v918
    %v991 = vpack.c.b16 %v927, %v919
    %v992 = vpack.c.b16 %v928, %v920
    %v993 = vpack.c.b16 %v929, %v921
    %v994 = vpack.c.b16 %v930, %v922
    %v995 = vpack.c.b16 %v931, %v923
    %1060 = vmatprep.subr.bf16.mxu0 %v933
    %1061 = vmatpush1.bf16.msra.mxu0 %v932
    %1062 = vmatprep.subr.bf16.mxu0 %v941
    %1063 = vmatpush1.bf16.msra.mxu0 %v940
    %1064 = vmatprep.subr.bf16.mxu0 %v949
    %1065 = vmatpush1.bf16.msra.mxu0 %v948
    %1066 = vmatprep.subr.bf16.mxu0 %v957
    %1067 = vmatpush1.bf16.msra.mxu0 %v956
    %1068 = vmatprep.subr.bf16.mxu0 %v965
    %1069 = vmatpush1.bf16.msra.mxu0 %v964
    %1070 = vmatprep.subr.bf16.mxu0 %v973
    %1071 = vmatpush1.bf16.msra.mxu0 %v972
    %1072 = vmatprep.subr.bf16.mxu0 %v981
    %1073 = vmatpush1.bf16.msra.mxu0 %v980
    %1074 = vmatprep.subr.bf16.mxu0 %v989
    %1075 = vmatpush1.bf16.msra.mxu0 %v988
    %1076 = vmatprep.subr.bf16.mxu0 0
    %1077 = vmatpush1.bf16.msra.mxu0 0
    %1078 = vmatprep.subr.bf16.mxu0 0
    %1079 = vmatpush1.bf16.msra.mxu0 0
    %1080 = vmatprep.subr.bf16.mxu0 0
    %1081 = vmatpush1.bf16.msra.mxu0 0
    %1082 = vmatprep.subr.bf16.mxu0 0
    %1083 = vmatpush1.bf16.msra.mxu0 0
    %1084 = vmatprep.subr.bf16.mxu0 0
    %1085 = vmatpush1.bf16.msra.mxu0 0
    %1086 = vmatprep.subr.bf16.mxu0 0
    %1087 = vmatpush1.bf16.msra.mxu0 0
    %1088 = vmatprep.subr.bf16.mxu0 0
    %1089 = vmatpush1.bf16.msra.mxu0 0
    %1090 = vmatprep.subr.bf16.mxu0 0
    %1091 = vmatpush1.bf16.msra.mxu0 0
    %1092 = vmatprep.mubr.bf16.mxu0 0
    %1093 = vmatmul.mubr.bf16.gmra.mrb[0].mxu0 %v633
    %v1094 = vpop.f32.mrb[0].mxu0
    %v1095 = vadd.f32 %v703, %v1094
    %v1096 = vpop.f32.mrb[0].mxu0
    %v1097 = vadd.f32 %v707, %v1096
    %v1098 = vpop.f32.mrb[0].mxu0
    %v1099 = vpop.f32.mrb[0].mxu0
    %1100 = vdwg.mxu0
    %1101 = vmatprep.subr.bf16.mxu0 %v935
    %1102 = vmatpush1.bf16.msra.mxu0 %v934
    %1103 = vmatprep.subr.bf16.mxu0 %v943
    %1104 = vmatpush1.bf16.msra.mxu0 %v942
    %1105 = vmatprep.subr.bf16.mxu0 %v951
    %1106 = vmatpush1.bf16.msra.mxu0 %v950
    %1107 = vmatprep.subr.bf16.mxu0 %v959
    %1108 = vmatpush1.bf16.msra.mxu0 %v958
    %1109 = vmatprep.subr.bf16.mxu0 %v967
    %1110 = vmatpush1.bf16.msra.mxu0 %v966
    %1111 = vmatprep.subr.bf16.mxu0 %v975
    %1112 = vmatpush1.bf16.msra.mxu0 %v974
    %1113 = vmatprep.subr.bf16.mxu0 %v983
    %1114 = vmatpush1.bf16.msra.mxu0 %v982
    %1115 = vmatprep.subr.bf16.mxu0 %v991
    %1116 = vmatpush1.bf16.msra.mxu0 %v990
    %1117 = vmatprep.subr.bf16.mxu0 0
    %1118 = vmatpush1.bf16.msra.mxu0 0
    %1119 = vmatprep.subr.bf16.mxu0 0
    %1120 = vmatpush1.bf16.msra.mxu0 0
    %1121 = vmatprep.subr.bf16.mxu0 0
    %1122 = vmatpush1.bf16.msra.mxu0 0
    %1123 = vmatprep.subr.bf16.mxu0 0
    %1124 = vmatpush1.bf16.msra.mxu0 0
    %1125 = vmatprep.subr.bf16.mxu0 0
    %1126 = vmatpush1.bf16.msra.mxu0 0
    %1127 = vmatprep.subr.bf16.mxu0 0
    %1128 = vmatpush1.bf16.msra.mxu0 0
    %1129 = vmatprep.subr.bf16.mxu0 0
    %1130 = vmatpush1.bf16.msra.mxu0 0
    %1131 = vmatprep.subr.bf16.mxu0 0
    %1132 = vmatpush1.bf16.msra.mxu0 0
    %1133 = vmatprep.mubr.bf16.mxu0 0
    %1134 = vmatmul.mubr.bf16.gmra.mrb[0].mxu0 %v633
    %v1135 = vpop.f32.mrb[0].mxu0
    %v1136 = vadd.f32 %v711, %v1135
    %v1137 = vpop.f32.mrb[0].mxu0
    %v1138 = vadd.f32 %v715, %v1137
    %v1139 = vpop.f32.mrb[0].mxu0
    %v1140 = vpop.f32.mrb[0].mxu0
    %1141 = vdwg.mxu0
    %1142 = vmatprep.subr.bf16.mxu0 %v937
    %1143 = vmatpush1.bf16.msra.mxu0 %v936
    %1144 = vmatprep.subr.bf16.mxu0 %v945
    %1145 = vmatpush1.bf16.msra.mxu0 %v944
    %1146 = vmatprep.subr.bf16.mxu0 %v953
    %1147 = vmatpush1.bf16.msra.mxu0 %v952
    %1148 = vmatprep.subr.bf16.mxu0 %v961
    %1149 = vmatpush1.bf16.msra.mxu0 %v960
    %1150 = vmatprep.subr.bf16.mxu0 %v969
    %1151 = vmatpush1.bf16.msra.mxu0 %v968
    %1152 = vmatprep.subr.bf16.mxu0 %v977
    %1153 = vmatpush1.bf16.msra.mxu0 %v976
    %1154 = vmatprep.subr.bf16.mxu0 %v985
    %1155 = vmatpush1.bf16.msra.mxu0 %v984
    %1156 = vmatprep.subr.bf16.mxu0 %v993
    %1157 = vmatpush1.bf16.msra.mxu0 %v992
    %1158 = vmatprep.subr.bf16.mxu0 0
    %1159 = vmatpush1.bf16.msra.mxu0 0
    %1160 = vmatprep.subr.bf16.mxu0 0
    %1161 = vmatpush1.bf16.msra.mxu0 0
    %1162 = vmatprep.subr.bf16.mxu0 0
    %1163 = vmatpush1.bf16.msra.mxu0 0
    %1164 = vmatprep.subr.bf16.mxu0 0
    %1165 = vmatpush1.bf16.msra.mxu0 0
    %1166 = vmatprep.subr.bf16.mxu0 0
    %1167 = vmatpush1.bf16.msra.mxu0 0
    %1168 = vmatprep.subr.bf16.mxu0 0
    %1169 = vmatpush1.bf16.msra.mxu0 0
    %1170 = vmatprep.subr.bf16.mxu0 0
    %1171 = vmatpush1.bf16.msra.mxu0 0
    %1172 = vmatprep.subr.bf16.mxu0 0
    %1173 = vmatpush1.bf16.msra.mxu0 0
    %1174 = vmatprep.mubr.bf16.mxu0 0
    %1175 = vmatmul.mubr.bf16.gmra.mrb[0].mxu0 %v633
    %v1176 = vpop.f32.mrb[0].mxu0
    %v1177 = vadd.f32 %v719, %v1176
    %v1178 = vpop.f32.mrb[0].mxu0
    %v1179 = vadd.f32 %v723, %v1178
    %v1180 = vpop.f32.mrb[0].mxu0
    %v1181 = vpop.f32.mrb[0].mxu0
    %1182 = vdwg.mxu0
    %1183 = vmatprep.subr.bf16.mxu0 %v939
    %1184 = vmatpush1.bf16.msra.mxu0 %v938
    %1185 = vmatprep.subr.bf16.mxu0 %v947
    %1186 = vmatpush1.bf16.msra.mxu0 %v946
    %1187 = vmatprep.subr.bf16.mxu0 %v955
    %1188 = vmatpush1.bf16.msra.mxu0 %v954
    %1189 = vmatprep.subr.bf16.mxu0 %v963
    %1190 = vmatpush1.bf16.msra.mxu0 %v962
    %1191 = vmatprep.subr.bf16.mxu0 %v971
    %1192 = vmatpush1.bf16.msra.mxu0 %v970
    %1193 = vmatprep.subr.bf16.mxu0 %v979
    %1194 = vmatpush1.bf16.msra.mxu0 %v978
    %1195 = vmatprep.subr.bf16.mxu0 %v987
    %1196 = vmatpush1.bf16.msra.mxu0 %v986
    %1197 = vmatprep.subr.bf16.mxu0 %v995
    %1198 = vmatpush1.bf16.msra.mxu0 %v994
    %1199 = vmatprep.subr.bf16.mxu0 0
    %1200 = vmatpush1.bf16.msra.mxu0 0
    %1201 = vmatprep.subr.bf16.mxu0 0
    %1202 = vmatpush1.bf16.msra.mxu0 0
    %1203 = vmatprep.subr.bf16.mxu0 0
    %1204 = vmatpush1.bf16.msra.mxu0 0
    %1205 = vmatprep.subr.bf16.mxu0 0
    %1206 = vmatpush1.bf16.msra.mxu0 0
    %1207 = vmatprep.subr.bf16.mxu0 0
    %1208 = vmatpush1.bf16.msra.mxu0 0
    %1209 = vmatprep.subr.bf16.mxu0 0
    %1210 = vmatpush1.bf16.msra.mxu0 0
    %1211 = vmatprep.subr.bf16.mxu0 0
    %1212 = vmatpush1.bf16.msra.mxu0 0
    %1213 = vmatprep.subr.bf16.mxu0 0
    %1214 = vmatpush1.bf16.msra.mxu0 0
    %1215 = vmatprep.mubr.bf16.mxu0 0
    %1216 = vmatmul.mubr.bf16.gmra.mrb[0].mxu0 %v633
    %v1217 = vpop.f32.mrb[0].mxu0
    %v1218 = vadd.f32 %v727, %v1217
    %v1219 = vpop.f32.mrb[0].mxu0
    %v1220 = vadd.f32 %v731, %v1219
    %v1221 = vpop.f32.mrb[0].mxu0
    %v1222 = vpop.f32.mrb[0].mxu0
    %1223 = vdwg.mxu0
    %v1224 = vld [vmem:[#allocation14] sm:$0xff]
    %v1225 = vld [vmem:[#allocation14 + $0x8] sm:$0xff]
    %v1226 = vld [vmem:[#allocation14 + $0x10] sm:$0xff]
    %v1227 = vld [vmem:[#allocation14 + $0x18] sm:$0xff]
    %v1228 = vld [vmem:[#allocation14 + $0x20] sm:$0xff]
    %v1229 = vld [vmem:[#allocation14 + $0x28] sm:$0xff]
    %v1230 = vld [vmem:[#allocation14 + $0x30] sm:$0xff]
    %v1231 = vld [vmem:[#allocation14 + $0x38] sm:$0xff]
    %v1232 = vld [vmem:[#allocation14 + $0x40] sm:$0xff]
    %v1233 = vld [vmem:[#allocation14 + $0x48] sm:$0xff]
    %v1234 = vld [vmem:[#allocation14 + $0x50] sm:$0xff]
    %v1235 = vld [vmem:[#allocation14 + $0x58] sm:$0xff]
    %v1236 = vld [vmem:[#allocation14 + $0x60] sm:$0xff]
    %v1237 = vld [vmem:[#allocation14 + $0x68] sm:$0xff]
    %v1238 = vld [vmem:[#allocation14 + $0x70] sm:$0xff]
    %v1239 = vld [vmem:[#allocation14 + $0x78] sm:$0xff]
    %v1240 = vld [vmem:[#allocation14 + $0x80] sm:$0xff]
    %v1241 = vld [vmem:[#allocation14 + $0x88] sm:$0xff]
    %v1242 = vld [vmem:[#allocation14 + $0x90] sm:$0xff]
    %v1243 = vld [vmem:[#allocation14 + $0x98] sm:$0xff]
    %v1244 = vld [vmem:[#allocation14 + $0xa0] sm:$0xff]
    %v1245 = vld [vmem:[#allocation14 + $0xa8] sm:$0xff]
    %v1246 = vld [vmem:[#allocation14 + $0xb0] sm:$0xff]
    %v1247 = vld [vmem:[#allocation14 + $0xb8] sm:$0xff]
    %v1248 = vld [vmem:[#allocation14 + $0xc0] sm:$0xff]
    %v1249 = vld [vmem:[#allocation14 + $0xc8] sm:$0xff]
    %v1250 = vld [vmem:[#allocation14 + $0xd0] sm:$0xff]
    %v1251 = vld [vmem:[#allocation14 + $0xd8] sm:$0xff]
    %v1252 = vld [vmem:[#allocation14 + $0xe0] sm:$0xff]
    %v1253 = vld [vmem:[#allocation14 + $0xe8] sm:$0xff]
    %v1254 = vld [vmem:[#allocation14 + $0xf0] sm:$0xff]
    %v1255 = vld [vmem:[#allocation14 + $0xf8] sm:$0xff]
    %v1256 = vld [vmem:[#allocation14 + $0x100] sm:$0xff]
    %v1257 = vld [vmem:[#allocation14 + $0x108] sm:$0xff]
    %v1258 = vld [vmem:[#allocation14 + $0x110] sm:$0xff]
    %v1259 = vld [vmem:[#allocation14 + $0x118] sm:$0xff]
    %v1260 = vld [vmem:[#allocation14 + $0x120] sm:$0xff]
    %v1261 = vld [vmem:[#allocation14 + $0x128] sm:$0xff]
    %v1262 = vld [vmem:[#allocation14 + $0x130] sm:$0xff]
    %v1263 = vld [vmem:[#allocation14 + $0x138] sm:$0xff]
    %v1264 = vld [vmem:[#allocation14 + $0x140] sm:$0xff]
    %v1265 = vld [vmem:[#allocation14 + $0x148] sm:$0xff]
    %v1266 = vld [vmem:[#allocation14 + $0x150] sm:$0xff]
    %v1267 = vld [vmem:[#allocation14 + $0x158] sm:$0xff]
    %v1268 = vld [vmem:[#allocation14 + $0x160] sm:$0xff]
    %v1269 = vld [vmem:[#allocation14 + $0x168] sm:$0xff]
    %v1270 = vld [vmem:[#allocation14 + $0x170] sm:$0xff]
    %v1271 = vld [vmem:[#allocation14 + $0x178] sm:$0xff]
    %v1272 = vld [vmem:[#allocation14 + $0x180] sm:$0xff]
    %v1273 = vld [vmem:[#allocation14 + $0x188] sm:$0xff]
    %v1274 = vld [vmem:[#allocation14 + $0x190] sm:$0xff]
    %v1275 = vld [vmem:[#allocation14 + $0x198] sm:$0xff]
    %v1276 = vld [vmem:[#allocation14 + $0x1a0] sm:$0xff]
    %v1277 = vld [vmem:[#allocation14 + $0x1a8] sm:$0xff]
    %v1278 = vld [vmem:[#allocation14 + $0x1b0] sm:$0xff]
    %v1279 = vld [vmem:[#allocation14 + $0x1b8] sm:$0xff]
    %v1280 = vld [vmem:[#allocation14 + $0x1c0] sm:$0xff]
    %v1281 = vld [vmem:[#allocation14 + $0x1c8] sm:$0xff]
    %v1282 = vld [vmem:[#allocation14 + $0x1d0] sm:$0xff]
    %v1283 = vld [vmem:[#allocation14 + $0x1d8] sm:$0xff]
    %v1284 = vld [vmem:[#allocation14 + $0x1e0] sm:$0xff]
    %v1285 = vld [vmem:[#allocation14 + $0x1e8] sm:$0xff]
    %v1286 = vld [vmem:[#allocation14 + $0x1f0] sm:$0xff]
    %v1287 = vld [vmem:[#allocation14 + $0x1f8] sm:$0xff]
    %v1288 = vld [vmem:[#allocation14 + $0x200] sm:$0xff]
    %v1289 = vld [vmem:[#allocation14 + $0x208] sm:$0xff]
    %v1290 = vld [vmem:[#allocation14 + $0x210] sm:$0xff]
    %v1291 = vld [vmem:[#allocation14 + $0x218] sm:$0xff]
    %v1292 = vld [vmem:[#allocation14 + $0x220] sm:$0xff]
    %v1293 = vld [vmem:[#allocation14 + $0x228] sm:$0xff]
    %v1294 = vld [vmem:[#allocation14 + $0x230] sm:$0xff]
    %v1295 = vld [vmem:[#allocation14 + $0x238] sm:$0xff]
    %v1296 = vld [vmem:[#allocation14 + $0x240] sm:$0xff]
    %v1297 = vld [vmem:[#allocation14 + $0x248] sm:$0xff]
    %v1298 = vld [vmem:[#allocation14 + $0x250] sm:$0xff]
    %v1299 = vld [vmem:[#allocation14 + $0x258] sm:$0xff]
    %v1300 = vld [vmem:[#allocation14 + $0x260] sm:$0xff]
    %v1301 = vld [vmem:[#allocation14 + $0x268] sm:$0xff]
    %v1302 = vld [vmem:[#allocation14 + $0x270] sm:$0xff]
    %v1303 = vld [vmem:[#allocation14 + $0x278] sm:$0xff]
    %v1304 = vld [vmem:[#allocation14 + $0x280] sm:$0xff]
    %v1305 = vld [vmem:[#allocation14 + $0x288] sm:$0xff]
    %v1306 = vld [vmem:[#allocation14 + $0x290] sm:$0xff]
    %v1307 = vld [vmem:[#allocation14 + $0x298] sm:$0xff]
    %v1308 = vld [vmem:[#allocation14 + $0x2a0] sm:$0xff]
    %v1309 = vld [vmem:[#allocation14 + $0x2a8] sm:$0xff]
    %v1310 = vld [vmem:[#allocation14 + $0x2b0] sm:$0xff]
    %v1311 = vld [vmem:[#allocation14 + $0x2b8] sm:$0xff]
    %v1312 = vld [vmem:[#allocation14 + $0x2c0] sm:$0xff]
    %v1313 = vld [vmem:[#allocation14 + $0x2c8] sm:$0xff]
    %v1314 = vld [vmem:[#allocation14 + $0x2d0] sm:$0xff]
    %v1315 = vld [vmem:[#allocation14 + $0x2d8] sm:$0xff]
    %v1316 = vld [vmem:[#allocation14 + $0x2e0] sm:$0xff]
    %v1317 = vld [vmem:[#allocation14 + $0x2e8] sm:$0xff]
    %v1318 = vld [vmem:[#allocation14 + $0x2f0] sm:$0xff]
    %v1319 = vld [vmem:[#allocation14 + $0x2f8] sm:$0xff]
    %v1320 = vld [vmem:[#allocation14 + $0x300] sm:$0xff]
    %v1321 = vld [vmem:[#allocation14 + $0x308] sm:$0xff]
    %v1322 = vld [vmem:[#allocation14 + $0x310] sm:$0xff]
    %v1323 = vld [vmem:[#allocation14 + $0x318] sm:$0xff]
    %v1324 = vld [vmem:[#allocation14 + $0x320] sm:$0xff]
    %v1325 = vld [vmem:[#allocation14 + $0x328] sm:$0xff]
    %v1326 = vld [vmem:[#allocation14 + $0x330] sm:$0xff]
    %v1327 = vld [vmem:[#allocation14 + $0x338] sm:$0xff]
    %v1328 = vld [vmem:[#allocation14 + $0x340] sm:$0xff]
    %v1329 = vld [vmem:[#allocation14 + $0x348] sm:$0xff]
    %v1330 = vld [vmem:[#allocation14 + $0x350] sm:$0xff]
    %v1331 = vld [vmem:[#allocation14 + $0x358] sm:$0xff]
    %v1332 = vld [vmem:[#allocation14 + $0x360] sm:$0xff]
    %v1333 = vld [vmem:[#allocation14 + $0x368] sm:$0xff]
    %v1334 = vld [vmem:[#allocation14 + $0x370] sm:$0xff]
    %v1335 = vld [vmem:[#allocation14 + $0x378] sm:$0xff]
    %v1336 = vld [vmem:[#allocation14 + $0x380] sm:$0xff]
    %v1337 = vld [vmem:[#allocation14 + $0x388] sm:$0xff]
    %v1338 = vld [vmem:[#allocation14 + $0x390] sm:$0xff]
    %v1339 = vld [vmem:[#allocation14 + $0x398] sm:$0xff]
    %v1340 = vld [vmem:[#allocation14 + $0x3a0] sm:$0xff]
    %v1341 = vld [vmem:[#allocation14 + $0x3a8] sm:$0xff]
    %v1342 = vld [vmem:[#allocation14 + $0x3b0] sm:$0xff]
    %v1343 = vld [vmem:[#allocation14 + $0x3b8] sm:$0xff]
    %v1344 = vld [vmem:[#allocation14 + $0x3c0] sm:$0xff]
    %v1345 = vld [vmem:[#allocation14 + $0x3c8] sm:$0xff]
    %v1346 = vld [vmem:[#allocation14 + $0x3d0] sm:$0xff]
    %v1347 = vld [vmem:[#allocation14 + $0x3d8] sm:$0xff]
    %v1348 = vld [vmem:[#allocation14 + $0x3e0] sm:$0xff]
    %v1349 = vld [vmem:[#allocation14 + $0x3e8] sm:$0xff]
    %v1350 = vld [vmem:[#allocation14 + $0x3f0] sm:$0xff]
    %v1351 = vld [vmem:[#allocation14 + $0x3f8] sm:$0xff]
    %v1480 = vunpack.c.l.b16 %v1224
    %v1481 = vunpack.c.h.b16 %v1224
    %v1482 = vunpack.c.l.b16 %v1225
    %v1483 = vunpack.c.h.b16 %v1225
    %v1484 = vunpack.c.l.b16 %v1226
    %v1485 = vunpack.c.h.b16 %v1226
    %v1486 = vunpack.c.l.b16 %v1227
    %v1487 = vunpack.c.h.b16 %v1227
    %v1488 = vunpack.c.l.b16 %v1228
    %v1489 = vunpack.c.h.b16 %v1228
    %v1490 = vunpack.c.l.b16 %v1229
    %v1491 = vunpack.c.h.b16 %v1229
    %v1492 = vunpack.c.l.b16 %v1230
    %v1493 = vunpack.c.h.b16 %v1230
    %v1494 = vunpack.c.l.b16 %v1231
    %v1495 = vunpack.c.h.b16 %v1231
    %v1496 = vunpack.c.l.b16 %v1232
    %v1497 = vunpack.c.h.b16 %v1232
    %v1498 = vunpack.c.l.b16 %v1233
    %v1499 = vunpack.c.h.b16 %v1233
    %v1500 = vunpack.c.l.b16 %v1234
    %v1501 = vunpack.c.h.b16 %v1234
    %v1502 = vunpack.c.l.b16 %v1235
    %v1503 = vunpack.c.h.b16 %v1235
    %v1504 = vunpack.c.l.b16 %v1236
    %v1505 = vunpack.c.h.b16 %v1236
    %v1506 = vunpack.c.l.b16 %v1237
    %v1507 = vunpack.c.h.b16 %v1237
    %v1508 = vunpack.c.l.b16 %v1238
    %v1509 = vunpack.c.h.b16 %v1238
    %v1510 = vunpack.c.l.b16 %v1239
    %v1511 = vunpack.c.h.b16 %v1239
    %v1512 = vunpack.c.l.b16 %v1240
    %v1513 = vunpack.c.h.b16 %v1240
    %v1514 = vunpack.c.l.b16 %v1241
    %v1515 = vunpack.c.h.b16 %v1241
    %v1516 = vunpack.c.l.b16 %v1242
    %v1517 = vunpack.c.h.b16 %v1242
    %v1518 = vunpack.c.l.b16 %v1243
    %v1519 = vunpack.c.h.b16 %v1243
    %v1520 = vunpack.c.l.b16 %v1244
    %v1521 = vunpack.c.h.b16 %v1244
    %v1522 = vunpack.c.l.b16 %v1245
    %v1523 = vunpack.c.h.b16 %v1245
    %v1524 = vunpack.c.l.b16 %v1246
    %v1525 = vunpack.c.h.b16 %v1246
    %v1526 = vunpack.c.l.b16 %v1247
    %v1527 = vunpack.c.h.b16 %v1247
    %v1528 = vunpack.c.l.b16 %v1248
    %v1529 = vunpack.c.h.b16 %v1248
    %v1530 = vunpack.c.l.b16 %v1249
    %v1531 = vunpack.c.h.b16 %v1249
    %v1532 = vunpack.c.l.b16 %v1250
    %v1533 = vunpack.c.h.b16 %v1250
    %v1534 = vunpack.c.l.b16 %v1251
    %v1535 = vunpack.c.h.b16 %v1251
    %v1536 = vunpack.c.l.b16 %v1252
    %v1537 = vunpack.c.h.b16 %v1252
    %v1538 = vunpack.c.l.b16 %v1253
    %v1539 = vunpack.c.h.b16 %v1253
    %v1540 = vunpack.c.l.b16 %v1254
    %v1541 = vunpack.c.h.b16 %v1254
    %v1542 = vunpack.c.l.b16 %v1255
    %v1543 = vunpack.c.h.b16 %v1255
    %v1544 = vunpack.c.l.b16 %v1256
    %v1545 = vunpack.c.h.b16 %v1256
    %v1546 = vunpack.c.l.b16 %v1257
    %v1547 = vunpack.c.h.b16 %v1257
    %v1548 = vunpack.c.l.b16 %v1258
    %v1549 = vunpack.c.h.b16 %v1258
    %v1550 = vunpack.c.l.b16 %v1259
    %v1551 = vunpack.c.h.b16 %v1259
    %v1552 = vunpack.c.l.b16 %v1260
    %v1553 = vunpack.c.h.b16 %v1260
    %v1554 = vunpack.c.l.b16 %v1261
    %v1555 = vunpack.c.h.b16 %v1261
    %v1556 = vunpack.c.l.b16 %v1262
    %v1557 = vunpack.c.h.b16 %v1262
    %v1558 = vunpack.c.l.b16 %v1263
    %v1559 = vunpack.c.h.b16 %v1263
    %v1560 = vunpack.c.l.b16 %v1264
    %v1561 = vunpack.c.h.b16 %v1264
    %v1562 = vunpack.c.l.b16 %v1265
    %v1563 = vunpack.c.h.b16 %v1265
    %v1564 = vunpack.c.l.b16 %v1266
    %v1565 = vunpack.c.h.b16 %v1266
    %v1566 = vunpack.c.l.b16 %v1267
    %v1567 = vunpack.c.h.b16 %v1267
    %v1568 = vunpack.c.l.b16 %v1268
    %v1569 = vunpack.c.h.b16 %v1268
    %v1570 = vunpack.c.l.b16 %v1269
    %v1571 = vunpack.c.h.b16 %v1269
    %v1572 = vunpack.c.l.b16 %v1270
    %v1573 = vunpack.c.h.b16 %v1270
    %v1574 = vunpack.c.l.b16 %v1271
    %v1575 = vunpack.c.h.b16 %v1271
    %v1576 = vunpack.c.l.b16 %v1272
    %v1577 = vunpack.c.h.b16 %v1272
    %v1578 = vunpack.c.l.b16 %v1273
    %v1579 = vunpack.c.h.b16 %v1273
    %v1580 = vunpack.c.l.b16 %v1274
    %v1581 = vunpack.c.h.b16 %v1274
    %v1582 = vunpack.c.l.b16 %v1275
    %v1583 = vunpack.c.h.b16 %v1275
    %v1584 = vunpack.c.l.b16 %v1276
    %v1585 = vunpack.c.h.b16 %v1276
    %v1586 = vunpack.c.l.b16 %v1277
    %v1587 = vunpack.c.h.b16 %v1277
    %v1588 = vunpack.c.l.b16 %v1278
    %v1589 = vunpack.c.h.b16 %v1278
    %v1590 = vunpack.c.l.b16 %v1279
    %v1591 = vunpack.c.h.b16 %v1279
    %v1592 = vunpack.c.l.b16 %v1280
    %v1593 = vunpack.c.h.b16 %v1280
    %v1594 = vunpack.c.l.b16 %v1281
    %v1595 = vunpack.c.h.b16 %v1281
    %v1596 = vunpack.c.l.b16 %v1282
    %v1597 = vunpack.c.h.b16 %v1282
    %v1598 = vunpack.c.l.b16 %v1283
    %v1599 = vunpack.c.h.b16 %v1283
    %v1600 = vunpack.c.l.b16 %v1284
    %v1601 = vunpack.c.h.b16 %v1284
    %v1602 = vunpack.c.l.b16 %v1285
    %v1603 = vunpack.c.h.b16 %v1285
    %v1604 = vunpack.c.l.b16 %v1286
    %v1605 = vunpack.c.h.b16 %v1286
    %v1606 = vunpack.c.l.b16 %v1287
    %v1607 = vunpack.c.h.b16 %v1287
    %v1608 = vunpack.c.l.b16 %v1288
    %v1609 = vunpack.c.h.b16 %v1288
    %v1610 = vunpack.c.l.b16 %v1289
    %v1611 = vunpack.c.h.b16 %v1289
    %v1612 = vunpack.c.l.b16 %v1290
    %v1613 = vunpack.c.h.b16 %v1290
    %v1614 = vunpack.c.l.b16 %v1291
    %v1615 = vunpack.c.h.b16 %v1291
    %v1616 = vunpack.c.l.b16 %v1292
    %v1617 = vunpack.c.h.b16 %v1292
    %v1618 = vunpack.c.l.b16 %v1293
    %v1619 = vunpack.c.h.b16 %v1293
    %v1620 = vunpack.c.l.b16 %v1294
    %v1621 = vunpack.c.h.b16 %v1294
    %v1622 = vunpack.c.l.b16 %v1295
    %v1623 = vunpack.c.h.b16 %v1295
    %v1624 = vunpack.c.l.b16 %v1296
    %v1625 = vunpack.c.h.b16 %v1296
    %v1626 = vunpack.c.l.b16 %v1297
    %v1627 = vunpack.c.h.b16 %v1297
    %v1628 = vunpack.c.l.b16 %v1298
    %v1629 = vunpack.c.h.b16 %v1298
    %v1630 = vunpack.c.l.b16 %v1299
    %v1631 = vunpack.c.h.b16 %v1299
    %v1632 = vunpack.c.l.b16 %v1300
    %v1633 = vunpack.c.h.b16 %v1300
    %v1634 = vunpack.c.l.b16 %v1301
    %v1635 = vunpack.c.h.b16 %v1301
    %v1636 = vunpack.c.l.b16 %v1302
    %v1637 = vunpack.c.h.b16 %v1302
    %v1638 = vunpack.c.l.b16 %v1303
    %v1639 = vunpack.c.h.b16 %v1303
    %v1640 = vunpack.c.l.b16 %v1304
    %v1641 = vunpack.c.h.b16 %v1304
    %v1642 = vunpack.c.l.b16 %v1305
    %v1643 = vunpack.c.h.b16 %v1305
    %v1644 = vunpack.c.l.b16 %v1306
    %v1645 = vunpack.c.h.b16 %v1306
    %v1646 = vunpack.c.l.b16 %v1307
    %v1647 = vunpack.c.h.b16 %v1307
    %v1648 = vunpack.c.l.b16 %v1308
    %v1649 = vunpack.c.h.b16 %v1308
    %v1650 = vunpack.c.l.b16 %v1309
    %v1651 = vunpack.c.h.b16 %v1309
    %v1652 = vunpack.c.l.b16 %v1310
    %v1653 = vunpack.c.h.b16 %v1310
    %v1654 = vunpack.c.l.b16 %v1311
    %v1655 = vunpack.c.h.b16 %v1311
    %v1656 = vunpack.c.l.b16 %v1312
    %v1657 = vunpack.c.h.b16 %v1312
    %v1658 = vunpack.c.l.b16 %v1313
    %v1659 = vunpack.c.h.b16 %v1313
    %v1660 = vunpack.c.l.b16 %v1314
    %v1661 = vunpack.c.h.b16 %v1314
    %v1662 = vunpack.c.l.b16 %v1315
    %v1663 = vunpack.c.h.b16 %v1315
    %v1664 = vunpack.c.l.b16 %v1316
    %v1665 = vunpack.c.h.b16 %v1316
    %v1666 = vunpack.c.l.b16 %v1317
    %v1667 = vunpack.c.h.b16 %v1317
    %v1668 = vunpack.c.l.b16 %v1318
    %v1669 = vunpack.c.h.b16 %v1318
    %v1670 = vunpack.c.l.b16 %v1319
    %v1671 = vunpack.c.h.b16 %v1319
    %v1672 = vunpack.c.l.b16 %v1320
    %v1673 = vunpack.c.h.b16 %v1320
    %v1674 = vunpack.c.l.b16 %v1321
    %v1675 = vunpack.c.h.b16 %v1321
    %v1676 = vunpack.c.l.b16 %v1322
    %v1677 = vunpack.c.h.b16 %v1322
    %v1678 = vunpack.c.l.b16 %v1323
    %v1679 = vunpack.c.h.b16 %v1323
    %v1680 = vunpack.c.l.b16 %v1324
    %v1681 = vunpack.c.h.b16 %v1324
    %v1682 = vunpack.c.l.b16 %v1325
    %v1683 = vunpack.c.h.b16 %v1325
    %v1684 = vunpack.c.l.b16 %v1326
    %v1685 = vunpack.c.h.b16 %v1326
    %v1686 = vunpack.c.l.b16 %v1327
    %v1687 = vunpack.c.h.b16 %v1327
    %v1688 = vunpack.c.l.b16 %v1328
    %v1689 = vunpack.c.h.b16 %v1328
    %v1690 = vunpack.c.l.b16 %v1329
    %v1691 = vunpack.c.h.b16 %v1329
    %v1692 = vunpack.c.l.b16 %v1330
    %v1693 = vunpack.c.h.b16 %v1330
    %v1694 = vunpack.c.l.b16 %v1331
    %v1695 = vunpack.c.h.b16 %v1331
    %v1696 = vunpack.c.l.b16 %v1332
    %v1697 = vunpack.c.h.b16 %v1332
    %v1698 = vunpack.c.l.b16 %v1333
    %v1699 = vunpack.c.h.b16 %v1333
    %v1700 = vunpack.c.l.b16 %v1334
    %v1701 = vunpack.c.h.b16 %v1334
    %v1702 = vunpack.c.l.b16 %v1335
    %v1703 = vunpack.c.h.b16 %v1335
    %v1704 = vunpack.c.l.b16 %v1336
    %v1705 = vunpack.c.h.b16 %v1336
    %v1706 = vunpack.c.l.b16 %v1337
    %v1707 = vunpack.c.h.b16 %v1337
    %v1708 = vunpack.c.l.b16 %v1338
    %v1709 = vunpack.c.h.b16 %v1338
    %v1710 = vunpack.c.l.b16 %v1339
    %v1711 = vunpack.c.h.b16 %v1339
    %v1712 = vunpack.c.l.b16 %v1340
    %v1713 = vunpack.c.h.b16 %v1340
    %v1714 = vunpack.c.l.b16 %v1341
    %v1715 = vunpack.c.h.b16 %v1341
    %v1716 = vunpack.c.l.b16 %v1342
    %v1717 = vunpack.c.h.b16 %v1342
    %v1718 = vunpack.c.l.b16 %v1343
    %v1719 = vunpack.c.h.b16 %v1343
    %v1720 = vunpack.c.l.b16 %v1344
    %v1721 = vunpack.c.h.b16 %v1344
    %v1722 = vunpack.c.l.b16 %v1345
    %v1723 = vunpack.c.h.b16 %v1345
    %v1724 = vunpack.c.l.b16 %v1346
    %v1725 = vunpack.c.h.b16 %v1346
    %v1726 = vunpack.c.l.b16 %v1347
    %v1727 = vunpack.c.h.b16 %v1347
    %v1728 = vunpack.c.l.b16 %v1348
    %v1729 = vunpack.c.h.b16 %v1348
    %v1730 = vunpack.c.l.b16 %v1349
    %v1731 = vunpack.c.h.b16 %v1349
    %v1732 = vunpack.c.l.b16 %v1350
    %v1733 = vunpack.c.h.b16 %v1350
    %v1734 = vunpack.c.l.b16 %v1351
    %v1735 = vunpack.c.h.b16 %v1351
    %v1736 = vpack.c.b16 %v1488, %v1480
    %v1737 = vpack.c.b16 %v1489, %v1481
    %v1738 = vpack.c.b16 %v1490, %v1482
    %v1739 = vpack.c.b16 %v1491, %v1483
    %v1740 = vpack.c.b16 %v1492, %v1484
    %v1741 = vpack.c.b16 %v1493, %v1485
    %v1742 = vpack.c.b16 %v1494, %v1486
    %v1743 = vpack.c.b16 %v1495, %v1487
    %v1744 = vpack.c.b16 %v1504, %v1496
    %v1745 = vpack.c.b16 %v1505, %v1497
    %v1746 = vpack.c.b16 %v1506, %v1498
    %v1747 = vpack.c.b16 %v1507, %v1499
    %v1748 = vpack.c.b16 %v1508, %v1500
    %v1749 = vpack.c.b16 %v1509, %v1501
    %v1750 = vpack.c.b16 %v1510, %v1502
    %v1751 = vpack.c.b16 %v1511, %v1503
    %v1752 = vpack.c.b16 %v1520, %v1512
    %v1753 = vpack.c.b16 %v1521, %v1513
    %v1754 = vpack.c.b16 %v1522, %v1514
    %v1755 = vpack.c.b16 %v1523, %v1515
    %v1756 = vpack.c.b16 %v1524, %v1516
    %v1757 = vpack.c.b16 %v1525, %v1517
    %v1758 = vpack.c.b16 %v1526, %v1518
    %v1759 = vpack.c.b16 %v1527, %v1519
    %v1760 = vpack.c.b16 %v1536, %v1528
    %v1761 = vpack.c.b16 %v1537, %v1529
    %v1762 = vpack.c.b16 %v1538, %v1530
    %v1763 = vpack.c.b16 %v1539, %v1531
    %v1764 = vpack.c.b16 %v1540, %v1532
    %v1765 = vpack.c.b16 %v1541, %v1533
    %v1766 = vpack.c.b16 %v1542, %v1534
    %v1767 = vpack.c.b16 %v1543, %v1535
    %v1768 = vpack.c.b16 %v1552, %v1544
    %v1769 = vpack.c.b16 %v1553, %v1545
    %v1770 = vpack.c.b16 %v1554, %v1546
    %v1771 = vpack.c.b16 %v1555, %v1547
    %v1772 = vpack.c.b16 %v1556, %v1548
    %v1773 = vpack.c.b16 %v1557, %v1549
    %v1774 = vpack.c.b16 %v1558, %v1550
    %v1775 = vpack.c.b16 %v1559, %v1551
    %v1776 = vpack.c.b16 %v1568, %v1560
    %v1777 = vpack.c.b16 %v1569, %v1561
    %v1778 = vpack.c.b16 %v1570, %v1562
    %v1779 = vpack.c.b16 %v1571, %v1563
    %v1780 = vpack.c.b16 %v1572, %v1564
    %v1781 = vpack.c.b16 %v1573, %v1565
    %v1782 = vpack.c.b16 %v1574, %v1566
    %v1783 = vpack.c.b16 %v1575, %v1567
    %v1784 = vpack.c.b16 %v1584, %v1576
    %v1785 = vpack.c.b16 %v1585, %v1577
    %v1786 = vpack.c.b16 %v1586, %v1578
    %v1787 = vpack.c.b16 %v1587, %v1579
    %v1788 = vpack.c.b16 %v1588, %v1580
    %v1789 = vpack.c.b16 %v1589, %v1581
    %v1790 = vpack.c.b16 %v1590, %v1582
    %v1791 = vpack.c.b16 %v1591, %v1583
    %v1792 = vpack.c.b16 %v1600, %v1592
    %v1793 = vpack.c.b16 %v1601, %v1593
    %v1794 = vpack.c.b16 %v1602, %v1594
    %v1795 = vpack.c.b16 %v1603, %v1595
    %v1796 = vpack.c.b16 %v1604, %v1596
    %v1797 = vpack.c.b16 %v1605, %v1597
    %v1798 = vpack.c.b16 %v1606, %v1598
    %v1799 = vpack.c.b16 %v1607, %v1599
    %v1800 = vpack.c.b16 %v1616, %v1608
    %v1801 = vpack.c.b16 %v1617, %v1609
    %v1802 = vpack.c.b16 %v1618, %v1610
    %v1803 = vpack.c.b16 %v1619, %v1611
    %v1804 = vpack.c.b16 %v1620, %v1612
    %v1805 = vpack.c.b16 %v1621, %v1613
    %v1806 = vpack.c.b16 %v1622, %v1614
    %v1807 = vpack.c.b16 %v1623, %v1615
    %v1808 = vpack.c.b16 %v1632, %v1624
    %v1809 = vpack.c.b16 %v1633, %v1625
    %v1810 = vpack.c.b16 %v1634, %v1626
    %v1811 = vpack.c.b16 %v1635, %v1627
    %v1812 = vpack.c.b16 %v1636, %v1628
    %v1813 = vpack.c.b16 %v1637, %v1629
    %v1814 = vpack.c.b16 %v1638, %v1630
    %v1815 = vpack.c.b16 %v1639, %v1631
    %v1816 = vpack.c.b16 %v1648, %v1640
    %v1817 = vpack.c.b16 %v1649, %v1641
    %v1818 = vpack.c.b16 %v1650, %v1642
    %v1819 = vpack.c.b16 %v1651, %v1643
    %v1820 = vpack.c.b16 %v1652, %v1644
    %v1821 = vpack.c.b16 %v1653, %v1645
    %v1822 = vpack.c.b16 %v1654, %v1646
    %v1823 = vpack.c.b16 %v1655, %v1647
    %v1824 = vpack.c.b16 %v1664, %v1656
    %v1825 = vpack.c.b16 %v1665, %v1657
    %v1826 = vpack.c.b16 %v1666, %v1658
    %v1827 = vpack.c.b16 %v1667, %v1659
    %v1828 = vpack.c.b16 %v1668, %v1660
    %v1829 = vpack.c.b16 %v1669, %v1661
    %v1830 = vpack.c.b16 %v1670, %v1662
    %v1831 = vpack.c.b16 %v1671, %v1663
    %v1832 = vpack.c.b16 %v1680, %v1672
    %v1833 = vpack.c.b16 %v1681, %v1673
    %v1834 = vpack.c.b16 %v1682, %v1674
    %v1835 = vpack.c.b16 %v1683, %v1675
    %v1836 = vpack.c.b16 %v1684, %v1676
    %v1837 = vpack.c.b16 %v1685, %v1677
    %v1838 = vpack.c.b16 %v1686, %v1678
    %v1839 = vpack.c.b16 %v1687, %v1679
    %v1840 = vpack.c.b16 %v1696, %v1688
    %v1841 = vpack.c.b16 %v1697, %v1689
    %v1842 = vpack.c.b16 %v1698, %v1690
    %v1843 = vpack.c.b16 %v1699, %v1691
    %v1844 = vpack.c.b16 %v1700, %v1692
    %v1845 = vpack.c.b16 %v1701, %v1693
    %v1846 = vpack.c.b16 %v1702, %v1694
    %v1847 = vpack.c.b16 %v1703, %v1695
    %v1848 = vpack.c.b16 %v1712, %v1704
    %v1849 = vpack.c.b16 %v1713, %v1705
    %v1850 = vpack.c.b16 %v1714, %v1706
    %v1851 = vpack.c.b16 %v1715, %v1707
    %v1852 = vpack.c.b16 %v1716, %v1708
    %v1853 = vpack.c.b16 %v1717, %v1709
    %v1854 = vpack.c.b16 %v1718, %v1710
    %v1855 = vpack.c.b16 %v1719, %v1711
    %v1856 = vpack.c.b16 %v1728, %v1720
    %v1857 = vpack.c.b16 %v1729, %v1721
    %v1858 = vpack.c.b16 %v1730, %v1722
    %v1859 = vpack.c.b16 %v1731, %v1723
    %v1860 = vpack.c.b16 %v1732, %v1724
    %v1861 = vpack.c.b16 %v1733, %v1725
    %v1862 = vpack.c.b16 %v1734, %v1726
    %v1863 = vpack.c.b16 %v1735, %v1727
    %1992 = vmatprep.subr.bf16.mxu0 %v1737
    %1993 = vmatpush1.bf16.msra.mxu0 %v1736
    %1994 = vmatprep.subr.bf16.mxu0 %v1745
    %1995 = vmatpush1.bf16.msra.mxu0 %v1744
    %1996 = vmatprep.subr.bf16.mxu0 %v1753
    %1997 = vmatpush1.bf16.msra.mxu0 %v1752
    %1998 = vmatprep.subr.bf16.mxu0 %v1761
    %1999 = vmatpush1.bf16.msra.mxu0 %v1760
    %2000 = vmatprep.subr.bf16.mxu0 %v1769
    %2001 = vmatpush1.bf16.msra.mxu0 %v1768
    %2002 = vmatprep.subr.bf16.mxu0 %v1777
    %2003 = vmatpush1.bf16.msra.mxu0 %v1776
    %2004 = vmatprep.subr.bf16.mxu0 %v1785
    %2005 = vmatpush1.bf16.msra.mxu0 %v1784
    %2006 = vmatprep.subr.bf16.mxu0 %v1793
    %2007 = vmatpush1.bf16.msra.mxu0 %v1792
    %2008 = vmatprep.subr.bf16.mxu0 %v1801
    %2009 = vmatpush1.bf16.msra.mxu0 %v1800
    %2010 = vmatprep.subr.bf16.mxu0 %v1809
    %2011 = vmatpush1.bf16.msra.mxu0 %v1808
    %2012 = vmatprep.subr.bf16.mxu0 %v1817
    %2013 = vmatpush1.bf16.msra.mxu0 %v1816
    %2014 = vmatprep.subr.bf16.mxu0 %v1825
    %2015 = vmatpush1.bf16.msra.mxu0 %v1824
    %2016 = vmatprep.subr.bf16.mxu0 %v1833
    %2017 = vmatpush1.bf16.msra.mxu0 %v1832
    %2018 = vmatprep.subr.bf16.mxu0 %v1841
    %2019 = vmatpush1.bf16.msra.mxu0 %v1840
    %2020 = vmatprep.subr.bf16.mxu0 %v1849
    %2021 = vmatpush1.bf16.msra.mxu0 %v1848
    %2022 = vmatprep.subr.bf16.mxu0 %v1857
    %2023 = vmatpush1.bf16.msra.mxu0 %v1856
    %2024 = vmatprep.mubr.bf16.mxu0 0
    %2025 = vmatmul.mubr.bf16.gmra.mrb[0].mxu0 0
    %v2026 = vpop.f32.mrb[0].mxu0
    %v2027 = vadd.f32 0.0, %v2026
    %v2028 = vpop.f32.mrb[0].mxu0
    %v2029 = vadd.f32 0.0, %v2028
    %v2030 = vpop.f32.mrb[0].mxu0
    %v2031 = vpop.f32.mrb[0].mxu0
    %2032 = vdwg.mxu0
    %2033 = vmatprep.subr.bf16.mxu0 %v1739
    %2034 = vmatpush1.bf16.msra.mxu0 %v1738
    %2035 = vmatprep.subr.bf16.mxu0 %v1747
    %2036 = vmatpush1.bf16.msra.mxu0 %v1746
    %2037 = vmatprep.subr.bf16.mxu0 %v1755
    %2038 = vmatpush1.bf16.msra.mxu0 %v1754
    %2039 = vmatprep.subr.bf16.mxu0 %v1763
    %2040 = vmatpush1.bf16.msra.mxu0 %v1762
    %2041 = vmatprep.subr.bf16.mxu0 %v1771
    %2042 = vmatpush1.bf16.msra.mxu0 %v1770
    %2043 = vmatprep.subr.bf16.mxu0 %v1779
    %2044 = vmatpush1.bf16.msra.mxu0 %v1778
    %2045 = vmatprep.subr.bf16.mxu0 %v1787
    %2046 = vmatpush1.bf16.msra.mxu0 %v1786
    %2047 = vmatprep.subr.bf16.mxu0 %v1795
    %2048 = vmatpush1.bf16.msra.mxu0 %v1794
    %2049 = vmatprep.subr.bf16.mxu0 %v1803
    %2050 = vmatpush1.bf16.msra.mxu0 %v1802
    %2051 = vmatprep.subr.bf16.mxu0 %v1811
    %2052 = vmatpush1.bf16.msra.mxu0 %v1810
    %2053 = vmatprep.subr.bf16.mxu0 %v1819
    %2054 = vmatpush1.bf16.msra.mxu0 %v1818
    %2055 = vmatprep.subr.bf16.mxu0 %v1827
    %2056 = vmatpush1.bf16.msra.mxu0 %v1826
    %2057 = vmatprep.subr.bf16.mxu0 %v1835
    %2058 = vmatpush1.bf16.msra.mxu0 %v1834
    %2059 = vmatprep.subr.bf16.mxu0 %v1843
    %2060 = vmatpush1.bf16.msra.mxu0 %v1842
    %2061 = vmatprep.subr.bf16.mxu0 %v1851
    %2062 = vmatpush1.bf16.msra.mxu0 %v1850
    %2063 = vmatprep.subr.bf16.mxu0 %v1859
    %2064 = vmatpush1.bf16.msra.mxu0 %v1858
    %2065 = vmatprep.mubr.bf16.mxu0 0
    %2066 = vmatmul.mubr.bf16.gmra.mrb[0].mxu0 0
    %v2067 = vpop.f32.mrb[0].mxu0
    %v2068 = vadd.f32 0.0, %v2067
    %v2069 = vpop.f32.mrb[0].mxu0
    %v2070 = vadd.f32 0.0, %v2069
    %v2071 = vpop.f32.mrb[0].mxu0
    %v2072 = vpop.f32.mrb[0].mxu0
    %2073 = vdwg.mxu0
    %2074 = vmatprep.subr.bf16.mxu0 %v1741
    %2075 = vmatpush1.bf16.msra.mxu0 %v1740
    %2076 = vmatprep.subr.bf16.mxu0 %v1749
    %2077 = vmatpush1.bf16.msra.mxu0 %v1748
    %2078 = vmatprep.subr.bf16.mxu0 %v1757
    %2079 = vmatpush1.bf16.msra.mxu0 %v1756
    %2080 = vmatprep.subr.bf16.mxu0 %v1765
    %2081 = vmatpush1.bf16.msra.mxu0 %v1764
    %2082 = vmatprep.subr.bf16.mxu0 %v1773
    %2083 = vmatpush1.bf16.msra.mxu0 %v1772
    %2084 = vmatprep.subr.bf16.mxu0 %v1781
    %2085 = vmatpush1.bf16.msra.mxu0 %v1780
    %2086 = vmatprep.subr.bf16.mxu0 %v1789
    %2087 = vmatpush1.bf16.msra.mxu0 %v1788
    %2088 = vmatprep.subr.bf16.mxu0 %v1797
    %2089 = vmatpush1.bf16.msra.mxu0 %v1796
    %2090 = vmatprep.subr.bf16.mxu0 %v1805
    %2091 = vmatpush1.bf16.msra.mxu0 %v1804
    %2092 = vmatprep.subr.bf16.mxu0 %v1813
    %2093 = vmatpush1.bf16.msra.mxu0 %v1812
    %2094 = vmatprep.subr.bf16.mxu0 %v1821
    %2095 = vmatpush1.bf16.msra.mxu0 %v1820
    %2096 = vmatprep.subr.bf16.mxu0 %v1829
    %2097 = vmatpush1.bf16.msra.mxu0 %v1828
    %2098 = vmatprep.subr.bf16.mxu0 %v1837
    %2099 = vmatpush1.bf16.msra.mxu0 %v1836
    %2100 = vmatprep.subr.bf16.mxu0 %v1845
    %2101 = vmatpush1.bf16.msra.mxu0 %v1844
    %2102 = vmatprep.subr.bf16.mxu0 %v1853
    %2103 = vmatpush1.bf16.msra.mxu0 %v1852
    %2104 = vmatprep.subr.bf16.mxu0 %v1861
    %2105 = vmatpush1.bf16.msra.mxu0 %v1860
    %2106 = vmatprep.mubr.bf16.mxu0 0
    %2107 = vmatmul.mubr.bf16.gmra.mrb[0].mxu0 0
    %v2108 = vpop.f32.mrb[0].mxu0
    %v2109 = vadd.f32 0.0, %v2108
    %v2110 = vpop.f32.mrb[0].mxu0
    %v2111 = vadd.f32 0.0, %v2110
    %v2112 = vpop.f32.mrb[0].mxu0
    %v2113 = vpop.f32.mrb[0].mxu0
    %2114 = vdwg.mxu0
    %2115 = vmatprep.subr.bf16.mxu0 %v1743
    %2116 = vmatpush1.bf16.msra.mxu0 %v1742
    %2117 = vmatprep.subr.bf16.mxu0 %v1751
    %2118 = vmatpush1.bf16.msra.mxu0 %v1750
    %2119 = vmatprep.subr.bf16.mxu0 %v1759
    %2120 = vmatpush1.bf16.msra.mxu0 %v1758
    %2121 = vmatprep.subr.bf16.mxu0 %v1767
    %2122 = vmatpush1.bf16.msra.mxu0 %v1766
    %2123 = vmatprep.subr.bf16.mxu0 %v1775
    %2124 = vmatpush1.bf16.msra.mxu0 %v1774
    %2125 = vmatprep.subr.bf16.mxu0 %v1783
    %2126 = vmatpush1.bf16.msra.mxu0 %v1782
    %2127 = vmatprep.subr.bf16.mxu0 %v1791
    %2128 = vmatpush1.bf16.msra.mxu0 %v1790
    %2129 = vmatprep.subr.bf16.mxu0 %v1799
    %2130 = vmatpush1.bf16.msra.mxu0 %v1798
    %2131 = vmatprep.subr.bf16.mxu0 %v1807
    %2132 = vmatpush1.bf16.msra.mxu0 %v1806
    %2133 = vmatprep.subr.bf16.mxu0 %v1815
    %2134 = vmatpush1.bf16.msra.mxu0 %v1814
    %2135 = vmatprep.subr.bf16.mxu0 %v1823
    %2136 = vmatpush1.bf16.msra.mxu0 %v1822
    %2137 = vmatprep.subr.bf16.mxu0 %v1831
    %2138 = vmatpush1.bf16.msra.mxu0 %v1830
    %2139 = vmatprep.subr.bf16.mxu0 %v1839
    %2140 = vmatpush1.bf16.msra.mxu0 %v1838
    %2141 = vmatprep.subr.bf16.mxu0 %v1847
    %2142 = vmatpush1.bf16.msra.mxu0 %v1846
    %2143 = vmatprep.subr.bf16.mxu0 %v1855
    %2144 = vmatpush1.bf16.msra.mxu0 %v1854
    %2145 = vmatprep.subr.bf16.mxu0 %v1863
    %2146 = vmatpush1.bf16.msra.mxu0 %v1862
    %2147 = vmatprep.mubr.bf16.mxu0 0
    %2148 = vmatmul.mubr.bf16.gmra.mrb[0].mxu0 0
    %v2149 = vpop.f32.mrb[0].mxu0
    %v2150 = vadd.f32 0.0, %v2149
    %v2151 = vpop.f32.mrb[0].mxu0
    %v2152 = vadd.f32 0.0, %v2151
    %v2153 = vpop.f32.mrb[0].mxu0
    %v2154 = vpop.f32.mrb[0].mxu0
    %2155 = vdwg.mxu0
    %v2156 = vadd.f32 %v1095, %v2027
    %v2157 = vadd.f32 %v1097, %v2029
    %v2158 = vadd.f32 %v1136, %v2068
    %v2159 = vadd.f32 %v1138, %v2070
    %v2160 = vadd.f32 %v1177, %v2109
    %v2161 = vadd.f32 %v1179, %v2111
    %v2162 = vadd.f32 %v1218, %v2150
    %v2163 = vadd.f32 %v1220, %v2152
    %v2164 = vmul.f32 %v2156, %v624
    %v2165 = vmul.f32 %v2157, %v625
    %v2166 = vmul.f32 %v2158, %v626
    %v2167 = vmul.f32 %v2159, %v627
    %v2168 = vmul.f32 %v2160, %v628
    %v2169 = vmul.f32 %v2161, %v629
    %v2170 = vmul.f32 %v2162, %v630
    %v2171 = vmul.f32 %v2163, %v631
    %v2172 = vtanh.pop %v2164
    %v2173 = vtanh.pop %v2165
    %v2174 = vtanh.pop %v2166
    %v2175 = vtanh.pop %v2167
    %v2176 = vtanh.pop %v2168
    %v2177 = vtanh.pop %v2169
    %v2178 = vtanh.pop %v2170
    %v2179 = vtanh.pop %v2171
    %v2180 = vmul.f32 %v2172, 0.5
    %v2181 = vmul.f32 %v2173, 0.5
    %v2182 = vmul.f32 %v2174, 0.5
    %v2183 = vmul.f32 %v2175, 0.5
    %v2184 = vmul.f32 %v2176, 0.5
    %v2185 = vmul.f32 %v2177, 0.5
    %v2186 = vmul.f32 %v2178, 0.5
    %v2187 = vmul.f32 %v2179, 0.5
    %v2188 = vadd.f32 %v2180, 0.5
    %v2189 = vadd.f32 %v2181, 0.5
    %v2190 = vadd.f32 %v2182, 0.5
    %v2191 = vadd.f32 %v2183, 0.5
    %v2192 = vadd.f32 %v2184, 0.5
    %v2193 = vadd.f32 %v2185, 0.5
    %v2194 = vadd.f32 %v2186, 0.5
    %v2195 = vadd.f32 %v2187, 0.5
    %v2196 = vsel %vm616, %v2172, %v2188
    %v2197 = vsel %vm617, %v2173, %v2189
    %v2198 = vsel %vm618, %v2174, %v2190
    %v2199 = vsel %vm619, %v2175, %v2191
    %v2200 = vsel %vm620, %v2176, %v2192
    %v2201 = vsel %vm621, %v2177, %v2193
    %v2202 = vsel %vm622, %v2178, %v2194
    %v2203 = vsel %vm623, %v2179, %v2195
    %v2204 = vmul.f32 %v2198, 0.0
    %v2205 = vmul.f32 %v2199, 0.0
    %v2206 = vmul.f32 %v2196, %v2200
    %v2207 = vmul.f32 %v2197, %v2201
    %v2208 = vadd.f32 %v2204, %v2206
    %v2209 = vadd.f32 %v2205, %v2207
    %v2210 = vtanh.pop %v2208
    %v2211 = vtanh.pop %v2209
    %v2212 = vmul.f32 %v2202, %v2210
    %v2213 = vmul.f32 %v2203, %v2211
    %v2216 = vcombine.low %v2212, %v2213
    %v2218 = vunpack.c.l.s4 1966171168
    %v2219 = vunpack.c.0.s8 %v2218
    %v2220 = vlaneseq
    %v2221 = vshrl.u32 %v2220, 7
    %v2222 = vsub.s32 %v2219, %v2221
    %v2223 = vrot.slane %v2216, %v2222
    %v2225 = vunpack.c.l.s4 1966171168
    %v2226 = vunpack.c.0.s8 %v2225
    %v2227 = vlaneseq
    %v2228 = vshrl.u32 %v2227, 7
    %v2229 = vsub.s32 %v2226, %v2228
    %v2230 = vrot.slane %v2223, %v2229
    %v2232 = vlaneseq
    %vm2233 = vcmp.ge.s32.totalorder %v2232, 0
    %vm2234 = vcmp.lt.s32.totalorder %v2232, 256
    %vm2235 = vmand %vm2233, %vm2234
    %2236 = vst.msk [vmem:[#allocation3] ss:$8 sm:$0x3] %vm2235, %v2230
    %2237 = vst.msk [vmem:[#allocation3] ss:$8 sm:$0x0] %vm2235, %v2230
    %v2238 = vpack.c.bf16 %v2212, %v2212
    %v2239 = vpack.c.bf16 %v2213, %v2213
    %2240 = vmatprep.subr.bf16.mxu0 %v1737
    %2241 = vmatpush1.bf16.msra.mxu0 %v1736
    %2242 = vmatprep.subr.bf16.mxu0 %v1745
    %2243 = vmatpush1.bf16.msra.mxu0 %v1744
    %2244 = vmatprep.subr.bf16.mxu0 %v1753
    %2245 = vmatpush1.bf16.msra.mxu0 %v1752
    %2246 = vmatprep.subr.bf16.mxu0 %v1761
    %2247 = vmatpush1.bf16.msra.mxu0 %v1760
    %2248 = vmatprep.subr.bf16.mxu0 %v1769
    %2249 = vmatpush1.bf16.msra.mxu0 %v1768
    %2250 = vmatprep.subr.bf16.mxu0 %v1777
    %2251 = vmatpush1.bf16.msra.mxu0 %v1776
    %2252 = vmatprep.subr.bf16.mxu0 %v1785
    %2253 = vmatpush1.bf16.msra.mxu0 %v1784
    %2254 = vmatprep.subr.bf16.mxu0 %v1793
    %2255 = vmatpush1.bf16.msra.mxu0 %v1792
    %2256 = vmatprep.subr.bf16.mxu0 %v1801
    %2257 = vmatpush1.bf16.msra.mxu0 %v1800
    %2258 = vmatprep.subr.bf16.mxu0 %v1809
    %2259 = vmatpush1.bf16.msra.mxu0 %v1808
    %2260 = vmatprep.subr.bf16.mxu0 %v1817
    %2261 = vmatpush1.bf16.msra.mxu0 %v1816
    %2262 = vmatprep.subr.bf16.mxu0 %v1825
    %2263 = vmatpush1.bf16.msra.mxu0 %v1824
    %2264 = vmatprep.subr.bf16.mxu0 %v1833
    %2265 = vmatpush1.bf16.msra.mxu0 %v1832
    %2266 = vmatprep.subr.bf16.mxu0 %v1841
    %2267 = vmatpush1.bf16.msra.mxu0 %v1840
    %2268 = vmatprep.subr.bf16.mxu0 %v1849
    %2269 = vmatpush1.bf16.msra.mxu0 %v1848
    %2270 = vmatprep.subr.bf16.mxu0 %v1857
    %2271 = vmatpush1.bf16.msra.mxu0 %v1856
    %2272 = vmatprep.mubr.bf16.mxu0 %v2239
    %2273 = vmatmul.mubr.bf16.gmra.mrb[0].mxu0 %v2238
    %v2274 = vpop.f32.mrb[0].mxu0
    %v2275 = vadd.f32 0.0, %v2274
    %v2276 = vpop.f32.mrb[0].mxu0
    %v2277 = vadd.f32 0.0, %v2276
    %v2278 = vpop.f32.mrb[0].mxu0
    %v2279 = vpop.f32.mrb[0].mxu0
    %2280 = vdwg.mxu0
    %2281 = vmatprep.subr.bf16.mxu0 %v1739
    %2282 = vmatpush1.bf16.msra.mxu0 %v1738
    %2283 = vmatprep.subr.bf16.mxu0 %v1747
    %2284 = vmatpush1.bf16.msra.mxu0 %v1746
    %2285 = vmatprep.subr.bf16.mxu0 %v1755
    %2286 = vmatpush1.bf16.msra.mxu0 %v1754
    %2287 = vmatprep.subr.bf16.mxu0 %v1763
    %2288 = vmatpush1.bf16.msra.mxu0 %v1762
    %2289 = vmatprep.subr.bf16.mxu0 %v1771
    %2290 = vmatpush1.bf16.msra.mxu0 %v1770
    %2291 = vmatprep.subr.bf16.mxu0 %v1779
    %2292 = vmatpush1.bf16.msra.mxu0 %v1778
    %2293 = vmatprep.subr.bf16.mxu0 %v1787
    %2294 = vmatpush1.bf16.msra.mxu0 %v1786
    %2295 = vmatprep.subr.bf16.mxu0 %v1795
    %2296 = vmatpush1.bf16.msra.mxu0 %v1794
    %2297 = vmatprep.subr.bf16.mxu0 %v1803
    %2298 = vmatpush1.bf16.msra.mxu0 %v1802
    %2299 = vmatprep.subr.bf16.mxu0 %v1811
    %2300 = vmatpush1.bf16.msra.mxu0 %v1810
    %2301 = vmatprep.subr.bf16.mxu0 %v1819
    %2302 = vmatpush1.bf16.msra.mxu0 %v1818
    %2303 = vmatprep.subr.bf16.mxu0 %v1827
    %2304 = vmatpush1.bf16.msra.mxu0 %v1826
    %2305 = vmatprep.subr.bf16.mxu0 %v1835
    %2306 = vmatpush1.bf16.msra.mxu0 %v1834
    %2307 = vmatprep.subr.bf16.mxu0 %v1843
    %2308 = vmatpush1.bf16.msra.mxu0 %v1842
    %2309 = vmatprep.subr.bf16.mxu0 %v1851
    %2310 = vmatpush1.bf16.msra.mxu0 %v1850
    %2311 = vmatprep.subr.bf16.mxu0 %v1859
    %2312 = vmatpush1.bf16.msra.mxu0 %v1858
    %2313 = vmatprep.mubr.bf16.mxu0 %v2239
    %2314 = vmatmul.mubr.bf16.gmra.mrb[0].mxu0 %v2238
    %v2315 = vpop.f32.mrb[0].mxu0
    %v2316 = vadd.f32 0.0, %v2315
    %v2317 = vpop.f32.mrb[0].mxu0
    %v2318 = vadd.f32 0.0, %v2317
    %v2319 = vpop.f32.mrb[0].mxu0
    %v2320 = vpop.f32.mrb[0].mxu0
    %2321 = vdwg.mxu0
    %2322 = vmatprep.subr.bf16.mxu0 %v1741
    %2323 = vmatpush1.bf16.msra.mxu0 %v1740
    %2324 = vmatprep.subr.bf16.mxu0 %v1749
    %2325 = vmatpush1.bf16.msra.mxu0 %v1748
    %2326 = vmatprep.subr.bf16.mxu0 %v1757
    %2327 = vmatpush1.bf16.msra.mxu0 %v1756
    %2328 = vmatprep.subr.bf16.mxu0 %v1765
    %2329 = vmatpush1.bf16.msra.mxu0 %v1764
    %2330 = vmatprep.subr.bf16.mxu0 %v1773
    %2331 = vmatpush1.bf16.msra.mxu0 %v1772
    %2332 = vmatprep.subr.bf16.mxu0 %v1781
    %2333 = vmatpush1.bf16.msra.mxu0 %v1780
    %2334 = vmatprep.subr.bf16.mxu0 %v1789
    %2335 = vmatpush1.bf16.msra.mxu0 %v1788
    %2336 = vmatprep.subr.bf16.mxu0 %v1797
    %2337 = vmatpush1.bf16.msra.mxu0 %v1796
    %2338 = vmatprep.subr.bf16.mxu0 %v1805
    %2339 = vmatpush1.bf16.msra.mxu0 %v1804
    %2340 = vmatprep.subr.bf16.mxu0 %v1813
    %2341 = vmatpush1.bf16.msra.mxu0 %v1812
    %2342 = vmatprep.subr.bf16.mxu0 %v1821
    %2343 = vmatpush1.bf16.msra.mxu0 %v1820
    %2344 = vmatprep.subr.bf16.mxu0 %v1829
    %2345 = vmatpush1.bf16.msra.mxu0 %v1828
    %2346 = vmatprep.subr.bf16.mxu0 %v1837
    %2347 = vmatpush1.bf16.msra.mxu0 %v1836
    %2348 = vmatprep.subr.bf16.mxu0 %v1845
    %2349 = vmatpush1.bf16.msra.mxu0 %v1844
    %2350 = vmatprep.subr.bf16.mxu0 %v1853
    %2351 = vmatpush1.bf16.msra.mxu0 %v1852
    %2352 = vmatprep.subr.bf16.mxu0 %v1861
    %2353 = vmatpush1.bf16.msra.mxu0 %v1860
    %2354 = vmatprep.mubr.bf16.mxu0 %v2239
    %2355 = vmatmul.mubr.bf16.gmra.mrb[0].mxu0 %v2238
    %v2356 = vpop.f32.mrb[0].mxu0
    %v2357 = vadd.f32 0.0, %v2356
    %v2358 = vpop.f32.mrb[0].mxu0
    %v2359 = vadd.f32 0.0, %v2358
    %v2360 = vpop.f32.mrb[0].mxu0
    %v2361 = vpop.f32.mrb[0].mxu0
    %2362 = vdwg.mxu0
    %2363 = vmatprep.subr.bf16.mxu0 %v1743
    %2364 = vmatpush1.bf16.msra.mxu0 %v1742
    %2365 = vmatprep.subr.bf16.mxu0 %v1751
    %2366 = vmatpush1.bf16.msra.mxu0 %v1750
    %2367 = vmatprep.subr.bf16.mxu0 %v1759
    %2368 = vmatpush1.bf16.msra.mxu0 %v1758
    %2369 = vmatprep.subr.bf16.mxu0 %v1767
    %2370 = vmatpush1.bf16.msra.mxu0 %v1766
    %2371 = vmatprep.subr.bf16.mxu0 %v1775
    %2372 = vmatpush1.bf16.msra.mxu0 %v1774
    %2373 = vmatprep.subr.bf16.mxu0 %v1783
    %2374 = vmatpush1.bf16.msra.mxu0 %v1782
    %2375 = vmatprep.subr.bf16.mxu0 %v1791
    %2376 = vmatpush1.bf16.msra.mxu0 %v1790
    %2377 = vmatprep.subr.bf16.mxu0 %v1799
    %2378 = vmatpush1.bf16.msra.mxu0 %v1798
    %2379 = vmatprep.subr.bf16.mxu0 %v1807
    %2380 = vmatpush1.bf16.msra.mxu0 %v1806
    %2381 = vmatprep.subr.bf16.mxu0 %v1815
    %2382 = vmatpush1.bf16.msra.mxu0 %v1814
    %2383 = vmatprep.subr.bf16.mxu0 %v1823
    %2384 = vmatpush1.bf16.msra.mxu0 %v1822
    %2385 = vmatprep.subr.bf16.mxu0 %v1831
    %2386 = vmatpush1.bf16.msra.mxu0 %v1830
    %2387 = vmatprep.subr.bf16.mxu0 %v1839
    %2388 = vmatpush1.bf16.msra.mxu0 %v1838
    %2389 = vmatprep.subr.bf16.mxu0 %v1847
    %2390 = vmatpush1.bf16.msra.mxu0 %v1846
    %2391 = vmatprep.subr.bf16.mxu0 %v1855
    %2392 = vmatpush1.bf16.msra.mxu0 %v1854
    %2393 = vmatprep.subr.bf16.mxu0 %v1863
    %2394 = vmatpush1.bf16.msra.mxu0 %v1862
    %2395 = vmatprep.mubr.bf16.mxu0 %v2239
    %2396 = vmatmul.mubr.bf16.gmra.mrb[0].mxu0 %v2238
    %v2397 = vpop.f32.mrb[0].mxu0
    %v2398 = vadd.f32 0.0, %v2397
    %v2399 = vpop.f32.mrb[0].mxu0
    %v2400 = vadd.f32 0.0, %v2399
    %v2401 = vpop.f32.mrb[0].mxu0
    %v2402 = vpop.f32.mrb[0].mxu0
    %2403 = vdwg.mxu0
    %v2412 = vrot.slane %v2275, 7
    %v2413 = vrot.slane %v2277, 7
    %v2414 = vrot.slane %v2316, 7
    %v2415 = vrot.slane %v2318, 7
    %v2416 = vrot.slane %v2357, 7
    %v2417 = vrot.slane %v2359, 7
    %v2418 = vrot.slane %v2398, 7
    %v2419 = vrot.slane %v2400, 7
    %v2428 = vadd.f32 %v1095, %v2412
    %v2429 = vadd.f32 %v1097, %v2413
    %v2430 = vadd.f32 %v1136, %v2414
    %v2431 = vadd.f32 %v1138, %v2415
    %v2432 = vadd.f32 %v1177, %v2416
    %v2433 = vadd.f32 %v1179, %v2417
    %v2434 = vadd.f32 %v1218, %v2418
    %v2435 = vadd.f32 %v1220, %v2419
    %v2436 = vmul.f32 %v2428, %v624
    %v2437 = vmul.f32 %v2429, %v625
    %v2438 = vmul.f32 %v2430, %v626
    %v2439 = vmul.f32 %v2431, %v627
    %v2440 = vmul.f32 %v2432, %v628
    %v2441 = vmul.f32 %v2433, %v629
    %v2442 = vmul.f32 %v2434, %v630
    %v2443 = vmul.f32 %v2435, %v631
    %v2444 = vtanh.pop %v2436
    %v2445 = vtanh.pop %v2437
    %v2446 = vtanh.pop %v2438
    %v2447 = vtanh.pop %v2439
    %v2448 = vtanh.pop %v2440
    %v2449 = vtanh.pop %v2441
    %v2450 = vtanh.pop %v2442
    %v2451 = vtanh.pop %v2443
    %v2452 = vmul.f32 %v2444, 0.5
    %v2453 = vmul.f32 %v2445, 0.5
    %v2454 = vmul.f32 %v2446, 0.5
    %v2455 = vmul.f32 %v2447, 0.5
    %v2456 = vmul.f32 %v2448, 0.5
    %v2457 = vmul.f32 %v2449, 0.5
    %v2458 = vmul.f32 %v2450, 0.5
    %v2459 = vmul.f32 %v2451, 0.5
    %v2460 = vadd.f32 %v2452, 0.5
    %v2461 = vadd.f32 %v2453, 0.5
    %v2462 = vadd.f32 %v2454, 0.5
    %v2463 = vadd.f32 %v2455, 0.5
    %v2464 = vadd.f32 %v2456, 0.5
    %v2465 = vadd.f32 %v2457, 0.5
    %v2466 = vadd.f32 %v2458, 0.5
    %v2467 = vadd.f32 %v2459, 0.5
    %v2468 = vsel %vm616, %v2444, %v2460
    %v2469 = vsel %vm617, %v2445, %v2461
    %v2470 = vsel %vm618, %v2446, %v2462
    %v2471 = vsel %vm619, %v2447, %v2463
    %v2472 = vsel %vm620, %v2448, %v2464
    %v2473 = vsel %vm621, %v2449, %v2465
    %v2474 = vsel %vm622, %v2450, %v2466
    %v2475 = vsel %vm623, %v2451, %v2467
    %v2478 = vrot.slane %v2208, 7
    %v2479 = vrot.slane %v2209, 7
    %v2482 = vmul.f32 %v2470, %v2478
    %v2483 = vmul.f32 %v2471, %v2479
    %v2484 = vmul.f32 %v2468, %v2472
    %v2485 = vmul.f32 %v2469, %v2473
    %v2486 = vadd.f32 %v2482, %v2484
    %v2487 = vadd.f32 %v2483, %v2485
    %v2488 = vtanh.pop %v2486
    %v2489 = vtanh.pop %v2487
    %v2490 = vmul.f32 %v2474, %v2488
    %v2491 = vmul.f32 %v2475, %v2489
    %v2494 = vcombine.low %v2490, %v2491
    %v2496 = vunpack.c.l.s4 1966171168
    %v2497 = vunpack.c.0.s8 %v2496
    %v2498 = vlaneseq
    %v2499 = vshrl.u32 %v2498, 7
    %v2500 = vsub.s32 %v2497, %v2499
    %v2501 = vrot.slane %v2494, %v2500
    %v2502 = vcombine.high %v2501, %v2501
    %v2504 = vunpack.c.l.s4 1966171168
    %v2505 = vunpack.c.0.s8 %v2504
    %v2506 = vlaneseq
    %v2507 = vshrl.u32 %v2506, 7
    %v2508 = vsub.s32 %v2505, %v2507
    %v2509 = vrot.slane %v2502, %v2508
    %s2511 = scalar_lea.vmem [#allocation3], 1
    %2512 = vst.msk [vmem:[%s2511] ss:$8 sm:$0x3] %vm2235, %v2509
    %2513 = vst.msk [vmem:[%s2511] ss:$8 sm:$0x0] %vm2235, %v2509
    %v2514 = vpack.c.bf16 %v2490, %v2490
    %v2515 = vpack.c.bf16 %v2491, %v2491
    %v2517 = vshrl.u32 %v2514, 16
    %v2520 = vshrl.u32 %v2515, 16
    %2524 = vmatprep.subr.bf16.mxu0 %v1737
    %2525 = vmatpush1.bf16.msra.mxu0 %v1736
    %2526 = vmatprep.subr.bf16.mxu0 %v1745
    %2527 = vmatpush1.bf16.msra.mxu0 %v1744
    %2528 = vmatprep.subr.bf16.mxu0 %v1753
    %2529 = vmatpush1.bf16.msra.mxu0 %v1752
    %2530 = vmatprep.subr.bf16.mxu0 %v1761
    %2531 = vmatpush1.bf16.msra.mxu0 %v1760
    %2532 = vmatprep.subr.bf16.mxu0 %v1769
    %2533 = vmatpush1.bf16.msra.mxu0 %v1768
    %2534 = vmatprep.subr.bf16.mxu0 %v1777
    %2535 = vmatpush1.bf16.msra.mxu0 %v1776
    %2536 = vmatprep.subr.bf16.mxu0 %v1785
    %2537 = vmatpush1.bf16.msra.mxu0 %v1784
    %2538 = vmatprep.subr.bf16.mxu0 %v1793
    %2539 = vmatpush1.bf16.msra.mxu0 %v1792
    %2540 = vmatprep.subr.bf16.mxu0 %v1801
    %2541 = vmatpush1.bf16.msra.mxu0 %v1800
    %2542 = vmatprep.subr.bf16.mxu0 %v1809
    %2543 = vmatpush1.bf16.msra.mxu0 %v1808
    %2544 = vmatprep.subr.bf16.mxu0 %v1817
    %2545 = vmatpush1.bf16.msra.mxu0 %v1816
    %2546 = vmatprep.subr.bf16.mxu0 %v1825
    %2547 = vmatpush1.bf16.msra.mxu0 %v1824
    %2548 = vmatprep.subr.bf16.mxu0 %v1833
    %2549 = vmatpush1.bf16.msra.mxu0 %v1832
    %2550 = vmatprep.subr.bf16.mxu0 %v1841
    %2551 = vmatpush1.bf16.msra.mxu0 %v1840
    %2552 = vmatprep.subr.bf16.mxu0 %v1849
    %2553 = vmatpush1.bf16.msra.mxu0 %v1848
    %2554 = vmatprep.subr.bf16.mxu0 %v1857
    %2555 = vmatpush1.bf16.msra.mxu0 %v1856
    %2556 = vmatprep.mubr.bf16.mxu0 %v2520
    %2557 = vmatmul.mubr.bf16.gmra.mrb[0].mxu0 %v2517
    %v2558 = vpop.f32.mrb[0].mxu0
    %v2559 = vadd.f32 0.0, %v2558
    %v2560 = vpop.f32.mrb[0].mxu0
    %v2561 = vadd.f32 0.0, %v2560
    %v2562 = vpop.f32.mrb[0].mxu0
    %v2563 = vpop.f32.mrb[0].mxu0
    %2564 = vdwg.mxu0
    %2565 = vmatprep.subr.bf16.mxu0 %v1739
    %2566 = vmatpush1.bf16.msra.mxu0 %v1738
    %2567 = vmatprep.subr.bf16.mxu0 %v1747
    %2568 = vmatpush1.bf16.msra.mxu0 %v1746
    %2569 = vmatprep.subr.bf16.mxu0 %v1755
    %2570 = vmatpush1.bf16.msra.mxu0 %v1754
    %2571 = vmatprep.subr.bf16.mxu0 %v1763
    %2572 = vmatpush1.bf16.msra.mxu0 %v1762
    %2573 = vmatprep.subr.bf16.mxu0 %v1771
    %2574 = vmatpush1.bf16.msra.mxu0 %v1770
    %2575 = vmatprep.subr.bf16.mxu0 %v1779
    %2576 = vmatpush1.bf16.msra.mxu0 %v1778
    %2577 = vmatprep.subr.bf16.mxu0 %v1787
    %2578 = vmatpush1.bf16.msra.mxu0 %v1786
    %2579 = vmatprep.subr.bf16.mxu0 %v1795
    %2580 = vmatpush1.bf16.msra.mxu0 %v1794
    %2581 = vmatprep.subr.bf16.mxu0 %v1803
    %2582 = vmatpush1.bf16.msra.mxu0 %v1802
    %2583 = vmatprep.subr.bf16.mxu0 %v1811
    %2584 = vmatpush1.bf16.msra.mxu0 %v1810
    %2585 = vmatprep.subr.bf16.mxu0 %v1819
    %2586 = vmatpush1.bf16.msra.mxu0 %v1818
    %2587 = vmatprep.subr.bf16.mxu0 %v1827
    %2588 = vmatpush1.bf16.msra.mxu0 %v1826
    %2589 = vmatprep.subr.bf16.mxu0 %v1835
    %2590 = vmatpush1.bf16.msra.mxu0 %v1834
    %2591 = vmatprep.subr.bf16.mxu0 %v1843
    %2592 = vmatpush1.bf16.msra.mxu0 %v1842
    %2593 = vmatprep.subr.bf16.mxu0 %v1851
    %2594 = vmatpush1.bf16.msra.mxu0 %v1850
    %2595 = vmatprep.subr.bf16.mxu0 %v1859
    %2596 = vmatpush1.bf16.msra.mxu0 %v1858
    %2597 = vmatprep.mubr.bf16.mxu0 %v2520
    %2598 = vmatmul.mubr.bf16.gmra.mrb[0].mxu0 %v2517
    %v2599 = vpop.f32.mrb[0].mxu0
    %v2600 = vadd.f32 0.0, %v2599
    %v2601 = vpop.f32.mrb[0].mxu0
    %v2602 = vadd.f32 0.0, %v2601
    %v2603 = vpop.f32.mrb[0].mxu0
    %v2604 = vpop.f32.mrb[0].mxu0
    %2605 = vdwg.mxu0
    %2606 = vmatprep.subr.bf16.mxu0 %v1741
    %2607 = vmatpush1.bf16.msra.mxu0 %v1740
    %2608 = vmatprep.subr.bf16.mxu0 %v1749
    %2609 = vmatpush1.bf16.msra.mxu0 %v1748
    %2610 = vmatprep.subr.bf16.mxu0 %v1757
    %2611 = vmatpush1.bf16.msra.mxu0 %v1756
    %2612 = vmatprep.subr.bf16.mxu0 %v1765
    %2613 = vmatpush1.bf16.msra.mxu0 %v1764
    %2614 = vmatprep.subr.bf16.mxu0 %v1773
    %2615 = vmatpush1.bf16.msra.mxu0 %v1772
    %2616 = vmatprep.subr.bf16.mxu0 %v1781
    %2617 = vmatpush1.bf16.msra.mxu0 %v1780
    %2618 = vmatprep.subr.bf16.mxu0 %v1789
    %2619 = vmatpush1.bf16.msra.mxu0 %v1788
    %2620 = vmatprep.subr.bf16.mxu0 %v1797
    %2621 = vmatpush1.bf16.msra.mxu0 %v1796
    %2622 = vmatprep.subr.bf16.mxu0 %v1805
    %2623 = vmatpush1.bf16.msra.mxu0 %v1804
    %2624 = vmatprep.subr.bf16.mxu0 %v1813
    %2625 = vmatpush1.bf16.msra.mxu0 %v1812
    %2626 = vmatprep.subr.bf16.mxu0 %v1821
    %2627 = vmatpush1.bf16.msra.mxu0 %v1820
    %2628 = vmatprep.subr.bf16.mxu0 %v1829
    %2629 = vmatpush1.bf16.msra.mxu0 %v1828
    %2630 = vmatprep.subr.bf16.mxu0 %v1837
    %2631 = vmatpush1.bf16.msra.mxu0 %v1836
    %2632 = vmatprep.subr.bf16.mxu0 %v1845
    %2633 = vmatpush1.bf16.msra.mxu0 %v1844
    %2634 = vmatprep.subr.bf16.mxu0 %v1853
    %2635 = vmatpush1.bf16.msra.mxu0 %v1852
    %2636 = vmatprep.subr.bf16.mxu0 %v1861
    %2637 = vmatpush1.bf16.msra.mxu0 %v1860
    %2638 = vmatprep.mubr.bf16.mxu0 %v2520
    %2639 = vmatmul.mubr.bf16.gmra.mrb[0].mxu0 %v2517
    %v2640 = vpop.f32.mrb[0].mxu0
    %v2641 = vadd.f32 0.0, %v2640
    %v2642 = vpop.f32.mrb[0].mxu0
    %v2643 = vadd.f32 0.0, %v2642
    %v2644 = vpop.f32.mrb[0].mxu0
    %v2645 = vpop.f32.mrb[0].mxu0
    %2646 = vdwg.mxu0
    %2647 = vmatprep.subr.bf16.mxu0 %v1743
    %2648 = vmatpush1.bf16.msra.mxu0 %v1742
    %2649 = vmatprep.subr.bf16.mxu0 %v1751
    %2650 = vmatpush1.bf16.msra.mxu0 %v1750
    %2651 = vmatprep.subr.bf16.mxu0 %v1759
    %2652 = vmatpush1.bf16.msra.mxu0 %v1758
    %2653 = vmatprep.subr.bf16.mxu0 %v1767
    %2654 = vmatpush1.bf16.msra.mxu0 %v1766
    %2655 = vmatprep.subr.bf16.mxu0 %v1775
    %2656 = vmatpush1.bf16.msra.mxu0 %v1774
    %2657 = vmatprep.subr.bf16.mxu0 %v1783
    %2658 = vmatpush1.bf16.msra.mxu0 %v1782
    %2659 = vmatprep.subr.bf16.mxu0 %v1791
    %2660 = vmatpush1.bf16.msra.mxu0 %v1790
    %2661 = vmatprep.subr.bf16.mxu0 %v1799
    %2662 = vmatpush1.bf16.msra.mxu0 %v1798
    %2663 = vmatprep.subr.bf16.mxu0 %v1807
    %2664 = vmatpush1.bf16.msra.mxu0 %v1806
    %2665 = vmatprep.subr.bf16.mxu0 %v1815
    %2666 = vmatpush1.bf16.msra.mxu0 %v1814
    %2667 = vmatprep.subr.bf16.mxu0 %v1823
    %2668 = vmatpush1.bf16.msra.mxu0 %v1822
    %2669 = vmatprep.subr.bf16.mxu0 %v1831
    %2670 = vmatpush1.bf16.msra.mxu0 %v1830
    %2671 = vmatprep.subr.bf16.mxu0 %v1839
    %2672 = vmatpush1.bf16.msra.mxu0 %v1838
    %2673 = vmatprep.subr.bf16.mxu0 %v1847
    %2674 = vmatpush1.bf16.msra.mxu0 %v1846
    %2675 = vmatprep.subr.bf16.mxu0 %v1855
    %2676 = vmatpush1.bf16.msra.mxu0 %v1854
    %2677 = vmatprep.subr.bf16.mxu0 %v1863
    %2678 = vmatpush1.bf16.msra.mxu0 %v1862
    %2679 = vmatprep.mubr.bf16.mxu0 %v2520
    %2680 = vmatmul.mubr.bf16.gmra.mrb[0].mxu0 %v2517
    %v2681 = vpop.f32.mrb[0].mxu0
    %v2682 = vadd.f32 0.0, %v2681
    %v2683 = vpop.f32.mrb[0].mxu0
    %v2684 = vadd.f32 0.0, %v2683
    %v2685 = vpop.f32.mrb[0].mxu0
    %v2686 = vpop.f32.mrb[0].mxu0
    %2687 = vdwg.mxu0
    %v2696 = vrot.slane %v2559, 6
    %v2697 = vrot.slane %v2561, 6
    %v2698 = vrot.slane %v2600, 6
    %v2699 = vrot.slane %v2602, 6
    %v2700 = vrot.slane %v2641, 6
    %v2701 = vrot.slane %v2643, 6
    %v2702 = vrot.slane %v2682, 6
    %v2703 = vrot.slane %v2684, 6
    %v2712 = vadd.f32 %v1095, %v2696
    %v2713 = vadd.f32 %v1097, %v2697
    %v2714 = vadd.f32 %v1136, %v2698
    %v2715 = vadd.f32 %v1138, %v2699
    %v2716 = vadd.f32 %v1177, %v2700
    %v2717 = vadd.f32 %v1179, %v2701
    %v2718 = vadd.f32 %v1218, %v2702
    %v2719 = vadd.f32 %v1220, %v2703
    %v2720 = vmul.f32 %v2712, %v624
    %v2721 = vmul.f32 %v2713, %v625
    %v2722 = vmul.f32 %v2714, %v626
    %v2723 = vmul.f32 %v2715, %v627
    %v2724 = vmul.f32 %v2716, %v628
    %v2725 = vmul.f32 %v2717, %v629
    %v2726 = vmul.f32 %v2718, %v630
    %v2727 = vmul.f32 %v2719, %v631
    %v2728 = vtanh.pop %v2720
    %v2729 = vtanh.pop %v2721
    %v2730 = vtanh.pop %v2722
    %v2731 = vtanh.pop %v2723
    %v2732 = vtanh.pop %v2724
    %v2733 = vtanh.pop %v2725
    %v2734 = vtanh.pop %v2726
    %v2735 = vtanh.pop %v2727
    %v2736 = vmul.f32 %v2728, 0.5
    %v2737 = vmul.f32 %v2729, 0.5
    %v2738 = vmul.f32 %v2730, 0.5
    %v2739 = vmul.f32 %v2731, 0.5
    %v2740 = vmul.f32 %v2732, 0.5
    %v2741 = vmul.f32 %v2733, 0.5
    %v2742 = vmul.f32 %v2734, 0.5
    %v2743 = vmul.f32 %v2735, 0.5
    %v2744 = vadd.f32 %v2736, 0.5
    %v2745 = vadd.f32 %v2737, 0.5
    %v2746 = vadd.f32 %v2738, 0.5
    %v2747 = vadd.f32 %v2739, 0.5
    %v2748 = vadd.f32 %v2740, 0.5
    %v2749 = vadd.f32 %v2741, 0.5
    %v2750 = vadd.f32 %v2742, 0.5
    %v2751 = vadd.f32 %v2743, 0.5
    %v2752 = vsel %vm616, %v2728, %v2744
    %v2753 = vsel %vm617, %v2729, %v2745
    %v2754 = vsel %vm618, %v2730, %v2746
    %v2755 = vsel %vm619, %v2731, %v2747
    %v2756 = vsel %vm620, %v2732, %v2748
    %v2757 = vsel %vm621, %v2733, %v2749
    %v2758 = vsel %vm622, %v2734, %v2750
    %v2759 = vsel %vm623, %v2735, %v2751
    %v2762 = vrot.slane %v2486, 7
    %v2763 = vrot.slane %v2487, 7
    %v2766 = vmul.f32 %v2754, %v2762
    %v2767 = vmul.f32 %v2755, %v2763
    %v2768 = vmul.f32 %v2752, %v2756
    %v2769 = vmul.f32 %v2753, %v2757
    %v2770 = vadd.f32 %v2766, %v2768
    %v2771 = vadd.f32 %v2767, %v2769
    %v2772 = vtanh.pop %v2770
    %v2773 = vtanh.pop %v2771
    %v2774 = vmul.f32 %v2758, %v2772
    %v2775 = vmul.f32 %v2759, %v2773
    %v2778 = vcombine.low %v2774, %v2775
    %v2780 = vunpack.c.l.s4 1966171168
    %v2781 = vunpack.c.0.s8 %v2780
    %v2782 = vlaneseq
    %v2783 = vshrl.u32 %v2782, 7
    %v2784 = vsub.s32 %v2781, %v2783
    %v2785 = vrot.slane %v2778, %v2784
    %v2787 = vunpack.c.l.s4 1966171168
    %v2788 = vunpack.c.0.s8 %v2787
    %v2789 = vlaneseq
    %v2790 = vshrl.u32 %v2789, 7
    %v2791 = vsub.s32 %v2788, %v2790
    %v2792 = vrot.slane %v2785, %v2791
    %v2793 = vcombine.high %v2792, %v2792
    %s2795 = scalar_lea.vmem [#allocation3], 2
    %2796 = vst.msk [vmem:[%s2795] ss:$8 sm:$0x3] %vm2235, %v2793
    %2797 = vst.msk [vmem:[%s2795] ss:$8 sm:$0x0] %vm2235, %v2793
    %s2798 = smul.u32 4, 32
    %s2799 = smul.u32 %s2798, 8
    %s2800 = sshll.u32 %s2799, 4
    %2801 = dma.done [#allocation9], %s2800
    %s2802 = sshll.u32 %s2799, 4
    %2803 = dma.done %s189, %s2802
    %v2804 = vld [vmem:[#allocation3] sm:$0xff]
    %v2805 = vld [vmem:[#allocation3 + $0x8] sm:$0xff]
    %v2806 = vpack.c.bf16 %v2804, %v2804
    %v2807 = vpack.c.bf16 %v2805, %v2805
    %v2808 = vld [vmem:[#allocation4] sm:$0xff]
    %v2809 = vld [vmem:[#allocation4 + $0x8] sm:$0xff]
    %v2810 = vld [vmem:[#allocation4 + $0x10] sm:$0xff]
    %v2811 = vld [vmem:[#allocation4 + $0x18] sm:$0xff]
    %v2812 = vld [vmem:[#allocation4 + $0x20] sm:$0xff]
    %v2813 = vld [vmem:[#allocation4 + $0x28] sm:$0xff]
    %v2814 = vld [vmem:[#allocation4 + $0x30] sm:$0xff]
    %v2815 = vld [vmem:[#allocation4 + $0x38] sm:$0xff]
    %v2816 = vld [vmem:[#allocation4 + $0x40] sm:$0xff]
    %v2817 = vld [vmem:[#allocation4 + $0x48] sm:$0xff]
    %v2818 = vld [vmem:[#allocation4 + $0x50] sm:$0xff]
    %v2819 = vld [vmem:[#allocation4 + $0x58] sm:$0xff]
    %v2820 = vld [vmem:[#allocation4 + $0x60] sm:$0xff]
    %v2821 = vld [vmem:[#allocation4 + $0x68] sm:$0xff]
    %v2822 = vld [vmem:[#allocation4 + $0x70] sm:$0xff]
    %v2823 = vld [vmem:[#allocation4 + $0x78] sm:$0xff]
    %v2824 = vld [vmem:[#allocation4 + $0x80] sm:$0xff]
    %v2825 = vld [vmem:[#allocation4 + $0x88] sm:$0xff]
    %v2826 = vld [vmem:[#allocation4 + $0x90] sm:$0xff]
    %v2827 = vld [vmem:[#allocation4 + $0x98] sm:$0xff]
    %v2828 = vld [vmem:[#allocation4 + $0xa0] sm:$0xff]
    %v2829 = vld [vmem:[#allocation4 + $0xa8] sm:$0xff]
    %v2830 = vld [vmem:[#allocation4 + $0xb0] sm:$0xff]
    %v2831 = vld [vmem:[#allocation4 + $0xb8] sm:$0xff]
    %v2832 = vld [vmem:[#allocation4 + $0xc0] sm:$0xff]
    %v2833 = vld [vmem:[#allocation4 + $0xc8] sm:$0xff]
    %v2834 = vld [vmem:[#allocation4 + $0xd0] sm:$0xff]
    %v2835 = vld [vmem:[#allocation4 + $0xd8] sm:$0xff]
    %v2836 = vld [vmem:[#allocation4 + $0xe0] sm:$0xff]
    %v2837 = vld [vmem:[#allocation4 + $0xe8] sm:$0xff]
    %v2838 = vld [vmem:[#allocation4 + $0xf0] sm:$0xff]
    %v2839 = vld [vmem:[#allocation4 + $0xf8] sm:$0xff]
    %v2840 = vld [vmem:[#allocation4 + $0x100] sm:$0xff]
    %v2841 = vld [vmem:[#allocation4 + $0x108] sm:$0xff]
    %v2842 = vld [vmem:[#allocation4 + $0x110] sm:$0xff]
    %v2843 = vld [vmem:[#allocation4 + $0x118] sm:$0xff]
    %v2844 = vld [vmem:[#allocation4 + $0x120] sm:$0xff]
    %v2845 = vld [vmem:[#allocation4 + $0x128] sm:$0xff]
    %v2846 = vld [vmem:[#allocation4 + $0x130] sm:$0xff]
    %v2847 = vld [vmem:[#allocation4 + $0x138] sm:$0xff]
    %v2848 = vld [vmem:[#allocation4 + $0x140] sm:$0xff]
    %v2849 = vld [vmem:[#allocation4 + $0x148] sm:$0xff]
    %v2850 = vld [vmem:[#allocation4 + $0x150] sm:$0xff]
    %v2851 = vld [vmem:[#allocation4 + $0x158] sm:$0xff]
    %v2852 = vld [vmem:[#allocation4 + $0x160] sm:$0xff]
    %v2853 = vld [vmem:[#allocation4 + $0x168] sm:$0xff]
    %v2854 = vld [vmem:[#allocation4 + $0x170] sm:$0xff]
    %v2855 = vld [vmem:[#allocation4 + $0x178] sm:$0xff]
    %v2856 = vld [vmem:[#allocation4 + $0x180] sm:$0xff]
    %v2857 = vld [vmem:[#allocation4 + $0x188] sm:$0xff]
    %v2858 = vld [vmem:[#allocation4 + $0x190] sm:$0xff]
    %v2859 = vld [vmem:[#allocation4 + $0x198] sm:$0xff]
    %v2860 = vld [vmem:[#allocation4 + $0x1a0] sm:$0xff]
    %v2861 = vld [vmem:[#allocation4 + $0x1a8] sm:$0xff]
    %v2862 = vld [vmem:[#allocation4 + $0x1b0] sm:$0xff]
    %v2863 = vld [vmem:[#allocation4 + $0x1b8] sm:$0xff]
    %v2864 = vld [vmem:[#allocation4 + $0x1c0] sm:$0xff]
    %v2865 = vld [vmem:[#allocation4 + $0x1c8] sm:$0xff]
    %v2866 = vld [vmem:[#allocation4 + $0x1d0] sm:$0xff]
    %v2867 = vld [vmem:[#allocation4 + $0x1d8] sm:$0xff]
    %v2868 = vld [vmem:[#allocation4 + $0x1e0] sm:$0xff]
    %v2869 = vld [vmem:[#allocation4 + $0x1e8] sm:$0xff]
    %v2870 = vld [vmem:[#allocation4 + $0x1f0] sm:$0xff]
    %v2871 = vld [vmem:[#allocation4 + $0x1f8] sm:$0xff]
    %v2872 = vld [vmem:[#allocation4 + $0x200] sm:$0xff]
    %v2873 = vld [vmem:[#allocation4 + $0x208] sm:$0xff]
    %v2874 = vld [vmem:[#allocation4 + $0x210] sm:$0xff]
    %v2875 = vld [vmem:[#allocation4 + $0x218] sm:$0xff]
    %v2876 = vld [vmem:[#allocation4 + $0x220] sm:$0xff]
    %v2877 = vld [vmem:[#allocation4 + $0x228] sm:$0xff]
    %v2878 = vld [vmem:[#allocation4 + $0x230] sm:$0xff]
    %v2879 = vld [vmem:[#allocation4 + $0x238] sm:$0xff]
    %v2880 = vld [vmem:[#allocation4 + $0x240] sm:$0xff]
    %v2881 = vld [vmem:[#allocation4 + $0x248] sm:$0xff]
    %v2882 = vld [vmem:[#allocation4 + $0x250] sm:$0xff]
    %v2883 = vld [vmem:[#allocation4 + $0x258] sm:$0xff]
    %v2884 = vld [vmem:[#allocation4 + $0x260] sm:$0xff]
    %v2885 = vld [vmem:[#allocation4 + $0x268] sm:$0xff]
    %v2886 = vld [vmem:[#allocation4 + $0x270] sm:$0xff]
    %v2887 = vld [vmem:[#allocation4 + $0x278] sm:$0xff]
    %v2888 = vld [vmem:[#allocation4 + $0x280] sm:$0xff]
    %v2889 = vld [vmem:[#allocation4 + $0x288] sm:$0xff]
    %v2890 = vld [vmem:[#allocation4 + $0x290] sm:$0xff]
    %v2891 = vld [vmem:[#allocation4 + $0x298] sm:$0xff]
    %v2892 = vld [vmem:[#allocation4 + $0x2a0] sm:$0xff]
    %v2893 = vld [vmem:[#allocation4 + $0x2a8] sm:$0xff]
    %v2894 = vld [vmem:[#allocation4 + $0x2b0] sm:$0xff]
    %v2895 = vld [vmem:[#allocation4 + $0x2b8] sm:$0xff]
    %v2896 = vld [vmem:[#allocation4 + $0x2c0] sm:$0xff]
    %v2897 = vld [vmem:[#allocation4 + $0x2c8] sm:$0xff]
    %v2898 = vld [vmem:[#allocation4 + $0x2d0] sm:$0xff]
    %v2899 = vld [vmem:[#allocation4 + $0x2d8] sm:$0xff]
    %v2900 = vld [vmem:[#allocation4 + $0x2e0] sm:$0xff]
    %v2901 = vld [vmem:[#allocation4 + $0x2e8] sm:$0xff]
    %v2902 = vld [vmem:[#allocation4 + $0x2f0] sm:$0xff]
    %v2903 = vld [vmem:[#allocation4 + $0x2f8] sm:$0xff]
    %v2904 = vld [vmem:[#allocation4 + $0x300] sm:$0xff]
    %v2905 = vld [vmem:[#allocation4 + $0x308] sm:$0xff]
    %v2906 = vld [vmem:[#allocation4 + $0x310] sm:$0xff]
    %v2907 = vld [vmem:[#allocation4 + $0x318] sm:$0xff]
    %v2908 = vld [vmem:[#allocation4 + $0x320] sm:$0xff]
    %v2909 = vld [vmem:[#allocation4 + $0x328] sm:$0xff]
    %v2910 = vld [vmem:[#allocation4 + $0x330] sm:$0xff]
    %v2911 = vld [vmem:[#allocation4 + $0x338] sm:$0xff]
    %v2912 = vld [vmem:[#allocation4 + $0x340] sm:$0xff]
    %v2913 = vld [vmem:[#allocation4 + $0x348] sm:$0xff]
    %v2914 = vld [vmem:[#allocation4 + $0x350] sm:$0xff]
    %v2915 = vld [vmem:[#allocation4 + $0x358] sm:$0xff]
    %v2916 = vld [vmem:[#allocation4 + $0x360] sm:$0xff]
    %v2917 = vld [vmem:[#allocation4 + $0x368] sm:$0xff]
    %v2918 = vld [vmem:[#allocation4 + $0x370] sm:$0xff]
    %v2919 = vld [vmem:[#allocation4 + $0x378] sm:$0xff]
    %v2920 = vld [vmem:[#allocation4 + $0x380] sm:$0xff]
    %v2921 = vld [vmem:[#allocation4 + $0x388] sm:$0xff]
    %v2922 = vld [vmem:[#allocation4 + $0x390] sm:$0xff]
    %v2923 = vld [vmem:[#allocation4 + $0x398] sm:$0xff]
    %v2924 = vld [vmem:[#allocation4 + $0x3a0] sm:$0xff]
    %v2925 = vld [vmem:[#allocation4 + $0x3a8] sm:$0xff]
    %v2926 = vld [vmem:[#allocation4 + $0x3b0] sm:$0xff]
    %v2927 = vld [vmem:[#allocation4 + $0x3b8] sm:$0xff]
    %v2928 = vld [vmem:[#allocation4 + $0x3c0] sm:$0xff]
    %v2929 = vld [vmem:[#allocation4 + $0x3c8] sm:$0xff]
    %v2930 = vld [vmem:[#allocation4 + $0x3d0] sm:$0xff]
    %v2931 = vld [vmem:[#allocation4 + $0x3d8] sm:$0xff]
    %v2932 = vld [vmem:[#allocation4 + $0x3e0] sm:$0xff]
    %v2933 = vld [vmem:[#allocation4 + $0x3e8] sm:$0xff]
    %v2934 = vld [vmem:[#allocation4 + $0x3f0] sm:$0xff]
    %v2935 = vld [vmem:[#allocation4 + $0x3f8] sm:$0xff]
    %v2936 = vld [vmem:[#allocation17] sm:$0xff]
    %v2938 = vlaneseq
    %v2939 = vshrl.u32 %v2938, 7
    %v2940 = vsub.s32 0, %v2939
    %v2941 = vrot.slane %v2936, %v2940
    %v2942 = vlaneseq
    %v2943 = vshrl.u32 %v2942, 7
    %v2944 = vsub.s32 1, %v2943
    %v2945 = vrot.slane %v2936, %v2944
    %v2946 = vlaneseq
    %v2947 = vshrl.u32 %v2946, 7
    %v2948 = vsub.s32 2, %v2947
    %v2949 = vrot.slane %v2936, %v2948
    %v2950 = vlaneseq
    %v2951 = vshrl.u32 %v2950, 7
    %v2952 = vsub.s32 3, %v2951
    %v2953 = vrot.slane %v2936, %v2952
    %v2954 = vlaneseq
    %v2955 = vshrl.u32 %v2954, 7
    %v2956 = vsub.s32 4, %v2955
    %v2957 = vrot.slane %v2936, %v2956
    %v2958 = vlaneseq
    %v2959 = vshrl.u32 %v2958, 7
    %v2960 = vsub.s32 5, %v2959
    %v2961 = vrot.slane %v2936, %v2960
    %v2962 = vlaneseq
    %v2963 = vshrl.u32 %v2962, 7
    %v2964 = vsub.s32 6, %v2963
    %v2965 = vrot.slane %v2936, %v2964
    %v2966 = vlaneseq
    %v2967 = vshrl.u32 %v2966, 7
    %v2968 = vsub.s32 7, %v2967
    %v2969 = vrot.slane %v2936, %v2968
    %2978 = vmatprep.subr.bf16.mxu0 %v2809
    %2979 = vmatpush1.bf16.msra.mxu0 %v2808
    %2980 = vmatprep.subr.bf16.mxu0 %v2817
    %2981 = vmatpush1.bf16.msra.mxu0 %v2816
    %2982 = vmatprep.subr.bf16.mxu0 %v2825
    %2983 = vmatpush1.bf16.msra.mxu0 %v2824
    %2984 = vmatprep.subr.bf16.mxu0 %v2833
    %2985 = vmatpush1.bf16.msra.mxu0 %v2832
    %2986 = vmatprep.subr.bf16.mxu0 %v2841
    %2987 = vmatpush1.bf16.msra.mxu0 %v2840
    %2988 = vmatprep.subr.bf16.mxu0 %v2849
    %2989 = vmatpush1.bf16.msra.mxu0 %v2848
    %2990 = vmatprep.subr.bf16.mxu0 %v2857
    %2991 = vmatpush1.bf16.msra.mxu0 %v2856
    %2992 = vmatprep.subr.bf16.mxu0 %v2865
    %2993 = vmatpush1.bf16.msra.mxu0 %v2864
    %2994 = vmatprep.subr.bf16.mxu0 %v2873
    %2995 = vmatpush1.bf16.msra.mxu0 %v2872
    %2996 = vmatprep.subr.bf16.mxu0 %v2881
    %2997 = vmatpush1.bf16.msra.mxu0 %v2880
    %2998 = vmatprep.subr.bf16.mxu0 %v2889
    %2999 = vmatpush1.bf16.msra.mxu0 %v2888
    %3000 = vmatprep.subr.bf16.mxu0 %v2897
    %3001 = vmatpush1.bf16.msra.mxu0 %v2896
    %3002 = vmatprep.subr.bf16.mxu0 %v2905
    %3003 = vmatpush1.bf16.msra.mxu0 %v2904
    %3004 = vmatprep.subr.bf16.mxu0 %v2913
    %3005 = vmatpush1.bf16.msra.mxu0 %v2912
    %3006 = vmatprep.subr.bf16.mxu0 %v2921
    %3007 = vmatpush1.bf16.msra.mxu0 %v2920
    %3008 = vmatprep.subr.bf16.mxu0 %v2929
    %3009 = vmatpush1.bf16.msra.mxu0 %v2928
    %3010 = vmatprep.mubr.bf16.mxu0 %v2807
    %3011 = vmatmul.mubr.bf16.gmra.mrb[0].mxu0 %v2806
    %v3012 = vpop.f32.mrb[0].mxu0
    %v3013 = vadd.f32 %v2941, %v3012
    %v3014 = vpop.f32.mrb[0].mxu0
    %v3015 = vadd.f32 %v2945, %v3014
    %v3016 = vpop.f32.mrb[0].mxu0
    %v3017 = vpop.f32.mrb[0].mxu0
    %3018 = vdwg.mxu0
    %3019 = vmatprep.subr.bf16.mxu0 %v2811
    %3020 = vmatpush1.bf16.msra.mxu0 %v2810
    %3021 = vmatprep.subr.bf16.mxu0 %v2819
    %3022 = vmatpush1.bf16.msra.mxu0 %v2818
    %3023 = vmatprep.subr.bf16.mxu0 %v2827
    %3024 = vmatpush1.bf16.msra.mxu0 %v2826
    %3025 = vmatprep.subr.bf16.mxu0 %v2835
    %3026 = vmatpush1.bf16.msra.mxu0 %v2834
    %3027 = vmatprep.subr.bf16.mxu0 %v2843
    %3028 = vmatpush1.bf16.msra.mxu0 %v2842
    %3029 = vmatprep.subr.bf16.mxu0 %v2851
    %3030 = vmatpush1.bf16.msra.mxu0 %v2850
    %3031 = vmatprep.subr.bf16.mxu0 %v2859
    %3032 = vmatpush1.bf16.msra.mxu0 %v2858
    %3033 = vmatprep.subr.bf16.mxu0 %v2867
    %3034 = vmatpush1.bf16.msra.mxu0 %v2866
    %3035 = vmatprep.subr.bf16.mxu0 %v2875
    %3036 = vmatpush1.bf16.msra.mxu0 %v2874
    %3037 = vmatprep.subr.bf16.mxu0 %v2883
    %3038 = vmatpush1.bf16.msra.mxu0 %v2882
    %3039 = vmatprep.subr.bf16.mxu0 %v2891
    %3040 = vmatpush1.bf16.msra.mxu0 %v2890
    %3041 = vmatprep.subr.bf16.mxu0 %v2899
    %3042 = vmatpush1.bf16.msra.mxu0 %v2898
    %3043 = vmatprep.subr.bf16.mxu0 %v2907
    %3044 = vmatpush1.bf16.msra.mxu0 %v2906
    %3045 = vmatprep.subr.bf16.mxu0 %v2915
    %3046 = vmatpush1.bf16.msra.mxu0 %v2914
    %3047 = vmatprep.subr.bf16.mxu0 %v2923
    %3048 = vmatpush1.bf16.msra.mxu0 %v2922
    %3049 = vmatprep.subr.bf16.mxu0 %v2931
    %3050 = vmatpush1.bf16.msra.mxu0 %v2930
    %3051 = vmatprep.mubr.bf16.mxu0 %v2807
    %3052 = vmatmul.mubr.bf16.gmra.mrb[0].mxu0 %v2806
    %v3053 = vpop.f32.mrb[0].mxu0
    %v3054 = vadd.f32 %v2949, %v3053
    %v3055 = vpop.f32.mrb[0].mxu0
    %v3056 = vadd.f32 %v2953, %v3055
    %v3057 = vpop.f32.mrb[0].mxu0
    %v3058 = vpop.f32.mrb[0].mxu0
    %3059 = vdwg.mxu0
    %3060 = vmatprep.subr.bf16.mxu0 %v2813
    %3061 = vmatpush1.bf16.msra.mxu0 %v2812
    %3062 = vmatprep.subr.bf16.mxu0 %v2821
    %3063 = vmatpush1.bf16.msra.mxu0 %v2820
    %3064 = vmatprep.subr.bf16.mxu0 %v2829
    %3065 = vmatpush1.bf16.msra.mxu0 %v2828
    %3066 = vmatprep.subr.bf16.mxu0 %v2837
    %3067 = vmatpush1.bf16.msra.mxu0 %v2836
    %3068 = vmatprep.subr.bf16.mxu0 %v2845
    %3069 = vmatpush1.bf16.msra.mxu0 %v2844
    %3070 = vmatprep.subr.bf16.mxu0 %v2853
    %3071 = vmatpush1.bf16.msra.mxu0 %v2852
    %3072 = vmatprep.subr.bf16.mxu0 %v2861
    %3073 = vmatpush1.bf16.msra.mxu0 %v2860
    %3074 = vmatprep.subr.bf16.mxu0 %v2869
    %3075 = vmatpush1.bf16.msra.mxu0 %v2868
    %3076 = vmatprep.subr.bf16.mxu0 %v2877
    %3077 = vmatpush1.bf16.msra.mxu0 %v2876
    %3078 = vmatprep.subr.bf16.mxu0 %v2885
    %3079 = vmatpush1.bf16.msra.mxu0 %v2884
    %3080 = vmatprep.subr.bf16.mxu0 %v2893
    %3081 = vmatpush1.bf16.msra.mxu0 %v2892
    %3082 = vmatprep.subr.bf16.mxu0 %v2901
    %3083 = vmatpush1.bf16.msra.mxu0 %v2900
    %3084 = vmatprep.subr.bf16.mxu0 %v2909
    %3085 = vmatpush1.bf16.msra.mxu0 %v2908
    %3086 = vmatprep.subr.bf16.mxu0 %v2917
    %3087 = vmatpush1.bf16.msra.mxu0 %v2916
    %3088 = vmatprep.subr.bf16.mxu0 %v2925
    %3089 = vmatpush1.bf16.msra.mxu0 %v2924
    %3090 = vmatprep.subr.bf16.mxu0 %v2933
    %3091 = vmatpush1.bf16.msra.mxu0 %v2932
    %3092 = vmatprep.mubr.bf16.mxu0 %v2807
    %3093 = vmatmul.mubr.bf16.gmra.mrb[0].mxu0 %v2806
    %v3094 = vpop.f32.mrb[0].mxu0
    %v3095 = vadd.f32 %v2957, %v3094
    %v3096 = vpop.f32.mrb[0].mxu0
    %v3097 = vadd.f32 %v2961, %v3096
    %v3098 = vpop.f32.mrb[0].mxu0
    %v3099 = vpop.f32.mrb[0].mxu0
    %3100 = vdwg.mxu0
    %3101 = vmatprep.subr.bf16.mxu0 %v2815
    %3102 = vmatpush1.bf16.msra.mxu0 %v2814
    %3103 = vmatprep.subr.bf16.mxu0 %v2823
    %3104 = vmatpush1.bf16.msra.mxu0 %v2822
    %3105 = vmatprep.subr.bf16.mxu0 %v2831
    %3106 = vmatpush1.bf16.msra.mxu0 %v2830
    %3107 = vmatprep.subr.bf16.mxu0 %v2839
    %3108 = vmatpush1.bf16.msra.mxu0 %v2838
    %3109 = vmatprep.subr.bf16.mxu0 %v2847
    %3110 = vmatpush1.bf16.msra.mxu0 %v2846
    %3111 = vmatprep.subr.bf16.mxu0 %v2855
    %3112 = vmatpush1.bf16.msra.mxu0 %v2854
    %3113 = vmatprep.subr.bf16.mxu0 %v2863
    %3114 = vmatpush1.bf16.msra.mxu0 %v2862
    %3115 = vmatprep.subr.bf16.mxu0 %v2871
    %3116 = vmatpush1.bf16.msra.mxu0 %v2870
    %3117 = vmatprep.subr.bf16.mxu0 %v2879
    %3118 = vmatpush1.bf16.msra.mxu0 %v2878
    %3119 = vmatprep.subr.bf16.mxu0 %v2887
    %3120 = vmatpush1.bf16.msra.mxu0 %v2886
    %3121 = vmatprep.subr.bf16.mxu0 %v2895
    %3122 = vmatpush1.bf16.msra.mxu0 %v2894
    %3123 = vmatprep.subr.bf16.mxu0 %v2903
    %3124 = vmatpush1.bf16.msra.mxu0 %v2902
    %3125 = vmatprep.subr.bf16.mxu0 %v2911
    %3126 = vmatpush1.bf16.msra.mxu0 %v2910
    %3127 = vmatprep.subr.bf16.mxu0 %v2919
    %3128 = vmatpush1.bf16.msra.mxu0 %v2918
    %3129 = vmatprep.subr.bf16.mxu0 %v2927
    %3130 = vmatpush1.bf16.msra.mxu0 %v2926
    %3131 = vmatprep.subr.bf16.mxu0 %v2935
    %3132 = vmatpush1.bf16.msra.mxu0 %v2934
    %3133 = vmatprep.mubr.bf16.mxu0 %v2807
    %3134 = vmatmul.mubr.bf16.gmra.mrb[0].mxu0 %v2806
    %v3135 = vpop.f32.mrb[0].mxu0
    %v3136 = vadd.f32 %v2965, %v3135
    %v3137 = vpop.f32.mrb[0].mxu0
    %v3138 = vadd.f32 %v2969, %v3137
    %v3139 = vpop.f32.mrb[0].mxu0
    %v3140 = vpop.f32.mrb[0].mxu0
    %3141 = vdwg.mxu0
    %v3142 = vld [vmem:[#allocation5] sm:$0xff]
    %v3143 = vld [vmem:[#allocation5 + $0x8] sm:$0xff]
    %v3144 = vld [vmem:[#allocation5 + $0x10] sm:$0xff]
    %v3145 = vld [vmem:[#allocation5 + $0x18] sm:$0xff]
    %v3146 = vld [vmem:[#allocation5 + $0x20] sm:$0xff]
    %v3147 = vld [vmem:[#allocation5 + $0x28] sm:$0xff]
    %v3148 = vld [vmem:[#allocation5 + $0x30] sm:$0xff]
    %v3149 = vld [vmem:[#allocation5 + $0x38] sm:$0xff]
    %v3150 = vld [vmem:[#allocation5 + $0x40] sm:$0xff]
    %v3151 = vld [vmem:[#allocation5 + $0x48] sm:$0xff]
    %v3152 = vld [vmem:[#allocation5 + $0x50] sm:$0xff]
    %v3153 = vld [vmem:[#allocation5 + $0x58] sm:$0xff]
    %v3154 = vld [vmem:[#allocation5 + $0x60] sm:$0xff]
    %v3155 = vld [vmem:[#allocation5 + $0x68] sm:$0xff]
    %v3156 = vld [vmem:[#allocation5 + $0x70] sm:$0xff]
    %v3157 = vld [vmem:[#allocation5 + $0x78] sm:$0xff]
    %v3158 = vld [vmem:[#allocation5 + $0x80] sm:$0xff]
    %v3159 = vld [vmem:[#allocation5 + $0x88] sm:$0xff]
    %v3160 = vld [vmem:[#allocation5 + $0x90] sm:$0xff]
    %v3161 = vld [vmem:[#allocation5 + $0x98] sm:$0xff]
    %v3162 = vld [vmem:[#allocation5 + $0xa0] sm:$0xff]
    %v3163 = vld [vmem:[#allocation5 + $0xa8] sm:$0xff]
    %v3164 = vld [vmem:[#allocation5 + $0xb0] sm:$0xff]
    %v3165 = vld [vmem:[#allocation5 + $0xb8] sm:$0xff]
    %v3166 = vld [vmem:[#allocation5 + $0xc0] sm:$0xff]
    %v3167 = vld [vmem:[#allocation5 + $0xc8] sm:$0xff]
    %v3168 = vld [vmem:[#allocation5 + $0xd0] sm:$0xff]
    %v3169 = vld [vmem:[#allocation5 + $0xd8] sm:$0xff]
    %v3170 = vld [vmem:[#allocation5 + $0xe0] sm:$0xff]
    %v3171 = vld [vmem:[#allocation5 + $0xe8] sm:$0xff]
    %v3172 = vld [vmem:[#allocation5 + $0xf0] sm:$0xff]
    %v3173 = vld [vmem:[#allocation5 + $0xf8] sm:$0xff]
    %v3174 = vld [vmem:[#allocation5 + $0x100] sm:$0xff]
    %v3175 = vld [vmem:[#allocation5 + $0x108] sm:$0xff]
    %v3176 = vld [vmem:[#allocation5 + $0x110] sm:$0xff]
    %v3177 = vld [vmem:[#allocation5 + $0x118] sm:$0xff]
    %v3178 = vld [vmem:[#allocation5 + $0x120] sm:$0xff]
    %v3179 = vld [vmem:[#allocation5 + $0x128] sm:$0xff]
    %v3180 = vld [vmem:[#allocation5 + $0x130] sm:$0xff]
    %v3181 = vld [vmem:[#allocation5 + $0x138] sm:$0xff]
    %v3182 = vld [vmem:[#allocation5 + $0x140] sm:$0xff]
    %v3183 = vld [vmem:[#allocation5 + $0x148] sm:$0xff]
    %v3184 = vld [vmem:[#allocation5 + $0x150] sm:$0xff]
    %v3185 = vld [vmem:[#allocation5 + $0x158] sm:$0xff]
    %v3186 = vld [vmem:[#allocation5 + $0x160] sm:$0xff]
    %v3187 = vld [vmem:[#allocation5 + $0x168] sm:$0xff]
    %v3188 = vld [vmem:[#allocation5 + $0x170] sm:$0xff]
    %v3189 = vld [vmem:[#allocation5 + $0x178] sm:$0xff]
    %v3190 = vld [vmem:[#allocation5 + $0x180] sm:$0xff]
    %v3191 = vld [vmem:[#allocation5 + $0x188] sm:$0xff]
    %v3192 = vld [vmem:[#allocation5 + $0x190] sm:$0xff]
    %v3193 = vld [vmem:[#allocation5 + $0x198] sm:$0xff]
    %v3194 = vld [vmem:[#allocation5 + $0x1a0] sm:$0xff]
    %v3195 = vld [vmem:[#allocation5 + $0x1a8] sm:$0xff]
    %v3196 = vld [vmem:[#allocation5 + $0x1b0] sm:$0xff]
    %v3197 = vld [vmem:[#allocation5 + $0x1b8] sm:$0xff]
    %v3198 = vld [vmem:[#allocation5 + $0x1c0] sm:$0xff]
    %v3199 = vld [vmem:[#allocation5 + $0x1c8] sm:$0xff]
    %v3200 = vld [vmem:[#allocation5 + $0x1d0] sm:$0xff]
    %v3201 = vld [vmem:[#allocation5 + $0x1d8] sm:$0xff]
    %v3202 = vld [vmem:[#allocation5 + $0x1e0] sm:$0xff]
    %v3203 = vld [vmem:[#allocation5 + $0x1e8] sm:$0xff]
    %v3204 = vld [vmem:[#allocation5 + $0x1f0] sm:$0xff]
    %v3205 = vld [vmem:[#allocation5 + $0x1f8] sm:$0xff]
    %v3206 = vld [vmem:[#allocation5 + $0x200] sm:$0xff]
    %v3207 = vld [vmem:[#allocation5 + $0x208] sm:$0xff]
    %v3208 = vld [vmem:[#allocation5 + $0x210] sm:$0xff]
    %v3209 = vld [vmem:[#allocation5 + $0x218] sm:$0xff]
    %v3210 = vld [vmem:[#allocation5 + $0x220] sm:$0xff]
    %v3211 = vld [vmem:[#allocation5 + $0x228] sm:$0xff]
    %v3212 = vld [vmem:[#allocation5 + $0x230] sm:$0xff]
    %v3213 = vld [vmem:[#allocation5 + $0x238] sm:$0xff]
    %v3214 = vld [vmem:[#allocation5 + $0x240] sm:$0xff]
    %v3215 = vld [vmem:[#allocation5 + $0x248] sm:$0xff]
    %v3216 = vld [vmem:[#allocation5 + $0x250] sm:$0xff]
    %v3217 = vld [vmem:[#allocation5 + $0x258] sm:$0xff]
    %v3218 = vld [vmem:[#allocation5 + $0x260] sm:$0xff]
    %v3219 = vld [vmem:[#allocation5 + $0x268] sm:$0xff]
    %v3220 = vld [vmem:[#allocation5 + $0x270] sm:$0xff]
    %v3221 = vld [vmem:[#allocation5 + $0x278] sm:$0xff]
    %v3222 = vld [vmem:[#allocation5 + $0x280] sm:$0xff]
    %v3223 = vld [vmem:[#allocation5 + $0x288] sm:$0xff]
    %v3224 = vld [vmem:[#allocation5 + $0x290] sm:$0xff]
    %v3225 = vld [vmem:[#allocation5 + $0x298] sm:$0xff]
    %v3226 = vld [vmem:[#allocation5 + $0x2a0] sm:$0xff]
    %v3227 = vld [vmem:[#allocation5 + $0x2a8] sm:$0xff]
    %v3228 = vld [vmem:[#allocation5 + $0x2b0] sm:$0xff]
    %v3229 = vld [vmem:[#allocation5 + $0x2b8] sm:$0xff]
    %v3230 = vld [vmem:[#allocation5 + $0x2c0] sm:$0xff]
    %v3231 = vld [vmem:[#allocation5 + $0x2c8] sm:$0xff]
    %v3232 = vld [vmem:[#allocation5 + $0x2d0] sm:$0xff]
    %v3233 = vld [vmem:[#allocation5 + $0x2d8] sm:$0xff]
    %v3234 = vld [vmem:[#allocation5 + $0x2e0] sm:$0xff]
    %v3235 = vld [vmem:[#allocation5 + $0x2e8] sm:$0xff]
    %v3236 = vld [vmem:[#allocation5 + $0x2f0] sm:$0xff]
    %v3237 = vld [vmem:[#allocation5 + $0x2f8] sm:$0xff]
    %v3238 = vld [vmem:[#allocation5 + $0x300] sm:$0xff]
    %v3239 = vld [vmem:[#allocation5 + $0x308] sm:$0xff]
    %v3240 = vld [vmem:[#allocation5 + $0x310] sm:$0xff]
    %v3241 = vld [vmem:[#allocation5 + $0x318] sm:$0xff]
    %v3242 = vld [vmem:[#allocation5 + $0x320] sm:$0xff]
    %v3243 = vld [vmem:[#allocation5 + $0x328] sm:$0xff]
    %v3244 = vld [vmem:[#allocation5 + $0x330] sm:$0xff]
    %v3245 = vld [vmem:[#allocation5 + $0x338] sm:$0xff]
    %v3246 = vld [vmem:[#allocation5 + $0x340] sm:$0xff]
    %v3247 = vld [vmem:[#allocation5 + $0x348] sm:$0xff]
    %v3248 = vld [vmem:[#allocation5 + $0x350] sm:$0xff]
    %v3249 = vld [vmem:[#allocation5 + $0x358] sm:$0xff]
    %v3250 = vld [vmem:[#allocation5 + $0x360] sm:$0xff]
    %v3251 = vld [vmem:[#allocation5 + $0x368] sm:$0xff]
    %v3252 = vld [vmem:[#allocation5 + $0x370] sm:$0xff]
    %v3253 = vld [vmem:[#allocation5 + $0x378] sm:$0xff]
    %v3254 = vld [vmem:[#allocation5 + $0x380] sm:$0xff]
    %v3255 = vld [vmem:[#allocation5 + $0x388] sm:$0xff]
    %v3256 = vld [vmem:[#allocation5 + $0x390] sm:$0xff]
    %v3257 = vld [vmem:[#allocation5 + $0x398] sm:$0xff]
    %v3258 = vld [vmem:[#allocation5 + $0x3a0] sm:$0xff]
    %v3259 = vld [vmem:[#allocation5 + $0x3a8] sm:$0xff]
    %v3260 = vld [vmem:[#allocation5 + $0x3b0] sm:$0xff]
    %v3261 = vld [vmem:[#allocation5 + $0x3b8] sm:$0xff]
    %v3262 = vld [vmem:[#allocation5 + $0x3c0] sm:$0xff]
    %v3263 = vld [vmem:[#allocation5 + $0x3c8] sm:$0xff]
    %v3264 = vld [vmem:[#allocation5 + $0x3d0] sm:$0xff]
    %v3265 = vld [vmem:[#allocation5 + $0x3d8] sm:$0xff]
    %v3266 = vld [vmem:[#allocation5 + $0x3e0] sm:$0xff]
    %v3267 = vld [vmem:[#allocation5 + $0x3e8] sm:$0xff]
    %v3268 = vld [vmem:[#allocation5 + $0x3f0] sm:$0xff]
    %v3269 = vld [vmem:[#allocation5 + $0x3f8] sm:$0xff]
    %3270 = vmatprep.subr.bf16.mxu0 %v3143
    %3271 = vmatpush1.bf16.msra.mxu0 %v3142
    %3272 = vmatprep.subr.bf16.mxu0 %v3151
    %3273 = vmatpush1.bf16.msra.mxu0 %v3150
    %3274 = vmatprep.subr.bf16.mxu0 %v3159
    %3275 = vmatpush1.bf16.msra.mxu0 %v3158
    %3276 = vmatprep.subr.bf16.mxu0 %v3167
    %3277 = vmatpush1.bf16.msra.mxu0 %v3166
    %3278 = vmatprep.subr.bf16.mxu0 %v3175
    %3279 = vmatpush1.bf16.msra.mxu0 %v3174
    %3280 = vmatprep.subr.bf16.mxu0 %v3183
    %3281 = vmatpush1.bf16.msra.mxu0 %v3182
    %3282 = vmatprep.subr.bf16.mxu0 %v3191
    %3283 = vmatpush1.bf16.msra.mxu0 %v3190
    %3284 = vmatprep.subr.bf16.mxu0 %v3199
    %3285 = vmatpush1.bf16.msra.mxu0 %v3198
    %3286 = vmatprep.subr.bf16.mxu0 %v3207
    %3287 = vmatpush1.bf16.msra.mxu0 %v3206
    %3288 = vmatprep.subr.bf16.mxu0 %v3215
    %3289 = vmatpush1.bf16.msra.mxu0 %v3214
    %3290 = vmatprep.subr.bf16.mxu0 %v3223
    %3291 = vmatpush1.bf16.msra.mxu0 %v3222
    %3292 = vmatprep.subr.bf16.mxu0 %v3231
    %3293 = vmatpush1.bf16.msra.mxu0 %v3230
    %3294 = vmatprep.subr.bf16.mxu0 %v3239
    %3295 = vmatpush1.bf16.msra.mxu0 %v3238
    %3296 = vmatprep.subr.bf16.mxu0 %v3247
    %3297 = vmatpush1.bf16.msra.mxu0 %v3246
    %3298 = vmatprep.subr.bf16.mxu0 %v3255
    %3299 = vmatpush1.bf16.msra.mxu0 %v3254
    %3300 = vmatprep.subr.bf16.mxu0 %v3263
    %3301 = vmatpush1.bf16.msra.mxu0 %v3262
    %3302 = vmatprep.mubr.bf16.mxu0 0
    %3303 = vmatmul.mubr.bf16.gmra.mrb[0].mxu0 0
    %v3304 = vpop.f32.mrb[0].mxu0
    %v3305 = vadd.f32 0.0, %v3304
    %v3306 = vpop.f32.mrb[0].mxu0
    %v3307 = vadd.f32 0.0, %v3306
    %v3308 = vpop.f32.mrb[0].mxu0
    %v3309 = vpop.f32.mrb[0].mxu0
    %3310 = vdwg.mxu0
    %3311 = vmatprep.subr.bf16.mxu0 %v3145
    %3312 = vmatpush1.bf16.msra.mxu0 %v3144
    %3313 = vmatprep.subr.bf16.mxu0 %v3153
    %3314 = vmatpush1.bf16.msra.mxu0 %v3152
    %3315 = vmatprep.subr.bf16.mxu0 %v3161
    %3316 = vmatpush1.bf16.msra.mxu0 %v3160
    %3317 = vmatprep.subr.bf16.mxu0 %v3169
    %3318 = vmatpush1.bf16.msra.mxu0 %v3168
    %3319 = vmatprep.subr.bf16.mxu0 %v3177
    %3320 = vmatpush1.bf16.msra.mxu0 %v3176
    %3321 = vmatprep.subr.bf16.mxu0 %v3185
    %3322 = vmatpush1.bf16.msra.mxu0 %v3184
    %3323 = vmatprep.subr.bf16.mxu0 %v3193
    %3324 = vmatpush1.bf16.msra.mxu0 %v3192
    %3325 = vmatprep.subr.bf16.mxu0 %v3201
    %3326 = vmatpush1.bf16.msra.mxu0 %v3200
    %3327 = vmatprep.subr.bf16.mxu0 %v3209
    %3328 = vmatpush1.bf16.msra.mxu0 %v3208
    %3329 = vmatprep.subr.bf16.mxu0 %v3217
    %3330 = vmatpush1.bf16.msra.mxu0 %v3216
    %3331 = vmatprep.subr.bf16.mxu0 %v3225
    %3332 = vmatpush1.bf16.msra.mxu0 %v3224
    %3333 = vmatprep.subr.bf16.mxu0 %v3233
    %3334 = vmatpush1.bf16.msra.mxu0 %v3232
    %3335 = vmatprep.subr.bf16.mxu0 %v3241
    %3336 = vmatpush1.bf16.msra.mxu0 %v3240
    %3337 = vmatprep.subr.bf16.mxu0 %v3249
    %3338 = vmatpush1.bf16.msra.mxu0 %v3248
    %3339 = vmatprep.subr.bf16.mxu0 %v3257
    %3340 = vmatpush1.bf16.msra.mxu0 %v3256
    %3341 = vmatprep.subr.bf16.mxu0 %v3265
    %3342 = vmatpush1.bf16.msra.mxu0 %v3264
    %3343 = vmatprep.mubr.bf16.mxu0 0
    %3344 = vmatmul.mubr.bf16.gmra.mrb[0].mxu0 0
    %v3345 = vpop.f32.mrb[0].mxu0
    %v3346 = vadd.f32 0.0, %v3345
    %v3347 = vpop.f32.mrb[0].mxu0
    %v3348 = vadd.f32 0.0, %v3347
    %v3349 = vpop.f32.mrb[0].mxu0
    %v3350 = vpop.f32.mrb[0].mxu0
    %3351 = vdwg.mxu0
    %3352 = vmatprep.subr.bf16.mxu0 %v3147
    %3353 = vmatpush1.bf16.msra.mxu0 %v3146
    %3354 = vmatprep.subr.bf16.mxu0 %v3155
    %3355 = vmatpush1.bf16.msra.mxu0 %v3154
    %3356 = vmatprep.subr.bf16.mxu0 %v3163
    %3357 = vmatpush1.bf16.msra.mxu0 %v3162
    %3358 = vmatprep.subr.bf16.mxu0 %v3171
    %3359 = vmatpush1.bf16.msra.mxu0 %v3170
    %3360 = vmatprep.subr.bf16.mxu0 %v3179
    %3361 = vmatpush1.bf16.msra.mxu0 %v3178
    %3362 = vmatprep.subr.bf16.mxu0 %v3187
    %3363 = vmatpush1.bf16.msra.mxu0 %v3186
    %3364 = vmatprep.subr.bf16.mxu0 %v3195
    %3365 = vmatpush1.bf16.msra.mxu0 %v3194
    %3366 = vmatprep.subr.bf16.mxu0 %v3203
    %3367 = vmatpush1.bf16.msra.mxu0 %v3202
    %3368 = vmatprep.subr.bf16.mxu0 %v3211
    %3369 = vmatpush1.bf16.msra.mxu0 %v3210
    %3370 = vmatprep.subr.bf16.mxu0 %v3219
    %3371 = vmatpush1.bf16.msra.mxu0 %v3218
    %3372 = vmatprep.subr.bf16.mxu0 %v3227
    %3373 = vmatpush1.bf16.msra.mxu0 %v3226
    %3374 = vmatprep.subr.bf16.mxu0 %v3235
    %3375 = vmatpush1.bf16.msra.mxu0 %v3234
    %3376 = vmatprep.subr.bf16.mxu0 %v3243
    %3377 = vmatpush1.bf16.msra.mxu0 %v3242
    %3378 = vmatprep.subr.bf16.mxu0 %v3251
    %3379 = vmatpush1.bf16.msra.mxu0 %v3250
    %3380 = vmatprep.subr.bf16.mxu0 %v3259
    %3381 = vmatpush1.bf16.msra.mxu0 %v3258
    %3382 = vmatprep.subr.bf16.mxu0 %v3267
    %3383 = vmatpush1.bf16.msra.mxu0 %v3266
    %3384 = vmatprep.mubr.bf16.mxu0 0
    %3385 = vmatmul.mubr.bf16.gmra.mrb[0].mxu0 0
    %v3386 = vpop.f32.mrb[0].mxu0
    %v3387 = vadd.f32 0.0, %v3386
    %v3388 = vpop.f32.mrb[0].mxu0
    %v3389 = vadd.f32 0.0, %v3388
    %v3390 = vpop.f32.mrb[0].mxu0
    %v3391 = vpop.f32.mrb[0].mxu0
    %3392 = vdwg.mxu0
    %3393 = vmatprep.subr.bf16.mxu0 %v3149
    %3394 = vmatpush1.bf16.msra.mxu0 %v3148
    %3395 = vmatprep.subr.bf16.mxu0 %v3157
    %3396 = vmatpush1.bf16.msra.mxu0 %v3156
    %3397 = vmatprep.subr.bf16.mxu0 %v3165
    %3398 = vmatpush1.bf16.msra.mxu0 %v3164
    %3399 = vmatprep.subr.bf16.mxu0 %v3173
    %3400 = vmatpush1.bf16.msra.mxu0 %v3172
    %3401 = vmatprep.subr.bf16.mxu0 %v3181
    %3402 = vmatpush1.bf16.msra.mxu0 %v3180
    %3403 = vmatprep.subr.bf16.mxu0 %v3189
    %3404 = vmatpush1.bf16.msra.mxu0 %v3188
    %3405 = vmatprep.subr.bf16.mxu0 %v3197
    %3406 = vmatpush1.bf16.msra.mxu0 %v3196
    %3407 = vmatprep.subr.bf16.mxu0 %v3205
    %3408 = vmatpush1.bf16.msra.mxu0 %v3204
    %3409 = vmatprep.subr.bf16.mxu0 %v3213
    %3410 = vmatpush1.bf16.msra.mxu0 %v3212
    %3411 = vmatprep.subr.bf16.mxu0 %v3221
    %3412 = vmatpush1.bf16.msra.mxu0 %v3220
    %3413 = vmatprep.subr.bf16.mxu0 %v3229
    %3414 = vmatpush1.bf16.msra.mxu0 %v3228
    %3415 = vmatprep.subr.bf16.mxu0 %v3237
    %3416 = vmatpush1.bf16.msra.mxu0 %v3236
    %3417 = vmatprep.subr.bf16.mxu0 %v3245
    %3418 = vmatpush1.bf16.msra.mxu0 %v3244
    %3419 = vmatprep.subr.bf16.mxu0 %v3253
    %3420 = vmatpush1.bf16.msra.mxu0 %v3252
    %3421 = vmatprep.subr.bf16.mxu0 %v3261
    %3422 = vmatpush1.bf16.msra.mxu0 %v3260
    %3423 = vmatprep.subr.bf16.mxu0 %v3269
    %3424 = vmatpush1.bf16.msra.mxu0 %v3268
    %3425 = vmatprep.mubr.bf16.mxu0 0
    %3426 = vmatmul.mubr.bf16.gmra.mrb[0].mxu0 0
    %v3427 = vpop.f32.mrb[0].mxu0
    %v3428 = vadd.f32 0.0, %v3427
    %v3429 = vpop.f32.mrb[0].mxu0
    %v3430 = vadd.f32 0.0, %v3429
    %v3431 = vpop.f32.mrb[0].mxu0
    %v3432 = vpop.f32.mrb[0].mxu0
    %3433 = vdwg.mxu0
    %v3434 = vadd.f32 %v3013, %v3305
    %v3435 = vadd.f32 %v3015, %v3307
    %v3436 = vadd.f32 %v3054, %v3346
    %v3437 = vadd.f32 %v3056, %v3348
    %v3438 = vadd.f32 %v3095, %v3387
    %v3439 = vadd.f32 %v3097, %v3389
    %v3440 = vadd.f32 %v3136, %v3428
    %v3441 = vadd.f32 %v3138, %v3430
    %v3442 = vmul.f32 %v3434, %v624
    %v3443 = vmul.f32 %v3435, %v625
    %v3444 = vmul.f32 %v3436, %v626
    %v3445 = vmul.f32 %v3437, %v627
    %v3446 = vmul.f32 %v3438, %v628
    %v3447 = vmul.f32 %v3439, %v629
    %v3448 = vmul.f32 %v3440, %v630
    %v3449 = vmul.f32 %v3441, %v631
    %v3450 = vtanh.pop %v3442
    %v3451 = vtanh.pop %v3443
    %v3452 = vtanh.pop %v3444
    %v3453 = vtanh.pop %v3445
    %v3454 = vtanh.pop %v3446
    %v3455 = vtanh.pop %v3447
    %v3456 = vtanh.pop %v3448
    %v3457 = vtanh.pop %v3449
    %v3458 = vmul.f32 %v3450, 0.5
    %v3459 = vmul.f32 %v3451, 0.5
    %v3460 = vmul.f32 %v3452, 0.5
    %v3461 = vmul.f32 %v3453, 0.5
    %v3462 = vmul.f32 %v3454, 0.5
    %v3463 = vmul.f32 %v3455, 0.5
    %v3464 = vmul.f32 %v3456, 0.5
    %v3465 = vmul.f32 %v3457, 0.5
    %v3466 = vadd.f32 %v3458, 0.5
    %v3467 = vadd.f32 %v3459, 0.5
    %v3468 = vadd.f32 %v3460, 0.5
    %v3469 = vadd.f32 %v3461, 0.5
    %v3470 = vadd.f32 %v3462, 0.5
    %v3471 = vadd.f32 %v3463, 0.5
    %v3472 = vadd.f32 %v3464, 0.5
    %v3473 = vadd.f32 %v3465, 0.5
    %v3474 = vsel %vm616, %v3450, %v3466
    %v3475 = vsel %vm617, %v3451, %v3467
    %v3476 = vsel %vm618, %v3452, %v3468
    %v3477 = vsel %vm619, %v3453, %v3469
    %v3478 = vsel %vm620, %v3454, %v3470
    %v3479 = vsel %vm621, %v3455, %v3471
    %v3480 = vsel %vm622, %v3456, %v3472
    %v3481 = vsel %vm623, %v3457, %v3473
    %v3482 = vmul.f32 %v3476, 0.0
    %v3483 = vmul.f32 %v3477, 0.0
    %v3484 = vmul.f32 %v3474, %v3478
    %v3485 = vmul.f32 %v3475, %v3479
    %v3486 = vadd.f32 %v3482, %v3484
    %v3487 = vadd.f32 %v3483, %v3485
    %v3488 = vtanh.pop %v3486
    %v3489 = vtanh.pop %v3487
    %v3490 = vmul.f32 %v3480, %v3488
    %v3491 = vmul.f32 %v3481, %v3489
    %v3492 = vpack.c.bf16 %v3490, %v3490
    %v3493 = vpack.c.bf16 %v3491, %v3491
    %3494 = vmatprep.subr.bf16.mxu0 %v3143
    %3495 = vmatpush1.bf16.msra.mxu0 %v3142
    %3496 = vmatprep.subr.bf16.mxu0 %v3151
    %3497 = vmatpush1.bf16.msra.mxu0 %v3150
    %3498 = vmatprep.subr.bf16.mxu0 %v3159
    %3499 = vmatpush1.bf16.msra.mxu0 %v3158
    %3500 = vmatprep.subr.bf16.mxu0 %v3167
    %3501 = vmatpush1.bf16.msra.mxu0 %v3166
    %3502 = vmatprep.subr.bf16.mxu0 %v3175
    %3503 = vmatpush1.bf16.msra.mxu0 %v3174
    %3504 = vmatprep.subr.bf16.mxu0 %v3183
    %3505 = vmatpush1.bf16.msra.mxu0 %v3182
    %3506 = vmatprep.subr.bf16.mxu0 %v3191
    %3507 = vmatpush1.bf16.msra.mxu0 %v3190
    %3508 = vmatprep.subr.bf16.mxu0 %v3199
    %3509 = vmatpush1.bf16.msra.mxu0 %v3198
    %3510 = vmatprep.subr.bf16.mxu0 %v3207
    %3511 = vmatpush1.bf16.msra.mxu0 %v3206
    %3512 = vmatprep.subr.bf16.mxu0 %v3215
    %3513 = vmatpush1.bf16.msra.mxu0 %v3214
    %3514 = vmatprep.subr.bf16.mxu0 %v3223
    %3515 = vmatpush1.bf16.msra.mxu0 %v3222
    %3516 = vmatprep.subr.bf16.mxu0 %v3231
    %3517 = vmatpush1.bf16.msra.mxu0 %v3230
    %3518 = vmatprep.subr.bf16.mxu0 %v3239
    %3519 = vmatpush1.bf16.msra.mxu0 %v3238
    %3520 = vmatprep.subr.bf16.mxu0 %v3247
    %3521 = vmatpush1.bf16.msra.mxu0 %v3246
    %3522 = vmatprep.subr.bf16.mxu0 %v3255
    %3523 = vmatpush1.bf16.msra.mxu0 %v3254
    %3524 = vmatprep.subr.bf16.mxu0 %v3263
    %3525 = vmatpush1.bf16.msra.mxu0 %v3262
    %3526 = vmatprep.mubr.bf16.mxu0 %v3493
    %3527 = vmatmul.mubr.bf16.gmra.mrb[0].mxu0 %v3492
    %v3528 = vpop.f32.mrb[0].mxu0
    %v3529 = vadd.f32 0.0, %v3528
    %v3530 = vpop.f32.mrb[0].mxu0
    %v3531 = vadd.f32 0.0, %v3530
    %v3532 = vpop.f32.mrb[0].mxu0
    %v3533 = vpop.f32.mrb[0].mxu0
    %3534 = vdwg.mxu0
    %3535 = vmatprep.subr.bf16.mxu0 %v3145
    %3536 = vmatpush1.bf16.msra.mxu0 %v3144
    %3537 = vmatprep.subr.bf16.mxu0 %v3153
    %3538 = vmatpush1.bf16.msra.mxu0 %v3152
    %3539 = vmatprep.subr.bf16.mxu0 %v3161
    %3540 = vmatpush1.bf16.msra.mxu0 %v3160
    %3541 = vmatprep.subr.bf16.mxu0 %v3169
    %3542 = vmatpush1.bf16.msra.mxu0 %v3168
    %3543 = vmatprep.subr.bf16.mxu0 %v3177
    %3544 = vmatpush1.bf16.msra.mxu0 %v3176
    %3545 = vmatprep.subr.bf16.mxu0 %v3185
    %3546 = vmatpush1.bf16.msra.mxu0 %v3184
    %3547 = vmatprep.subr.bf16.mxu0 %v3193
    %3548 = vmatpush1.bf16.msra.mxu0 %v3192
    %3549 = vmatprep.subr.bf16.mxu0 %v3201
    %3550 = vmatpush1.bf16.msra.mxu0 %v3200
    %3551 = vmatprep.subr.bf16.mxu0 %v3209
    %3552 = vmatpush1.bf16.msra.mxu0 %v3208
    %3553 = vmatprep.subr.bf16.mxu0 %v3217
    %3554 = vmatpush1.bf16.msra.mxu0 %v3216
    %3555 = vmatprep.subr.bf16.mxu0 %v3225
    %3556 = vmatpush1.bf16.msra.mxu0 %v3224
    %3557 = vmatprep.subr.bf16.mxu0 %v3233
    %3558 = vmatpush1.bf16.msra.mxu0 %v3232
    %3559 = vmatprep.subr.bf16.mxu0 %v3241
    %3560 = vmatpush1.bf16.msra.mxu0 %v3240
    %3561 = vmatprep.subr.bf16.mxu0 %v3249
    %3562 = vmatpush1.bf16.msra.mxu0 %v3248
    %3563 = vmatprep.subr.bf16.mxu0 %v3257
    %3564 = vmatpush1.bf16.msra.mxu0 %v3256
    %3565 = vmatprep.subr.bf16.mxu0 %v3265
    %3566 = vmatpush1.bf16.msra.mxu0 %v3264
    %3567 = vmatprep.mubr.bf16.mxu0 %v3493
    %3568 = vmatmul.mubr.bf16.gmra.mrb[0].mxu0 %v3492
    %v3569 = vpop.f32.mrb[0].mxu0
    %v3570 = vadd.f32 0.0, %v3569
    %v3571 = vpop.f32.mrb[0].mxu0
    %v3572 = vadd.f32 0.0, %v3571
    %v3573 = vpop.f32.mrb[0].mxu0
    %v3574 = vpop.f32.mrb[0].mxu0
    %3575 = vdwg.mxu0
    %3576 = vmatprep.subr.bf16.mxu0 %v3147
    %3577 = vmatpush1.bf16.msra.mxu0 %v3146
    %3578 = vmatprep.subr.bf16.mxu0 %v3155
    %3579 = vmatpush1.bf16.msra.mxu0 %v3154
    %3580 = vmatprep.subr.bf16.mxu0 %v3163
    %3581 = vmatpush1.bf16.msra.mxu0 %v3162
    %3582 = vmatprep.subr.bf16.mxu0 %v3171
    %3583 = vmatpush1.bf16.msra.mxu0 %v3170
    %3584 = vmatprep.subr.bf16.mxu0 %v3179
    %3585 = vmatpush1.bf16.msra.mxu0 %v3178
    %3586 = vmatprep.subr.bf16.mxu0 %v3187
    %3587 = vmatpush1.bf16.msra.mxu0 %v3186
    %3588 = vmatprep.subr.bf16.mxu0 %v3195
    %3589 = vmatpush1.bf16.msra.mxu0 %v3194
    %3590 = vmatprep.subr.bf16.mxu0 %v3203
    %3591 = vmatpush1.bf16.msra.mxu0 %v3202
    %3592 = vmatprep.subr.bf16.mxu0 %v3211
    %3593 = vmatpush1.bf16.msra.mxu0 %v3210
    %3594 = vmatprep.subr.bf16.mxu0 %v3219
    %3595 = vmatpush1.bf16.msra.mxu0 %v3218
    %3596 = vmatprep.subr.bf16.mxu0 %v3227
    %3597 = vmatpush1.bf16.msra.mxu0 %v3226
    %3598 = vmatprep.subr.bf16.mxu0 %v3235
    %3599 = vmatpush1.bf16.msra.mxu0 %v3234
    %3600 = vmatprep.subr.bf16.mxu0 %v3243
    %3601 = vmatpush1.bf16.msra.mxu0 %v3242
    %3602 = vmatprep.subr.bf16.mxu0 %v3251
    %3603 = vmatpush1.bf16.msra.mxu0 %v3250
    %3604 = vmatprep.subr.bf16.mxu0 %v3259
    %3605 = vmatpush1.bf16.msra.mxu0 %v3258
    %3606 = vmatprep.subr.bf16.mxu0 %v3267
    %3607 = vmatpush1.bf16.msra.mxu0 %v3266
    %3608 = vmatprep.mubr.bf16.mxu0 %v3493
    %3609 = vmatmul.mubr.bf16.gmra.mrb[0].mxu0 %v3492
    %v3610 = vpop.f32.mrb[0].mxu0
    %v3611 = vadd.f32 0.0, %v3610
    %v3612 = vpop.f32.mrb[0].mxu0
    %v3613 = vadd.f32 0.0, %v3612
    %v3614 = vpop.f32.mrb[0].mxu0
    %v3615 = vpop.f32.mrb[0].mxu0
    %3616 = vdwg.mxu0
    %3617 = vmatprep.subr.bf16.mxu0 %v3149
    %3618 = vmatpush1.bf16.msra.mxu0 %v3148
    %3619 = vmatprep.subr.bf16.mxu0 %v3157
    %3620 = vmatpush1.bf16.msra.mxu0 %v3156
    %3621 = vmatprep.subr.bf16.mxu0 %v3165
    %3622 = vmatpush1.bf16.msra.mxu0 %v3164
    %3623 = vmatprep.subr.bf16.mxu0 %v3173
    %3624 = vmatpush1.bf16.msra.mxu0 %v3172
    %3625 = vmatprep.subr.bf16.mxu0 %v3181
    %3626 = vmatpush1.bf16.msra.mxu0 %v3180
    %3627 = vmatprep.subr.bf16.mxu0 %v3189
    %3628 = vmatpush1.bf16.msra.mxu0 %v3188
    %3629 = vmatprep.subr.bf16.mxu0 %v3197
    %3630 = vmatpush1.bf16.msra.mxu0 %v3196
    %3631 = vmatprep.subr.bf16.mxu0 %v3205
    %3632 = vmatpush1.bf16.msra.mxu0 %v3204
    %3633 = vmatprep.subr.bf16.mxu0 %v3213
    %3634 = vmatpush1.bf16.msra.mxu0 %v3212
    %3635 = vmatprep.subr.bf16.mxu0 %v3221
    %3636 = vmatpush1.bf16.msra.mxu0 %v3220
    %3637 = vmatprep.subr.bf16.mxu0 %v3229
    %3638 = vmatpush1.bf16.msra.mxu0 %v3228
    %3639 = vmatprep.subr.bf16.mxu0 %v3237
    %3640 = vmatpush1.bf16.msra.mxu0 %v3236
    %3641 = vmatprep.subr.bf16.mxu0 %v3245
    %3642 = vmatpush1.bf16.msra.mxu0 %v3244
    %3643 = vmatprep.subr.bf16.mxu0 %v3253
    %3644 = vmatpush1.bf16.msra.mxu0 %v3252
    %3645 = vmatprep.subr.bf16.mxu0 %v3261
    %3646 = vmatpush1.bf16.msra.mxu0 %v3260
    %3647 = vmatprep.subr.bf16.mxu0 %v3269
    %3648 = vmatpush1.bf16.msra.mxu0 %v3268
    %3649 = vmatprep.mubr.bf16.mxu0 %v3493
    %3650 = vmatmul.mubr.bf16.gmra.mrb[0].mxu0 %v3492
    %v3651 = vpop.f32.mrb[0].mxu0
    %v3652 = vadd.f32 0.0, %v3651
    %v3653 = vpop.f32.mrb[0].mxu0
    %v3654 = vadd.f32 0.0, %v3653
    %v3655 = vpop.f32.mrb[0].mxu0
    %v3656 = vpop.f32.mrb[0].mxu0
    %3657 = vdwg.mxu0
    %v3666 = vrot.slane %v3529, 7
    %v3667 = vrot.slane %v3531, 7
    %v3668 = vrot.slane %v3570, 7
    %v3669 = vrot.slane %v3572, 7
    %v3670 = vrot.slane %v3611, 7
    %v3671 = vrot.slane %v3613, 7
    %v3672 = vrot.slane %v3652, 7
    %v3673 = vrot.slane %v3654, 7
    %v3682 = vadd.f32 %v3013, %v3666
    %v3683 = vadd.f32 %v3015, %v3667
    %v3684 = vadd.f32 %v3054, %v3668
    %v3685 = vadd.f32 %v3056, %v3669
    %v3686 = vadd.f32 %v3095, %v3670
    %v3687 = vadd.f32 %v3097, %v3671
    %v3688 = vadd.f32 %v3136, %v3672
    %v3689 = vadd.f32 %v3138, %v3673
    %v3690 = vmul.f32 %v3682, %v624
    %v3691 = vmul.f32 %v3683, %v625
    %v3692 = vmul.f32 %v3684, %v626
    %v3693 = vmul.f32 %v3685, %v627
    %v3694 = vmul.f32 %v3686, %v628
    %v3695 = vmul.f32 %v3687, %v629
    %v3696 = vmul.f32 %v3688, %v630
    %v3697 = vmul.f32 %v3689, %v631
    %v3698 = vtanh.pop %v3690
    %v3699 = vtanh.pop %v3691
    %v3700 = vtanh.pop %v3692
    %v3701 = vtanh.pop %v3693
    %v3702 = vtanh.pop %v3694
    %v3703 = vtanh.pop %v3695
    %v3704 = vtanh.pop %v3696
    %v3705 = vtanh.pop %v3697
    %v3706 = vmul.f32 %v3698, 0.5
    %v3707 = vmul.f32 %v3699, 0.5
    %v3708 = vmul.f32 %v3700, 0.5
    %v3709 = vmul.f32 %v3701, 0.5
    %v3710 = vmul.f32 %v3702, 0.5
    %v3711 = vmul.f32 %v3703, 0.5
    %v3712 = vmul.f32 %v3704, 0.5
    %v3713 = vmul.f32 %v3705, 0.5
    %v3714 = vadd.f32 %v3706, 0.5
    %v3715 = vadd.f32 %v3707, 0.5
    %v3716 = vadd.f32 %v3708, 0.5
    %v3717 = vadd.f32 %v3709, 0.5
    %v3718 = vadd.f32 %v3710, 0.5
    %v3719 = vadd.f32 %v3711, 0.5
    %v3720 = vadd.f32 %v3712, 0.5
    %v3721 = vadd.f32 %v3713, 0.5
    %v3722 = vsel %vm616, %v3698, %v3714
    %v3723 = vsel %vm617, %v3699, %v3715
    %v3724 = vsel %vm618, %v3700, %v3716
    %v3725 = vsel %vm619, %v3701, %v3717
    %v3726 = vsel %vm620, %v3702, %v3718
    %v3727 = vsel %vm621, %v3703, %v3719
    %v3728 = vsel %vm622, %v3704, %v3720
    %v3729 = vsel %vm623, %v3705, %v3721
    %v3732 = vrot.slane %v3486, 7
    %v3733 = vrot.slane %v3487, 7
    %v3736 = vmul.f32 %v3724, %v3732
    %v3737 = vmul.f32 %v3725, %v3733
    %v3738 = vmul.f32 %v3722, %v3726
    %v3739 = vmul.f32 %v3723, %v3727
    %v3740 = vadd.f32 %v3736, %v3738
    %v3741 = vadd.f32 %v3737, %v3739
    %v3742 = vtanh.pop %v3740
    %v3743 = vtanh.pop %v3741
    %v3744 = vmul.f32 %v3728, %v3742
    %v3745 = vmul.f32 %v3729, %v3743
    %v3746 = vpack.c.bf16 %v3744, %v3744
    %v3747 = vpack.c.bf16 %v3745, %v3745
    %v3749 = vshrl.u32 %v3746, 16
    %v3752 = vshrl.u32 %v3747, 16
    %3756 = vmatprep.subr.bf16.mxu0 %v3143
    %3757 = vmatpush1.bf16.msra.mxu0 %v3142
    %3758 = vmatprep.subr.bf16.mxu0 %v3151
    %3759 = vmatpush1.bf16.msra.mxu0 %v3150
    %3760 = vmatprep.subr.bf16.mxu0 %v3159
    %3761 = vmatpush1.bf16.msra.mxu0 %v3158
    %3762 = vmatprep.subr.bf16.mxu0 %v3167
    %3763 = vmatpush1.bf16.msra.mxu0 %v3166
    %3764 = vmatprep.subr.bf16.mxu0 %v3175
    %3765 = vmatpush1.bf16.msra.mxu0 %v3174
    %3766 = vmatprep.subr.bf16.mxu0 %v3183
    %3767 = vmatpush1.bf16.msra.mxu0 %v3182
    %3768 = vmatprep.subr.bf16.mxu0 %v3191
    %3769 = vmatpush1.bf16.msra.mxu0 %v3190
    %3770 = vmatprep.subr.bf16.mxu0 %v3199
    %3771 = vmatpush1.bf16.msra.mxu0 %v3198
    %3772 = vmatprep.subr.bf16.mxu0 %v3207
    %3773 = vmatpush1.bf16.msra.mxu0 %v3206
    %3774 = vmatprep.subr.bf16.mxu0 %v3215
    %3775 = vmatpush1.bf16.msra.mxu0 %v3214
    %3776 = vmatprep.subr.bf16.mxu0 %v3223
    %3777 = vmatpush1.bf16.msra.mxu0 %v3222
    %3778 = vmatprep.subr.bf16.mxu0 %v3231
    %3779 = vmatpush1.bf16.msra.mxu0 %v3230
    %3780 = vmatprep.subr.bf16.mxu0 %v3239
    %3781 = vmatpush1.bf16.msra.mxu0 %v3238
    %3782 = vmatprep.subr.bf16.mxu0 %v3247
    %3783 = vmatpush1.bf16.msra.mxu0 %v3246
    %3784 = vmatprep.subr.bf16.mxu0 %v3255
    %3785 = vmatpush1.bf16.msra.mxu0 %v3254
    %3786 = vmatprep.subr.bf16.mxu0 %v3263
    %3787 = vmatpush1.bf16.msra.mxu0 %v3262
    %3788 = vmatprep.mubr.bf16.mxu0 %v3752
    %3789 = vmatmul.mubr.bf16.gmra.mrb[0].mxu0 %v3749
    %v3790 = vpop.f32.mrb[0].mxu0
    %v3791 = vadd.f32 0.0, %v3790
    %v3792 = vpop.f32.mrb[0].mxu0
    %v3793 = vadd.f32 0.0, %v3792
    %v3794 = vpop.f32.mrb[0].mxu0
    %v3795 = vpop.f32.mrb[0].mxu0
    %3796 = vdwg.mxu0
    %3797 = vmatprep.subr.bf16.mxu0 %v3145
    %3798 = vmatpush1.bf16.msra.mxu0 %v3144
    %3799 = vmatprep.subr.bf16.mxu0 %v3153
    %3800 = vmatpush1.bf16.msra.mxu0 %v3152
    %3801 = vmatprep.subr.bf16.mxu0 %v3161
    %3802 = vmatpush1.bf16.msra.mxu0 %v3160
    %3803 = vmatprep.subr.bf16.mxu0 %v3169
    %3804 = vmatpush1.bf16.msra.mxu0 %v3168
    %3805 = vmatprep.subr.bf16.mxu0 %v3177
    %3806 = vmatpush1.bf16.msra.mxu0 %v3176
    %3807 = vmatprep.subr.bf16.mxu0 %v3185
    %3808 = vmatpush1.bf16.msra.mxu0 %v3184
    %3809 = vmatprep.subr.bf16.mxu0 %v3193
    %3810 = vmatpush1.bf16.msra.mxu0 %v3192
    %3811 = vmatprep.subr.bf16.mxu0 %v3201
    %3812 = vmatpush1.bf16.msra.mxu0 %v3200
    %3813 = vmatprep.subr.bf16.mxu0 %v3209
    %3814 = vmatpush1.bf16.msra.mxu0 %v3208
    %3815 = vmatprep.subr.bf16.mxu0 %v3217
    %3816 = vmatpush1.bf16.msra.mxu0 %v3216
    %3817 = vmatprep.subr.bf16.mxu0 %v3225
    %3818 = vmatpush1.bf16.msra.mxu0 %v3224
    %3819 = vmatprep.subr.bf16.mxu0 %v3233
    %3820 = vmatpush1.bf16.msra.mxu0 %v3232
    %3821 = vmatprep.subr.bf16.mxu0 %v3241
    %3822 = vmatpush1.bf16.msra.mxu0 %v3240
    %3823 = vmatprep.subr.bf16.mxu0 %v3249
    %3824 = vmatpush1.bf16.msra.mxu0 %v3248
    %3825 = vmatprep.subr.bf16.mxu0 %v3257
    %3826 = vmatpush1.bf16.msra.mxu0 %v3256
    %3827 = vmatprep.subr.bf16.mxu0 %v3265
    %3828 = vmatpush1.bf16.msra.mxu0 %v3264
    %3829 = vmatprep.mubr.bf16.mxu0 %v3752
    %3830 = vmatmul.mubr.bf16.gmra.mrb[0].mxu0 %v3749
    %v3831 = vpop.f32.mrb[0].mxu0
    %v3832 = vadd.f32 0.0, %v3831
    %v3833 = vpop.f32.mrb[0].mxu0
    %v3834 = vadd.f32 0.0, %v3833
    %v3835 = vpop.f32.mrb[0].mxu0
    %v3836 = vpop.f32.mrb[0].mxu0
    %3837 = vdwg.mxu0
    %3838 = vmatprep.subr.bf16.mxu0 %v3147
    %3839 = vmatpush1.bf16.msra.mxu0 %v3146
    %3840 = vmatprep.subr.bf16.mxu0 %v3155
    %3841 = vmatpush1.bf16.msra.mxu0 %v3154
    %3842 = vmatprep.subr.bf16.mxu0 %v3163
    %3843 = vmatpush1.bf16.msra.mxu0 %v3162
    %3844 = vmatprep.subr.bf16.mxu0 %v3171
    %3845 = vmatpush1.bf16.msra.mxu0 %v3170
    %3846 = vmatprep.subr.bf16.mxu0 %v3179
    %3847 = vmatpush1.bf16.msra.mxu0 %v3178
    %3848 = vmatprep.subr.bf16.mxu0 %v3187
    %3849 = vmatpush1.bf16.msra.mxu0 %v3186
    %3850 = vmatprep.subr.bf16.mxu0 %v3195
    %3851 = vmatpush1.bf16.msra.mxu0 %v3194
    %3852 = vmatprep.subr.bf16.mxu0 %v3203
    %3853 = vmatpush1.bf16.msra.mxu0 %v3202
    %3854 = vmatprep.subr.bf16.mxu0 %v3211
    %3855 = vmatpush1.bf16.msra.mxu0 %v3210
    %3856 = vmatprep.subr.bf16.mxu0 %v3219
    %3857 = vmatpush1.bf16.msra.mxu0 %v3218
    %3858 = vmatprep.subr.bf16.mxu0 %v3227
    %3859 = vmatpush1.bf16.msra.mxu0 %v3226
    %3860 = vmatprep.subr.bf16.mxu0 %v3235
    %3861 = vmatpush1.bf16.msra.mxu0 %v3234
    %3862 = vmatprep.subr.bf16.mxu0 %v3243
    %3863 = vmatpush1.bf16.msra.mxu0 %v3242
    %3864 = vmatprep.subr.bf16.mxu0 %v3251
    %3865 = vmatpush1.bf16.msra.mxu0 %v3250
    %3866 = vmatprep.subr.bf16.mxu0 %v3259
    %3867 = vmatpush1.bf16.msra.mxu0 %v3258
    %3868 = vmatprep.subr.bf16.mxu0 %v3267
    %3869 = vmatpush1.bf16.msra.mxu0 %v3266
    %3870 = vmatprep.mubr.bf16.mxu0 %v3752
    %3871 = vmatmul.mubr.bf16.gmra.mrb[0].mxu0 %v3749
    %v3872 = vpop.f32.mrb[0].mxu0
    %v3873 = vadd.f32 0.0, %v3872
    %v3874 = vpop.f32.mrb[0].mxu0
    %v3875 = vadd.f32 0.0, %v3874
    %v3876 = vpop.f32.mrb[0].mxu0
    %v3877 = vpop.f32.mrb[0].mxu0
    %3878 = vdwg.mxu0
    %3879 = vmatprep.subr.bf16.mxu0 %v3149
    %3880 = vmatpush1.bf16.msra.mxu0 %v3148
    %3881 = vmatprep.subr.bf16.mxu0 %v3157
    %3882 = vmatpush1.bf16.msra.mxu0 %v3156
    %3883 = vmatprep.subr.bf16.mxu0 %v3165
    %3884 = vmatpush1.bf16.msra.mxu0 %v3164
    %3885 = vmatprep.subr.bf16.mxu0 %v3173
    %3886 = vmatpush1.bf16.msra.mxu0 %v3172
    %3887 = vmatprep.subr.bf16.mxu0 %v3181
    %3888 = vmatpush1.bf16.msra.mxu0 %v3180
    %3889 = vmatprep.subr.bf16.mxu0 %v3189
    %3890 = vmatpush1.bf16.msra.mxu0 %v3188
    %3891 = vmatprep.subr.bf16.mxu0 %v3197
    %3892 = vmatpush1.bf16.msra.mxu0 %v3196
    %3893 = vmatprep.subr.bf16.mxu0 %v3205
    %3894 = vmatpush1.bf16.msra.mxu0 %v3204
    %3895 = vmatprep.subr.bf16.mxu0 %v3213
    %3896 = vmatpush1.bf16.msra.mxu0 %v3212
    %3897 = vmatprep.subr.bf16.mxu0 %v3221
    %3898 = vmatpush1.bf16.msra.mxu0 %v3220
    %3899 = vmatprep.subr.bf16.mxu0 %v3229
    %3900 = vmatpush1.bf16.msra.mxu0 %v3228
    %3901 = vmatprep.subr.bf16.mxu0 %v3237
    %3902 = vmatpush1.bf16.msra.mxu0 %v3236
    %3903 = vmatprep.subr.bf16.mxu0 %v3245
    %3904 = vmatpush1.bf16.msra.mxu0 %v3244
    %3905 = vmatprep.subr.bf16.mxu0 %v3253
    %3906 = vmatpush1.bf16.msra.mxu0 %v3252
    %3907 = vmatprep.subr.bf16.mxu0 %v3261
    %3908 = vmatpush1.bf16.msra.mxu0 %v3260
    %3909 = vmatprep.subr.bf16.mxu0 %v3269
    %3910 = vmatpush1.bf16.msra.mxu0 %v3268
    %3911 = vmatprep.mubr.bf16.mxu0 %v3752
    %3912 = vmatmul.mubr.bf16.gmra.mrb[0].mxu0 %v3749
    %v3913 = vpop.f32.mrb[0].mxu0
    %v3914 = vadd.f32 0.0, %v3913
    %v3915 = vpop.f32.mrb[0].mxu0
    %v3916 = vadd.f32 0.0, %v3915
    %v3917 = vpop.f32.mrb[0].mxu0
    %v3918 = vpop.f32.mrb[0].mxu0
    %3919 = vdwg.mxu0
    %v3928 = vrot.slane %v3791, 6
    %v3929 = vrot.slane %v3793, 6
    %v3930 = vrot.slane %v3832, 6
    %v3931 = vrot.slane %v3834, 6
    %v3932 = vrot.slane %v3873, 6
    %v3933 = vrot.slane %v3875, 6
    %v3934 = vrot.slane %v3914, 6
    %v3935 = vrot.slane %v3916, 6
    %v3944 = vadd.f32 %v3013, %v3928
    %v3945 = vadd.f32 %v3015, %v3929
    %v3946 = vadd.f32 %v3054, %v3930
    %v3947 = vadd.f32 %v3056, %v3931
    %v3948 = vadd.f32 %v3095, %v3932
    %v3949 = vadd.f32 %v3097, %v3933
    %v3950 = vadd.f32 %v3136, %v3934
    %v3951 = vadd.f32 %v3138, %v3935
    %v3952 = vmul.f32 %v3944, %v624
    %v3953 = vmul.f32 %v3945, %v625
    %v3954 = vmul.f32 %v3946, %v626
    %v3955 = vmul.f32 %v3947, %v627
    %v3956 = vmul.f32 %v3948, %v628
    %v3957 = vmul.f32 %v3949, %v629
    %v3958 = vmul.f32 %v3950, %v630
    %v3959 = vmul.f32 %v3951, %v631
    %v3960 = vtanh.pop %v3952
    %v3961 = vtanh.pop %v3953
    %v3962 = vtanh.pop %v3954
    %v3963 = vtanh.pop %v3955
    %v3964 = vtanh.pop %v3956
    %v3965 = vtanh.pop %v3957
    %v3966 = vtanh.pop %v3958
    %v3967 = vtanh.pop %v3959
    %v3968 = vmul.f32 %v3960, 0.5
    %v3969 = vmul.f32 %v3961, 0.5
    %v3970 = vmul.f32 %v3962, 0.5
    %v3971 = vmul.f32 %v3963, 0.5
    %v3972 = vmul.f32 %v3964, 0.5
    %v3973 = vmul.f32 %v3965, 0.5
    %v3974 = vmul.f32 %v3966, 0.5
    %v3975 = vmul.f32 %v3967, 0.5
    %v3976 = vadd.f32 %v3968, 0.5
    %v3977 = vadd.f32 %v3969, 0.5
    %v3978 = vadd.f32 %v3970, 0.5
    %v3979 = vadd.f32 %v3971, 0.5
    %v3980 = vadd.f32 %v3972, 0.5
    %v3981 = vadd.f32 %v3973, 0.5
    %v3982 = vadd.f32 %v3974, 0.5
    %v3983 = vadd.f32 %v3975, 0.5
    %v3984 = vsel %vm616, %v3960, %v3976
    %v3985 = vsel %vm617, %v3961, %v3977
    %v3986 = vsel %vm618, %v3962, %v3978
    %v3987 = vsel %vm619, %v3963, %v3979
    %v3988 = vsel %vm620, %v3964, %v3980
    %v3989 = vsel %vm621, %v3965, %v3981
    %v3990 = vsel %vm622, %v3966, %v3982
    %v3991 = vsel %vm623, %v3967, %v3983
    %v3994 = vrot.slane %v3740, 7
    %v3995 = vrot.slane %v3741, 7
    %v3998 = vmul.f32 %v3986, %v3994
    %v3999 = vmul.f32 %v3987, %v3995
    %v4000 = vmul.f32 %v3984, %v3988
    %v4001 = vmul.f32 %v3985, %v3989
    %v4002 = vadd.f32 %v3998, %v4000
    %v4003 = vadd.f32 %v3999, %v4001
    %v4004 = vtanh.pop %v4002
    %v4005 = vtanh.pop %v4003
    %v4006 = vmul.f32 %v3990, %v4004
    %v4007 = vmul.f32 %v3991, %v4005
    %v4008 = vld [vmem:[%s6] sm:$0xff]
    %v4009 = vld [vmem:[%s6 + $0x8] sm:$0xff]
    %v4010 = vpack.c.bf16 %v4009, %v4008
    %v4011 = vld [vmem:[#allocation19] sm:$0xf]
    %v4012 = vld [vmem:[#allocation19 + $0x4] sm:$0xf]
    %v4013 = vld [vmem:[#allocation19 + $0x8] sm:$0xf]
    %v4014 = vld [vmem:[#allocation19 + $0xc] sm:$0xf]
    %v4015 = vld [vmem:[#allocation19 + $0x10] sm:$0xf]
    %v4016 = vld [vmem:[#allocation19 + $0x14] sm:$0xf]
    %v4017 = vld [vmem:[#allocation19 + $0x18] sm:$0xf]
    %v4018 = vld [vmem:[#allocation19 + $0x1c] sm:$0xf]
    %v4019 = vld [vmem:[#allocation19 + $0x20] sm:$0xf]
    %v4020 = vld [vmem:[#allocation19 + $0x24] sm:$0xf]
    %v4021 = vld [vmem:[#allocation19 + $0x28] sm:$0xf]
    %v4022 = vld [vmem:[#allocation19 + $0x2c] sm:$0xf]
    %v4023 = vld [vmem:[#allocation19 + $0x30] sm:$0xf]
    %v4024 = vld [vmem:[#allocation19 + $0x34] sm:$0xf]
    %v4025 = vld [vmem:[#allocation19 + $0x38] sm:$0xf]
    %v4026 = vld [vmem:[#allocation19 + $0x3c] sm:$0xf]
    %v4027 = vld [vmem:[#allocation20] sm:$0x1]
    %v4029 = vlaneseq
    %v4030 = vshrl.u32 %v4029, 7
    %v4031 = vsub.s32 0, %v4030
    %v4032 = vrot.slane %v4027, %v4031
    %v4050 = vunpack.c.l.b16 %v4011
    %v4051 = vunpack.c.l.b16 %v4012
    %v4052 = vunpack.c.l.b16 %v4013
    %v4053 = vunpack.c.l.b16 %v4014
    %v4054 = vunpack.c.l.b16 %v4015
    %v4055 = vunpack.c.l.b16 %v4016
    %v4056 = vunpack.c.l.b16 %v4017
    %v4057 = vunpack.c.l.b16 %v4018
    %v4058 = vunpack.c.l.b16 %v4019
    %v4059 = vunpack.c.l.b16 %v4020
    %v4060 = vunpack.c.l.b16 %v4021
    %v4061 = vunpack.c.l.b16 %v4022
    %v4062 = vunpack.c.l.b16 %v4023
    %v4063 = vunpack.c.l.b16 %v4024
    %v4064 = vunpack.c.l.b16 %v4025
    %v4065 = vunpack.c.l.b16 %v4026
    %v4066 = vpack.c.b16 %v4051, %v4050
    %v4067 = vpack.c.b16 %v4053, %v4052
    %v4068 = vpack.c.b16 %v4055, %v4054
    %v4069 = vpack.c.b16 %v4057, %v4056
    %v4070 = vpack.c.b16 %v4059, %v4058
    %v4071 = vpack.c.b16 %v4061, %v4060
    %v4072 = vpack.c.b16 %v4063, %v4062
    %v4073 = vpack.c.b16 %v4065, %v4064
    %4082 = vmatprep.subr.bf16.mxu0 0
    %4083 = vmatpush1.bf16.msra.mxu0 %v4066
    %4084 = vmatprep.subr.bf16.mxu0 0
    %4085 = vmatpush1.bf16.msra.mxu0 %v4067
    %4086 = vmatprep.subr.bf16.mxu0 0
    %4087 = vmatpush1.bf16.msra.mxu0 %v4068
    %4088 = vmatprep.subr.bf16.mxu0 0
    %4089 = vmatpush1.bf16.msra.mxu0 %v4069
    %4090 = vmatprep.subr.bf16.mxu0 0
    %4091 = vmatpush1.bf16.msra.mxu0 %v4070
    %4092 = vmatprep.subr.bf16.mxu0 0
    %4093 = vmatpush1.bf16.msra.mxu0 %v4071
    %4094 = vmatprep.subr.bf16.mxu0 0
    %4095 = vmatpush1.bf16.msra.mxu0 %v4072
    %4096 = vmatprep.subr.bf16.mxu0 0
    %4097 = vmatpush1.bf16.msra.mxu0 %v4073
    %4098 = vmatprep.subr.bf16.mxu0 0
    %4099 = vmatpush1.bf16.msra.mxu0 0
    %4100 = vmatprep.subr.bf16.mxu0 0
    %4101 = vmatpush1.bf16.msra.mxu0 0
    %4102 = vmatprep.subr.bf16.mxu0 0
    %4103 = vmatpush1.bf16.msra.mxu0 0
    %4104 = vmatprep.subr.bf16.mxu0 0
    %4105 = vmatpush1.bf16.msra.mxu0 0
    %4106 = vmatprep.subr.bf16.mxu0 0
    %4107 = vmatpush1.bf16.msra.mxu0 0
    %4108 = vmatprep.subr.bf16.mxu0 0
    %4109 = vmatpush1.bf16.msra.mxu0 0
    %4110 = vmatprep.subr.bf16.mxu0 0
    %4111 = vmatpush1.bf16.msra.mxu0 0
    %4112 = vmatprep.subr.bf16.mxu0 0
    %4113 = vmatpush1.bf16.msra.mxu0 0
    %4114 = vmatprep.mubr.bf16.mxu0 0
    %4115 = vmatmul.mubr.bf16.gmra.mrb[0].mxu0 %v4010
    %v4116 = vpop.f32.mrb[0].mxu0
    %v4117 = vadd.f32 %v4032, %v4116
    %v4118 = vpop.f32.mrb[0].mxu0
    %v4119 = vpop.f32.mrb[0].mxu0
    %v4120 = vadd.f32 %v4032, %v4119
    %v4121 = vpop.f32.mrb[0].mxu0
    %4122 = vdwg.mxu0
    %v4123 = vmax.f32 %v4117, 0.0
    %v4124 = vmax.f32 %v4120, 0.0
    %v4125 = vlaneseq
    %v4126 = vshrl.u32 %v4125, 7
    %v4127 = vadd.s32 %v4126, 8
    %vm4128 = vcmp.lt.s32.totalorder %v4126, 9
    %vm4129 = vcmp.lt.s32.totalorder %v4127, 9
    %v4130 = vsel %vm4128, %v4123, 0.0
    %v4131 = vsel %vm4129, %v4124, 0.0
    %v4132 = vmax.f32 %v4130, %v4131
    %v4133 = vrot.slane %v4132, 4
    %v4134 = vmax.f32 %v4132, %v4133
    %v4135 = vrot.slane %v4134, 2
    %v4136 = vmax.f32 %v4134, %v4135
    %v4137 = vrot.slane %v4136, 1
    %v4138 = vmax.f32 %v4136, %v4137
    %s4139 = smul.u32 %s2798, 4
    %s4140 = sshll.u32 %s4139, 4
    %4141 = dma.done %s224, %s4140
    %s4142 = smul.u32 4, 16
    %s4143 = smul.u32 %s4142, 4
    %s4144 = sshll.u32 %s4143, 4
    %4145 = dma.done %s259, %s4144
    %s4146 = smul.u32 4, 64
    %s4147 = smul.u32 %s4146, 1
    %s4148 = sshll.u32 %s4147, 4
    %4149 = dma.done %s564, %s4148
    %v4150 = vpack.c.bf16 %v4006, %v4006
    %v4151 = vpack.c.bf16 %v4007, %v4007
    %v4152 = vld [vmem:[#allocation6] sm:$0xff]
    %v4153 = vld [vmem:[#allocation6 + $0x8] sm:$0xff]
    %v4154 = vld [vmem:[#allocation6 + $0x10] sm:$0xff]
    %v4155 = vld [vmem:[#allocation6 + $0x18] sm:$0xff]
    %v4156 = vld [vmem:[#allocation6 + $0x20] sm:$0xff]
    %v4157 = vld [vmem:[#allocation6 + $0x28] sm:$0xff]
    %v4158 = vld [vmem:[#allocation6 + $0x30] sm:$0xff]
    %v4159 = vld [vmem:[#allocation6 + $0x38] sm:$0xff]
    %v4160 = vld [vmem:[#allocation6 + $0x40] sm:$0xff]
    %v4161 = vld [vmem:[#allocation6 + $0x48] sm:$0xff]
    %v4162 = vld [vmem:[#allocation6 + $0x50] sm:$0xff]
    %v4163 = vld [vmem:[#allocation6 + $0x58] sm:$0xff]
    %v4164 = vld [vmem:[#allocation6 + $0x60] sm:$0xff]
    %v4165 = vld [vmem:[#allocation6 + $0x68] sm:$0xff]
    %v4166 = vld [vmem:[#allocation6 + $0x70] sm:$0xff]
    %v4167 = vld [vmem:[#allocation6 + $0x78] sm:$0xff]
    %v4168 = vld [vmem:[#allocation6 + $0x80] sm:$0xff]
    %v4169 = vld [vmem:[#allocation6 + $0x88] sm:$0xff]
    %v4170 = vld [vmem:[#allocation6 + $0x90] sm:$0xff]
    %v4171 = vld [vmem:[#allocation6 + $0x98] sm:$0xff]
    %v4172 = vld [vmem:[#allocation6 + $0xa0] sm:$0xff]
    %v4173 = vld [vmem:[#allocation6 + $0xa8] sm:$0xff]
    %v4174 = vld [vmem:[#allocation6 + $0xb0] sm:$0xff]
    %v4175 = vld [vmem:[#allocation6 + $0xb8] sm:$0xff]
    %v4176 = vld [vmem:[#allocation6 + $0xc0] sm:$0xff]
    %v4177 = vld [vmem:[#allocation6 + $0xc8] sm:$0xff]
    %v4178 = vld [vmem:[#allocation6 + $0xd0] sm:$0xff]
    %v4179 = vld [vmem:[#allocation6 + $0xd8] sm:$0xff]
    %v4180 = vld [vmem:[#allocation6 + $0xe0] sm:$0xff]
    %v4181 = vld [vmem:[#allocation6 + $0xe8] sm:$0xff]
    %v4182 = vld [vmem:[#allocation6 + $0xf0] sm:$0xff]
    %v4183 = vld [vmem:[#allocation6 + $0xf8] sm:$0xff]
    %v4184 = vld [vmem:[#allocation6 + $0x100] sm:$0xff]
    %v4185 = vld [vmem:[#allocation6 + $0x108] sm:$0xff]
    %v4186 = vld [vmem:[#allocation6 + $0x110] sm:$0xff]
    %v4187 = vld [vmem:[#allocation6 + $0x118] sm:$0xff]
    %v4188 = vld [vmem:[#allocation6 + $0x120] sm:$0xff]
    %v4189 = vld [vmem:[#allocation6 + $0x128] sm:$0xff]
    %v4190 = vld [vmem:[#allocation6 + $0x130] sm:$0xff]
    %v4191 = vld [vmem:[#allocation6 + $0x138] sm:$0xff]
    %v4192 = vld [vmem:[#allocation6 + $0x140] sm:$0xff]
    %v4193 = vld [vmem:[#allocation6 + $0x148] sm:$0xff]
    %v4194 = vld [vmem:[#allocation6 + $0x150] sm:$0xff]
    %v4195 = vld [vmem:[#allocation6 + $0x158] sm:$0xff]
    %v4196 = vld [vmem:[#allocation6 + $0x160] sm:$0xff]
    %v4197 = vld [vmem:[#allocation6 + $0x168] sm:$0xff]
    %v4198 = vld [vmem:[#allocation6 + $0x170] sm:$0xff]
    %v4199 = vld [vmem:[#allocation6 + $0x178] sm:$0xff]
    %v4200 = vld [vmem:[#allocation6 + $0x180] sm:$0xff]
    %v4201 = vld [vmem:[#allocation6 + $0x188] sm:$0xff]
    %v4202 = vld [vmem:[#allocation6 + $0x190] sm:$0xff]
    %v4203 = vld [vmem:[#allocation6 + $0x198] sm:$0xff]
    %v4204 = vld [vmem:[#allocation6 + $0x1a0] sm:$0xff]
    %v4205 = vld [vmem:[#allocation6 + $0x1a8] sm:$0xff]
    %v4206 = vld [vmem:[#allocation6 + $0x1b0] sm:$0xff]
    %v4207 = vld [vmem:[#allocation6 + $0x1b8] sm:$0xff]
    %v4208 = vld [vmem:[#allocation6 + $0x1c0] sm:$0xff]
    %v4209 = vld [vmem:[#allocation6 + $0x1c8] sm:$0xff]
    %v4210 = vld [vmem:[#allocation6 + $0x1d0] sm:$0xff]
    %v4211 = vld [vmem:[#allocation6 + $0x1d8] sm:$0xff]
    %v4212 = vld [vmem:[#allocation6 + $0x1e0] sm:$0xff]
    %v4213 = vld [vmem:[#allocation6 + $0x1e8] sm:$0xff]
    %v4214 = vld [vmem:[#allocation6 + $0x1f0] sm:$0xff]
    %v4215 = vld [vmem:[#allocation6 + $0x1f8] sm:$0xff]
    %v4216 = vpack.c.bf16 %v4138, %v4138
    %v4217 = vld [vmem:[#allocation7] sm:$0xff]
    %v4218 = vld [vmem:[#allocation7 + $0x8] sm:$0xff]
    %v4219 = vld [vmem:[#allocation7 + $0x10] sm:$0xff]
    %v4220 = vld [vmem:[#allocation7 + $0x18] sm:$0xff]
    %v4221 = vld [vmem:[#allocation7 + $0x20] sm:$0xff]
    %v4222 = vld [vmem:[#allocation7 + $0x28] sm:$0xff]
    %v4223 = vld [vmem:[#allocation7 + $0x30] sm:$0xff]
    %v4224 = vld [vmem:[#allocation7 + $0x38] sm:$0xff]
    %v4225 = vld [vmem:[#allocation7 + $0x40] sm:$0xff]
    %v4226 = vld [vmem:[#allocation7 + $0x48] sm:$0xff]
    %v4227 = vld [vmem:[#allocation7 + $0x50] sm:$0xff]
    %v4228 = vld [vmem:[#allocation7 + $0x58] sm:$0xff]
    %v4229 = vld [vmem:[#allocation7 + $0x60] sm:$0xff]
    %v4230 = vld [vmem:[#allocation7 + $0x68] sm:$0xff]
    %v4231 = vld [vmem:[#allocation7 + $0x70] sm:$0xff]
    %v4232 = vld [vmem:[#allocation7 + $0x78] sm:$0xff]
    %v4233 = vld [vmem:[#allocation7 + $0x80] sm:$0xff]
    %v4234 = vld [vmem:[#allocation7 + $0x88] sm:$0xff]
    %v4235 = vld [vmem:[#allocation7 + $0x90] sm:$0xff]
    %v4236 = vld [vmem:[#allocation7 + $0x98] sm:$0xff]
    %v4237 = vld [vmem:[#allocation7 + $0xa0] sm:$0xff]
    %v4238 = vld [vmem:[#allocation7 + $0xa8] sm:$0xff]
    %v4239 = vld [vmem:[#allocation7 + $0xb0] sm:$0xff]
    %v4240 = vld [vmem:[#allocation7 + $0xb8] sm:$0xff]
    %v4241 = vld [vmem:[#allocation7 + $0xc0] sm:$0xff]
    %v4242 = vld [vmem:[#allocation7 + $0xc8] sm:$0xff]
    %v4243 = vld [vmem:[#allocation7 + $0xd0] sm:$0xff]
    %v4244 = vld [vmem:[#allocation7 + $0xd8] sm:$0xff]
    %v4245 = vld [vmem:[#allocation7 + $0xe0] sm:$0xff]
    %v4246 = vld [vmem:[#allocation7 + $0xe8] sm:$0xff]
    %v4247 = vld [vmem:[#allocation7 + $0xf0] sm:$0xff]
    %v4248 = vld [vmem:[#allocation7 + $0xf8] sm:$0xff]
    %4249 = vmatprep.subr.bf16.mxu0 %v4218
    %4250 = vmatpush1.bf16.msra.mxu0 %v4217
    %4251 = vmatprep.subr.bf16.mxu0 %v4222
    %4252 = vmatpush1.bf16.msra.mxu0 %v4221
    %4253 = vmatprep.subr.bf16.mxu0 %v4226
    %4254 = vmatpush1.bf16.msra.mxu0 %v4225
    %4255 = vmatprep.subr.bf16.mxu0 %v4230
    %4256 = vmatpush1.bf16.msra.mxu0 %v4229
    %4257 = vmatprep.subr.bf16.mxu0 %v4234
    %4258 = vmatpush1.bf16.msra.mxu0 %v4233
    %4259 = vmatprep.subr.bf16.mxu0 %v4238
    %4260 = vmatpush1.bf16.msra.mxu0 %v4237
    %4261 = vmatprep.subr.bf16.mxu0 %v4242
    %4262 = vmatpush1.bf16.msra.mxu0 %v4241
    %4263 = vmatprep.subr.bf16.mxu0 %v4246
    %4264 = vmatpush1.bf16.msra.mxu0 %v4245
    %4265 = vmatprep.subr.bf16.mxu0 0
    %4266 = vmatpush1.bf16.msra.mxu0 0
    %4267 = vmatprep.subr.bf16.mxu0 0
    %4268 = vmatpush1.bf16.msra.mxu0 0
    %4269 = vmatprep.subr.bf16.mxu0 0
    %4270 = vmatpush1.bf16.msra.mxu0 0
    %4271 = vmatprep.subr.bf16.mxu0 0
    %4272 = vmatpush1.bf16.msra.mxu0 0
    %4273 = vmatprep.subr.bf16.mxu0 0
    %4274 = vmatpush1.bf16.msra.mxu0 0
    %4275 = vmatprep.subr.bf16.mxu0 0
    %4276 = vmatpush1.bf16.msra.mxu0 0
    %4277 = vmatprep.subr.bf16.mxu0 0
    %4278 = vmatpush1.bf16.msra.mxu0 0
    %4279 = vmatprep.subr.bf16.mxu0 0
    %4280 = vmatpush1.bf16.msra.mxu0 0
    %4281 = vmatprep.mubr.bf16.mxu0 0
    %4282 = vmatmul.mubr.bf16.gmra.mrb[0].mxu0 %v4216
    %v4283 = vpop.f32.mrb[0].mxu0
    %v4284 = vadd.f32 0.0, %v4283
    %v4285 = vpop.f32.mrb[0].mxu0
    %v4286 = vadd.f32 0.0, %v4285
    %v4287 = vpop.f32.mrb[0].mxu0
    %v4288 = vpop.f32.mrb[0].mxu0
    %4289 = vdwg.mxu0
    %4290 = vmatprep.subr.bf16.mxu0 %v4220
    %4291 = vmatpush1.bf16.msra.mxu0 %v4219
    %4292 = vmatprep.subr.bf16.mxu0 %v4224
    %4293 = vmatpush1.bf16.msra.mxu0 %v4223
    %4294 = vmatprep.subr.bf16.mxu0 %v4228
    %4295 = vmatpush1.bf16.msra.mxu0 %v4227
    %4296 = vmatprep.subr.bf16.mxu0 %v4232
    %4297 = vmatpush1.bf16.msra.mxu0 %v4231
    %4298 = vmatprep.subr.bf16.mxu0 %v4236
    %4299 = vmatpush1.bf16.msra.mxu0 %v4235
    %4300 = vmatprep.subr.bf16.mxu0 %v4240
    %4301 = vmatpush1.bf16.msra.mxu0 %v4239
    %4302 = vmatprep.subr.bf16.mxu0 %v4244
    %4303 = vmatpush1.bf16.msra.mxu0 %v4243
    %4304 = vmatprep.subr.bf16.mxu0 %v4248
    %4305 = vmatpush1.bf16.msra.mxu0 %v4247
    %4306 = vmatprep.subr.bf16.mxu0 0
    %4307 = vmatpush1.bf16.msra.mxu0 0
    %4308 = vmatprep.subr.bf16.mxu0 0
    %4309 = vmatpush1.bf16.msra.mxu0 0
    %4310 = vmatprep.subr.bf16.mxu0 0
    %4311 = vmatpush1.bf16.msra.mxu0 0
    %4312 = vmatprep.subr.bf16.mxu0 0
    %4313 = vmatpush1.bf16.msra.mxu0 0
    %4314 = vmatprep.subr.bf16.mxu0 0
    %4315 = vmatpush1.bf16.msra.mxu0 0
    %4316 = vmatprep.subr.bf16.mxu0 0
    %4317 = vmatpush1.bf16.msra.mxu0 0
    %4318 = vmatprep.subr.bf16.mxu0 0
    %4319 = vmatpush1.bf16.msra.mxu0 0
    %4320 = vmatprep.subr.bf16.mxu0 0
    %4321 = vmatpush1.bf16.msra.mxu0 0
    %4322 = vmatprep.mubr.bf16.mxu0 0
    %4323 = vmatmul.mubr.bf16.gmra.mrb[0].mxu0 %v4216
    %v4324 = vpop.f32.mrb[0].mxu0
    %v4325 = vadd.f32 0.0, %v4324
    %v4326 = vpop.f32.mrb[0].mxu0
    %v4327 = vadd.f32 0.0, %v4326
    %v4328 = vpop.f32.mrb[0].mxu0
    %v4329 = vpop.f32.mrb[0].mxu0
    %4330 = vdwg.mxu0
    %v4333 = vrot.slane %v4150, 1
    %v4334 = vrot.slane %v4151, 1
    %4337 = vmatprep.subr.bf16.mxu0 %v4153
    %4338 = vmatpush1.bf16.msra.mxu0 %v4152
    %4339 = vmatprep.subr.bf16.mxu0 %v4157
    %4340 = vmatpush1.bf16.msra.mxu0 %v4156
    %4341 = vmatprep.subr.bf16.mxu0 %v4161
    %4342 = vmatpush1.bf16.msra.mxu0 %v4160
    %4343 = vmatprep.subr.bf16.mxu0 %v4165
    %4344 = vmatpush1.bf16.msra.mxu0 %v4164
    %4345 = vmatprep.subr.bf16.mxu0 %v4169
    %4346 = vmatpush1.bf16.msra.mxu0 %v4168
    %4347 = vmatprep.subr.bf16.mxu0 %v4173
    %4348 = vmatpush1.bf16.msra.mxu0 %v4172
    %4349 = vmatprep.subr.bf16.mxu0 %v4177
    %4350 = vmatpush1.bf16.msra.mxu0 %v4176
    %4351 = vmatprep.subr.bf16.mxu0 %v4181
    %4352 = vmatpush1.bf16.msra.mxu0 %v4180
    %4353 = vmatprep.subr.bf16.mxu0 %v4185
    %4354 = vmatpush1.bf16.msra.mxu0 %v4184
    %4355 = vmatprep.subr.bf16.mxu0 %v4189
    %4356 = vmatpush1.bf16.msra.mxu0 %v4188
    %4357 = vmatprep.subr.bf16.mxu0 %v4193
    %4358 = vmatpush1.bf16.msra.mxu0 %v4192
    %4359 = vmatprep.subr.bf16.mxu0 %v4197
    %4360 = vmatpush1.bf16.msra.mxu0 %v4196
    %4361 = vmatprep.subr.bf16.mxu0 %v4201
    %4362 = vmatpush1.bf16.msra.mxu0 %v4200
    %4363 = vmatprep.subr.bf16.mxu0 %v4205
    %4364 = vmatpush1.bf16.msra.mxu0 %v4204
    %4365 = vmatprep.subr.bf16.mxu0 %v4209
    %4366 = vmatpush1.bf16.msra.mxu0 %v4208
    %4367 = vmatprep.subr.bf16.mxu0 %v4213
    %4368 = vmatpush1.bf16.msra.mxu0 %v4212
    %4369 = vmatprep.mubr.bf16.mxu0 %v4334
    %4370 = vmatmul.mubr.bf16.gmra.mrb[0].mxu0 %v4333
    %v4371 = vpop.f32.mrb[0].mxu0
    %v4372 = vadd.f32 %v4284, %v4371
    %v4373 = vpop.f32.mrb[0].mxu0
    %v4374 = vadd.f32 %v4286, %v4373
    %v4375 = vpop.f32.mrb[0].mxu0
    %v4376 = vpop.f32.mrb[0].mxu0
    %4377 = vdwg.mxu0
    %4378 = vmatprep.subr.bf16.mxu0 %v4155
    %4379 = vmatpush1.bf16.msra.mxu0 %v4154
    %4380 = vmatprep.subr.bf16.mxu0 %v4159
    %4381 = vmatpush1.bf16.msra.mxu0 %v4158
    %4382 = vmatprep.subr.bf16.mxu0 %v4163
    %4383 = vmatpush1.bf16.msra.mxu0 %v4162
    %4384 = vmatprep.subr.bf16.mxu0 %v4167
    %4385 = vmatpush1.bf16.msra.mxu0 %v4166
    %4386 = vmatprep.subr.bf16.mxu0 %v4171
    %4387 = vmatpush1.bf16.msra.mxu0 %v4170
    %4388 = vmatprep.subr.bf16.mxu0 %v4175
    %4389 = vmatpush1.bf16.msra.mxu0 %v4174
    %4390 = vmatprep.subr.bf16.mxu0 %v4179
    %4391 = vmatpush1.bf16.msra.mxu0 %v4178
    %4392 = vmatprep.subr.bf16.mxu0 %v4183
    %4393 = vmatpush1.bf16.msra.mxu0 %v4182
    %4394 = vmatprep.subr.bf16.mxu0 %v4187
    %4395 = vmatpush1.bf16.msra.mxu0 %v4186
    %4396 = vmatprep.subr.bf16.mxu0 %v4191
    %4397 = vmatpush1.bf16.msra.mxu0 %v4190
    %4398 = vmatprep.subr.bf16.mxu0 %v4195
    %4399 = vmatpush1.bf16.msra.mxu0 %v4194
    %4400 = vmatprep.subr.bf16.mxu0 %v4199
    %4401 = vmatpush1.bf16.msra.mxu0 %v4198
    %4402 = vmatprep.subr.bf16.mxu0 %v4203
    %4403 = vmatpush1.bf16.msra.mxu0 %v4202
    %4404 = vmatprep.subr.bf16.mxu0 %v4207
    %4405 = vmatpush1.bf16.msra.mxu0 %v4206
    %4406 = vmatprep.subr.bf16.mxu0 %v4211
    %4407 = vmatpush1.bf16.msra.mxu0 %v4210
    %4408 = vmatprep.subr.bf16.mxu0 %v4215
    %4409 = vmatpush1.bf16.msra.mxu0 %v4214
    %4410 = vmatprep.mubr.bf16.mxu0 %v4334
    %4411 = vmatmul.mubr.bf16.gmra.mrb[0].mxu0 %v4333
    %v4412 = vpop.f32.mrb[0].mxu0
    %v4413 = vadd.f32 %v4325, %v4412
    %v4414 = vpop.f32.mrb[0].mxu0
    %v4415 = vadd.f32 %v4327, %v4414
    %v4416 = vpop.f32.mrb[0].mxu0
    %v4417 = vpop.f32.mrb[0].mxu0
    %4418 = vdwg.mxu0
    %v4419 = vld [vmem:[#allocation22] sm:$0xf]
    %v4421 = vlaneseq
    %v4422 = vshrl.u32 %v4421, 7
    %v4423 = vsub.s32 0, %v4422
    %v4424 = vrot.slane %v4419, %v4423
    %v4425 = vlaneseq
    %v4426 = vshrl.u32 %v4425, 7
    %v4427 = vsub.s32 1, %v4426
    %v4428 = vrot.slane %v4419, %v4427
    %v4429 = vlaneseq
    %v4430 = vshrl.u32 %v4429, 7
    %v4431 = vsub.s32 2, %v4430
    %v4432 = vrot.slane %v4419, %v4431
    %v4433 = vlaneseq
    %v4434 = vshrl.u32 %v4433, 7
    %v4435 = vsub.s32 3, %v4434
    %v4436 = vrot.slane %v4419, %v4435
    %v4441 = vadd.f32 %v4372, %v4424
    %v4442 = vadd.f32 %v4374, %v4428
    %v4443 = vadd.f32 %v4413, %v4432
    %v4444 = vadd.f32 %v4415, %v4436
    %v4445 = vmax.f32 %v4441, 0.0
    %v4446 = vmax.f32 %v4442, 0.0
    %v4447 = vmax.f32 %v4443, 0.0
    %v4448 = vmax.f32 %v4444, 0.0
    %v4449 = vpack.c.bf16 %v4445, %v4445
    %v4450 = vpack.c.bf16 %v4446, %v4446
    %v4451 = vpack.c.bf16 %v4447, %v4447
    %v4452 = vpack.c.bf16 %v4448, %v4448
    %v4453 = vld [vmem:[#allocation8] sm:$0xff]
    %v4454 = vld [vmem:[#allocation8 + $0x8] sm:$0xff]
    %v4455 = vld [vmem:[#allocation8 + $0x10] sm:$0xff]
    %v4456 = vld [vmem:[#allocation8 + $0x18] sm:$0xff]
    %v4457 = vld [vmem:[#allocation8 + $0x20] sm:$0xff]
    %v4458 = vld [vmem:[#allocation8 + $0x28] sm:$0xff]
    %v4459 = vld [vmem:[#allocation8 + $0x30] sm:$0xff]
    %v4460 = vld [vmem:[#allocation8 + $0x38] sm:$0xff]
    %v4461 = vld [vmem:[#allocation8 + $0x40] sm:$0xff]
    %v4462 = vld [vmem:[#allocation8 + $0x48] sm:$0xff]
    %v4463 = vld [vmem:[#allocation8 + $0x50] sm:$0xff]
    %v4464 = vld [vmem:[#allocation8 + $0x58] sm:$0xff]
    %v4465 = vld [vmem:[#allocation8 + $0x60] sm:$0xff]
    %v4466 = vld [vmem:[#allocation8 + $0x68] sm:$0xff]
    %v4467 = vld [vmem:[#allocation8 + $0x70] sm:$0xff]
    %v4468 = vld [vmem:[#allocation8 + $0x78] sm:$0xff]
    %v4469 = vld [vmem:[#allocation8 + $0x80] sm:$0xff]
    %v4470 = vld [vmem:[#allocation8 + $0x88] sm:$0xff]
    %v4471 = vld [vmem:[#allocation8 + $0x90] sm:$0xff]
    %v4472 = vld [vmem:[#allocation8 + $0x98] sm:$0xff]
    %v4473 = vld [vmem:[#allocation8 + $0xa0] sm:$0xff]
    %v4474 = vld [vmem:[#allocation8 + $0xa8] sm:$0xff]
    %v4475 = vld [vmem:[#allocation8 + $0xb0] sm:$0xff]
    %v4476 = vld [vmem:[#allocation8 + $0xb8] sm:$0xff]
    %v4477 = vld [vmem:[#allocation8 + $0xc0] sm:$0xff]
    %v4478 = vld [vmem:[#allocation8 + $0xc8] sm:$0xff]
    %v4479 = vld [vmem:[#allocation8 + $0xd0] sm:$0xff]
    %v4480 = vld [vmem:[#allocation8 + $0xd8] sm:$0xff]
    %v4481 = vld [vmem:[#allocation8 + $0xe0] sm:$0xff]
    %v4482 = vld [vmem:[#allocation8 + $0xe8] sm:$0xff]
    %v4483 = vld [vmem:[#allocation8 + $0xf0] sm:$0xff]
    %v4484 = vld [vmem:[#allocation8 + $0xf8] sm:$0xff]
    %v4485 = vld [vmem:[#allocation23] sm:$0x1]
    %4486 = vmatprep.subr.bf16.mxu0 0
    %4487 = vmatpush1.bf16.msra.mxu0 %v4453
    %4488 = vmatprep.subr.bf16.mxu0 0
    %4489 = vmatpush1.bf16.msra.mxu0 %v4454
    %4490 = vmatprep.subr.bf16.mxu0 0
    %4491 = vmatpush1.bf16.msra.mxu0 %v4455
    %4492 = vmatprep.subr.bf16.mxu0 0
    %4493 = vmatpush1.bf16.msra.mxu0 %v4456
    %4494 = vmatprep.subr.bf16.mxu0 0
    %4495 = vmatpush1.bf16.msra.mxu0 %v4457
    %4496 = vmatprep.subr.bf16.mxu0 0
    %4497 = vmatpush1.bf16.msra.mxu0 %v4458
    %4498 = vmatprep.subr.bf16.mxu0 0
    %4499 = vmatpush1.bf16.msra.mxu0 %v4459
    %4500 = vmatprep.subr.bf16.mxu0 0
    %4501 = vmatpush1.bf16.msra.mxu0 %v4460
    %4502 = vmatprep.subr.bf16.mxu0 0
    %4503 = vmatpush1.bf16.msra.mxu0 %v4461
    %4504 = vmatprep.subr.bf16.mxu0 0
    %4505 = vmatpush1.bf16.msra.mxu0 %v4462
    %4506 = vmatprep.subr.bf16.mxu0 0
    %4507 = vmatpush1.bf16.msra.mxu0 %v4463
    %4508 = vmatprep.subr.bf16.mxu0 0
    %4509 = vmatpush1.bf16.msra.mxu0 %v4464
    %4510 = vmatprep.subr.bf16.mxu0 0
    %4511 = vmatpush1.bf16.msra.mxu0 %v4465
    %4512 = vmatprep.subr.bf16.mxu0 0
    %4513 = vmatpush1.bf16.msra.mxu0 %v4466
    %4514 = vmatprep.subr.bf16.mxu0 0
    %4515 = vmatpush1.bf16.msra.mxu0 %v4467
    %4516 = vmatprep.subr.bf16.mxu0 0
    %4517 = vmatpush1.bf16.msra.mxu0 %v4468
    %4518 = vmatprep.mubr.bf16.mxu0 %v4450
    %4519 = vmatmul.mubr.bf16.gmra.mrb[0].mxu0 %v4449
    %v4520 = vpop.f32.mrb[0].mxu0
    %v4521 = vadd.f32 %v4485, %v4520
    %v4522 = vpop.f32.mrb[0].mxu0
    %v4523 = vpop.f32.mrb[0].mxu0
    %v4524 = vpop.f32.mrb[0].mxu0
    %4525 = vdwg.mxu0
    %4526 = vmatprep.subr.bf16.mxu0 0
    %4527 = vmatpush1.bf16.msra.mxu0 %v4469
    %4528 = vmatprep.subr.bf16.mxu0 0
    %4529 = vmatpush1.bf16.msra.mxu0 %v4470
    %4530 = vmatprep.subr.bf16.mxu0 0
    %4531 = vmatpush1.bf16.msra.mxu0 %v4471
    %4532 = vmatprep.subr.bf16.mxu0 0
    %4533 = vmatpush1.bf16.msra.mxu0 %v4472
    %4534 = vmatprep.subr.bf16.mxu0 0
    %4535 = vmatpush1.bf16.msra.mxu0 %v4473
    %4536 = vmatprep.subr.bf16.mxu0 0
    %4537 = vmatpush1.bf16.msra.mxu0 %v4474
    %4538 = vmatprep.subr.bf16.mxu0 0
    %4539 = vmatpush1.bf16.msra.mxu0 %v4475
    %4540 = vmatprep.subr.bf16.mxu0 0
    %4541 = vmatpush1.bf16.msra.mxu0 %v4476
    %4542 = vmatprep.subr.bf16.mxu0 0
    %4543 = vmatpush1.bf16.msra.mxu0 %v4477
    %4544 = vmatprep.subr.bf16.mxu0 0
    %4545 = vmatpush1.bf16.msra.mxu0 %v4478
    %4546 = vmatprep.subr.bf16.mxu0 0
    %4547 = vmatpush1.bf16.msra.mxu0 %v4479
    %4548 = vmatprep.subr.bf16.mxu0 0
    %4549 = vmatpush1.bf16.msra.mxu0 %v4480
    %4550 = vmatprep.subr.bf16.mxu0 0
    %4551 = vmatpush1.bf16.msra.mxu0 %v4481
    %4552 = vmatprep.subr.bf16.mxu0 0
    %4553 = vmatpush1.bf16.msra.mxu0 %v4482
    %4554 = vmatprep.subr.bf16.mxu0 0
    %4555 = vmatpush1.bf16.msra.mxu0 %v4483
    %4556 = vmatprep.subr.bf16.mxu0 0
    %4557 = vmatpush1.bf16.msra.mxu0 %v4484
    %4558 = vmatprep.mubr.bf16.mxu0 %v4452
    %4559 = vmatmul.mubr.bf16.gmra.mrb[0].mxu0 %v4451
    %v4560 = vpop.f32.mrb[0].mxu0
    %v4561 = vadd.f32 %v4521, %v4560
    %v4562 = vpop.f32.mrb[0].mxu0
    %v4563 = vpop.f32.mrb[0].mxu0
    %v4564 = vpop.f32.mrb[0].mxu0
    %4565 = vdwg.mxu0
    %v4566 = vtanh.pop %v4561
    %4567 = vst [vmem:[%s16] sm:$0x1] %v4566
    // Predicated region
    $region123: #{generator_forward.1} parent=1 // pred_check
      _
    $region124: #{generator_forward.1} parent=1 // pred_check_branch
      %4569 = sbr.rel (0) target = $region126
    $region125: #{generator_forward.1} parent=1 // pred_region
      _
    $region126: #{generator_forward.1} parent=1 // pred_fallthru
      _
    // Predicated region
    $region127: #{generator_forward.1} parent=1 // pred_check
      _
    $region128: #{generator_forward.1} parent=1 // pred_check_branch
      %4571 = sbr.rel (0) target = $region130
    $region129: #{generator_forward.1} parent=1 // pred_region
      _
    $region130: #{generator_forward.1} parent=1 // pred_fallthru
      _
    %4572 = vsyncpa [#allocation11], 1
    %4573 = vsyncpa [#allocation15], 1
    %4574 = vsyncpa [#allocation18], 1
    %4575 = vsyncpa [#allocation21], 1
    %4576 = vsyncpa [#allocation24], 1
    %4577 = vsyncpa [#allocation12], 1
  %4578 = vsyncmov [#allocation9]
  %s4579 = vpop.sfrf %4578
  %p4580 = scmp.eq.s32.totalorder %s4579, 0
  %p4581 = pneg %p4580
  %4583 = shalt.err (%p4581)
  %s4584 = scalar_lea.sflag [#allocation9], 1
  %4585 = vsyncmov %s4584
  %s4586 = vpop.sfrf %4585
  %p4587 = scmp.eq.s32.totalorder %s4586, 0
  %p4588 = pneg %p4587
  %4590 = shalt.err (%p4588)
  %s4591 = scalar_lea.sflag [#allocation9], 2
  %4592 = vsyncmov %s4591
  %s4593 = vpop.sfrf %4592
  %p4594 = scmp.eq.s32.totalorder %s4593, 0
  %p4595 = pneg %p4594
  %4597 = shalt.err (%p4595)
  %s4598 = scalar_lea.sflag [#allocation9], 3
  %4599 = vsyncmov %s4598
  %s4600 = vpop.sfrf %4599
  %p4601 = scmp.eq.s32.totalorder %s4600, 0
  %p4602 = pneg %p4601
  %4604 = shalt.err (%p4602)
  %s4605 = scalar_lea.sflag [#allocation9], 4
  %4606 = vsyncmov %s4605
  %s4607 = vpop.sfrf %4606
  %p4608 = scmp.eq.s32.totalorder %s4607, 0
  %p4609 = pneg %p4608
  %4611 = shalt.err (%p4609)

</llo_original>
